<compile_context>
chip_gen: v7x
topology: tpu7x:2x2x1
jax: 0.10.0
libtpu: 0.0.40
codegen_flags: <defaults>
</compile_context>

<pallas_src>
import functools
import random

import jax
import jax.numpy as jnp
from jax.experimental import pallas as pl
from jax.experimental.pallas import tpu as pltpu

# ----------------------------- model dims (small) ---------------------------
SRC_VOCAB = 20
TRG_VOCAB = 20        # decoder.output_dim
EMB_DIM = 16
ENC_HID = 16          # per-direction
DEC_HID = 32
SRC_PAD_IDX = 0
E2 = 2 * ENC_HID      # encoder output feature size (fwd|bwd)

# lane-slot sizes (everything 128-aligned)
HEP = 128             # padded encoder hidden (per gate / per direction slot)
HDP = 128             # padded decoder hidden (per gate)
AHP = 128             # padded attention hidden
VP = 128              # padded vocab (logits lane dim)
EMBP = 128            # padded embedding lane slot
XK = 4 * 128          # decoder fused-matmul contraction: [emb|ctx_f|ctx_b|h]

_VMEM = pl.BlockSpec(memory_space=pltpu.MemorySpace.VMEM)
_SMEM = pl.BlockSpec(memory_space=pltpu.MemorySpace.SMEM)


# ------------------------------- Pallas kernels ------------------------------
def _encoder_kernel(emb_ref, valid_ref, wih_ref, bih_ref, whhf_ref, bhhf_ref,
                    whhb_ref, bhhb_ref, wae_ref, battn_ref, wfcf_ref, wfcb_ref,
                    bfc_ref, enc_ref, encproj_ref, h0_ref, *, S, B):
    """Fused bidirectional GRU encoder (single invocation, in-kernel time loop).

    Epilogue also computes the decoder initial hidden (fc+tanh) and the
    encoder-side half of the attention projection (both hoisted out of the
    decode loop)."""
    G = 3 * HEP
    # input-gate projections for BOTH directions / ALL timesteps: one matmul
    gi_all = (jnp.dot(emb_ref[...], wih_ref[...],
                      preferred_element_type=jnp.float32) + bih_ref[...])   # [S*B, 2G]
    whhf = whhf_ref[...]
    bhhf = bhhf_ref[...]
    whhb = whhb_ref[...]
    bhhb = bhhb_ref[...]
    valid = valid_ref[...]                                                  # [B, S]

    def cell(gi, gh, h):
        r = jax.nn.sigmoid(gi[:, 0:HEP] + gh[:, 0:HEP])
        z = jax.nn.sigmoid(gi[:, HEP:2 * HEP] + gh[:, HEP:2 * HEP])
        n = jnp.tanh(gi[:, 2 * HEP:3 * HEP] + r * gh[:, 2 * HEP:3 * HEP])
        return (1.0 - z) * n + z * h

    h_f = jnp.zeros((B, HEP), jnp.float32)
    h_b = jnp.zeros((B, HEP), jnp.float32)
    # unrolled in-kernel time loop: no per-step grid/pipeline overhead; the two
    # directions are interleaved so their MXU latencies overlap.
    for t in range(S):
        tb = S - 1 - t
        v_f = valid[:, t:t + 1]                    # [B,1] pack_padded emulation
        v_b = valid[:, tb:tb + 1]
        gi_f = gi_all[t * B:(t + 1) * B, 0:G]
        gi_b = gi_all[tb * B:(tb + 1) * B, G:2 * G]
        gh_f = jnp.dot(h_f, whhf, preferred_element_type=jnp.float32) + bhhf
        gh_b = jnp.dot(h_b, whhb, preferred_element_type=jnp.float32) + bhhb
        h_f = v_f * cell(gi_f, gh_f, h_f) + (1.0 - v_f) * h_f
        h_b = v_b * cell(gi_b, gh_b, h_b) + (1.0 - v_b) * h_b
        # aligned 128-lane slot stores: fwd -> lanes [0:128], bwd -> [128:256]
        enc_ref[:, t, 0:HEP] = v_f * h_f           # padded steps emit zeros
        enc_ref[:, tb, HEP:2 * HEP] = v_b * h_b

    # epilogue: decoder initial hidden (tanh(fc([h_fwd;h_bwd])))
    h0_ref[...] = jnp.tanh(
        jnp.dot(h_f, wfcf_ref[...], preferred_element_type=jnp.float32)
        + jnp.dot(h_b, wfcb_ref[...], preferred_element_type=jnp.float32)
        + bfc_ref[...])

    # epilogue: encoder-side attention projection, once per sequence
    enc_all = enc_ref[...].reshape(B * S, 2 * HEP)
    encproj = (jnp.dot(enc_all, wae_ref[...],
                       preferred_element_type=jnp.float32) + battn_ref[...])
    encproj_ref[...] = encproj.reshape(B, S, AHP)


def _decoder_kernel(tf_ref, trg_emb_ref, mask_ref, enc_ref, encproj_ref,
                    embdec_ref, wah_ref, v_ref, wgru_ref, bgru_ref,
                    wout_ref, bout_ref, h0_ref, out_ref, *, Tm1):
    """Whole decode loop fused in ONE kernel invocation (no grid): attention,
    GRU cell (one fused matmul), fc_out (one fused matmul), argmax and
    teacher-force select all in an unrolled in-kernel loop."""
    B = h0_ref.shape[0]
    enc = enc_ref[...]            # [B,S,2*HEP]  (fwd lanes 0:16, bwd 128:144)
    encproj = encproj_ref[...]    # [B,S,AHP]
    mask = mask_ref[...]          # [B,S,1] additive pad mask
    wah = wah_ref[...]
    v = v_ref[...]
    wgru = wgru_ref[...]
    bgru = bgru_ref[...]
    wout = wout_ref[...]
    bout = bout_ref[...]
    embdec = embdec_ref[...]      # [VP, EMBP]

    h = h0_ref[...]               # [B, HDP]
    top1_oh = jnp.zeros((B, VP), jnp.float32)

    for g in range(Tm1):
        # ----- input select (teacher forcing as data; first step always trg)
        if g == 0:
            embedded = trg_emb_ref[0]                                   # [B,EMBP]
        else:
            use_trg = tf_ref[g - 1] > 0
            emb_model = jnp.dot(top1_oh, embdec,
                                preferred_element_type=jnp.float32)
            embedded = jnp.where(use_trg, trg_emb_ref[g], emb_model)

        # ----- attention (encoder-side projection hoisted; softmax in [B,S,1])
        q = jnp.dot(h, wah, preferred_element_type=jnp.float32)        # [B,AHP]
        energy = jnp.tanh(q[:, None, :] + encproj)                     # [B,S,AHP]
        scores = jnp.sum(energy * v, axis=-1, keepdims=True) + mask    # [B,S,1]
        m = jnp.max(scores, axis=1, keepdims=True)
        pexp = jnp.exp(scores - m)
        attn = pexp * pl.reciprocal(jnp.sum(pexp, axis=1, keepdims=True),
                                    approx=True)                       # [B,S,1]
        # context as VPU mul + XLU sublane reduce (no MXU round trip)
        ctx = jnp.sum(attn * enc, axis=1)                              # [B,2*HEP]

        # ----- GRU cell: ONE fused [emb|ctx|h] @ W matmul, 4 gate slots
        x_cat = jnp.concatenate([embedded, ctx, h], axis=1)            # [B, XK]
        gates = jnp.dot(x_cat, wgru, preferred_element_type=jnp.float32) + bgru
        r = jax.nn.sigmoid(gates[:, 0:HDP])
        z = jax.nn.sigmoid(gates[:, HDP:2 * HDP])
        n = jnp.tanh(gates[:, 2 * HDP:3 * HDP] + r * gates[:, 3 * HDP:4 * HDP])
        h = (1.0 - z) * n + z * h

        # ----- fc_out: ONE fused [emb|ctx|h_new] @ W matmul (lane-dense VP)
        y_cat = jnp.concatenate([embedded, ctx, h], axis=1)
        logits = jnp.dot(y_cat, wout, preferred_element_type=jnp.float32) + bout
        out_ref[g] = logits                                            # [B,VP]

        # ----- argmax -> one-hot (next-step input when not teacher forcing)
        if g + 1 < Tm1:
            lane = jax.lax.broadcasted_iota(jnp.int32, logits.shape, 1)
            rowmax = jnp.max(logits, axis=-1, keepdims=True)
            first_max = jnp.min(jnp.where(logits >= rowmax, lane, VP),
                                axis=-1, keepdims=True)
            top1_oh = (lane == first_max).astype(jnp.float32)


# ------------------------------ parameter helpers -----------------------------
def _pad_rows(w, rows):
    return jnp.pad(w, ((0, rows - w.shape[0]), (0, 0)))


def _pad_cols(w, cols):
    return jnp.pad(w, ((0, 0), (0, cols - w.shape[1])))


def _pad_gate_cols(w, H, HP):
    # [In, 3H] -> [In, 3HP], each gate's real columns at the start of its slot
    gates = [jnp.pad(w[:, i * H:(i + 1) * H], ((0, 0), (0, HP - H))) for i in range(3)]
    return jnp.concatenate(gates, axis=1)


def _pad_gate_bias(b, H, HP):
    gates = [jnp.pad(b[i * H:(i + 1) * H], (0, HP - H)) for i in range(3)]
    return jnp.concatenate(gates)[None, :]


def init_params(key):
    def w(k, shape, scale=0.1):
        return scale * jax.random.normal(k, shape, dtype=jnp.float32)

    ks = jax.random.split(key, 12)
    HE, HD = ENC_HID, DEC_HID
    p = {}
    p["emb_enc"] = w(ks[0], (SRC_VOCAB, EMB_DIM))
    p["w_ih_f"] = w(ks[1], (EMB_DIM, 3 * HE)); p["w_hh_f"] = w(ks[2], (HE, 3 * HE))
    p["b_ih_f"] = jnp.zeros((3 * HE,), jnp.float32)
    p["b_hh_f"] = jnp.zeros((3 * HE,), jnp.float32)
    p["w_ih_b"] = w(ks[3], (EMB_DIM, 3 * HE)); p["w_hh_b"] = w(ks[4], (HE, 3 * HE))
    p["b_ih_b"] = jnp.zeros((3 * HE,), jnp.float32)
    p["b_hh_b"] = jnp.zeros((3 * HE,), jnp.float32)
    p["w_fc"] = w(ks[5], (E2, HD)); p["b_fc"] = jnp.zeros((HD,), jnp.float32)
    p["w_attn"] = w(ks[6], (HD + E2, HD)); p["b_attn"] = jnp.zeros((HD,), jnp.float32)
    p["v_attn"] = w(ks[7], (HD,))
    p["emb_dec"] = w(ks[8], (TRG_VOCAB, EMB_DIM))
    p["w_ih_d"] = w(ks[9], (EMB_DIM + E2, 3 * HD)); p["w_hh_d"] = w(ks[10], (HD, 3 * HD))
    p["b_ih_d"] = jnp.zeros((3 * HD,), jnp.float32)
    p["b_hh_d"] = jnp.zeros((3 * HD,), jnp.float32)
    p["w_out"] = w(ks[11], (E2 + HD + EMB_DIM, TRG_VOCAB))
    p["b_out"] = jnp.zeros((TRG_VOCAB,), jnp.float32)
    return p


def prepare_params(p):
    """One-time packing of logical weights into kernel-ready, lane-slot-aligned
    layouts. Padded rows/cols are zero (cannot pollute real lanes); padded
    logit columns get a -1e30 bias so in-kernel argmax ignores them."""
    HE, HD = ENC_HID, DEC_HID
    q = {"emb_enc": p["emb_enc"]}

    # ---- encoder GRU: both directions' input projections as ONE wide matmul
    q["w_ih_cat"] = jnp.concatenate(
        [_pad_gate_cols(p["w_ih_f"], HE, HEP), _pad_gate_cols(p["w_ih_b"], HE, HEP)],
        axis=1)                                                     # [EMB, 768]
    q["b_ih_cat"] = jnp.concatenate(
        [_pad_gate_bias(p["b_ih_f"], HE, HEP), _pad_gate_bias(p["b_ih_b"], HE, HEP)],
        axis=1)                                                     # [1, 768]
    q["w_hh_f_p"] = _pad_rows(_pad_gate_cols(p["w_hh_f"], HE, HEP), HEP)
    q["b_hh_f_p"] = _pad_gate_bias(p["b_hh_f"], HE, HEP)
    q["w_hh_b_p"] = _pad_rows(_pad_gate_cols(p["w_hh_b"], HE, HEP), HEP)
    q["b_hh_b_p"] = _pad_gate_bias(p["b_hh_b"], HE, HEP)

    # ---- encoder epilogue: hidden0 fc (split fwd/bwd rows, no concat needed)
    q["w_fc_f_p"] = _pad_rows(_pad_cols(p["w_fc"][:HE], HDP), HEP)
    q["w_fc_b_p"] = _pad_rows(_pad_cols(p["w_fc"][HE:], HDP), HEP)
    q["b_fc_p"] = _pad_cols(p["b_fc"][None, :], HDP)

    # ---- attention: encoder half (epilogue of encoder) + hidden half (decoder)
    wa_e = p["w_attn"][HD:]                       # [E2, HD], rows [fwd | bwd]
    wae = jnp.zeros((2 * HEP, AHP), jnp.float32)
    wae = wae.at[0:HE, :HD].set(wa_e[:HE])
    wae = wae.at[HEP:HEP + HE, :HD].set(wa_e[HE:])
    q["wa_e_p"] = wae
    q["b_attn_p"] = _pad_cols(p["b_attn"][None, :], AHP)
    q["wa_h_p"] = _pad_rows(_pad_cols(p["w_attn"][:HD], AHP), HDP)
    q["v_p"] = _pad_cols(p["v_attn"][None, :], AHP)

    # ---- decoder embedding table (rows->VP, cols->128-lane slot)
    q["emb_dec_p"] = _pad_cols(_pad_rows(p["emb_dec"], VP), EMBP)

    # ---- decoder GRU: single [emb|ctx_f|ctx_b|h] @ W matmul, 4 gate slots:
    #      slot0 = gi_r+gh_r, slot1 = gi_z+gh_z, slot2 = gi_n, slot3 = gh_n
    w_ih = p["w_ih_d"]          # rows: [emb EMB | ctx_fwd HE | ctx_bwd HE]
    w_hh = p["w_hh_d"]
    Wg = jnp.zeros((XK, 4 * HDP), jnp.float32)

    def set_block(W, row_off, src, gate, slot):
        return W.at[row_off:row_off + src.shape[0],
                    slot * HDP:slot * HDP + HD].set(src[:, gate * HD:(gate + 1) * HD])

    for gate, slot in ((0, 0), (1, 1), (2, 2)):       # gi contributions
        Wg = set_block(Wg, 0, w_ih[0:EMB_DIM], gate, slot)
        Wg = set_block(Wg, 128, w_ih[EMB_DIM:EMB_DIM + HE], gate, slot)
        Wg = set_block(Wg, 256, w_ih[EMB_DIM + HE:], gate, slot)
    for gate, slot in ((0, 0), (1, 1), (2, 3)):       # gh contributions
        Wg = set_block(Wg, 384, w_hh, gate, slot)
    q["w_gru_cat"] = Wg

    bg = jnp.zeros((1, 4 * HDP), jnp.float32)
    b_ih, b_hh = p["b_ih_d"], p["b_hh_d"]
    bg = bg.at[0, 0:HD].set(b_ih[0:HD] + b_hh[0:HD])
    bg = bg.at[0, HDP:HDP + HD].set(b_ih[HD:2 * HD] + b_hh[HD:2 * HD])
    bg = bg.at[0, 2 * HDP:2 * HDP + HD].set(b_ih[2 * HD:3 * HD])
    bg = bg.at[0, 3 * HDP:3 * HDP + HD].set(b_hh[2 * HD:3 * HD])
    q["b_gru_cat"] = bg

    # ---- fc_out: single [emb|ctx_f|ctx_b|h_new] @ W matmul
    w_out = p["w_out"]          # rows: [hidden HD | ctx E2 | emb EMB]
    Wo = jnp.zeros((XK, VP), jnp.float32)
    Wo = Wo.at[0:EMB_DIM, :TRG_VOCAB].set(w_out[HD + E2:])
    Wo = Wo.at[128:128 + HE, :TRG_VOCAB].set(w_out[HD:HD + HE])
    Wo = Wo.at[256:256 + HE, :TRG_VOCAB].set(w_out[HD + HE:HD + E2])
    Wo = Wo.at[384:384 + HD, :TRG_VOCAB].set(w_out[:HD])
    q["w_out_cat"] = Wo
    bo = jnp.full((1, VP), -1e30, jnp.float32)
    q["b_out_p"] = bo.at[0, :TRG_VOCAB].set(p["b_out"])
    return q


# --------------------------------- model parts --------------------------------
def encoder_forward(p, src, src_len):
    """Bidirectional GRU encoder, ONE pallas_call. pack_padded_sequence
    semantics: padded steps freeze the hidden state and emit zero outputs.
    Also returns the decoder initial hidden and the hoisted encoder-side
    attention projection."""
    B, S = src.shape
    emb = p["emb_enc"][src]                                   # [B,S,EMB] gather = glue
    # TODO(synk): dropout layers from the reference model are identity in eval mode.
    emb_flat = emb.transpose(1, 0, 2).reshape(S * B, EMB_DIM)  # tiny glue transpose
    valid = (jnp.arange(S, dtype=jnp.int32)[None, :]
             < src_len[:, None]).astype(jnp.float32)          # [B,S]

    enc_out, enc_proj, hidden0 = pl.pallas_call(
        functools.partial(_encoder_kernel, S=S, B=B),
        out_shape=(jax.ShapeDtypeStruct((B, S, 2 * HEP), jnp.float32),
                   jax.ShapeDtypeStruct((B, S, AHP), jnp.float32),
                   jax.ShapeDtypeStruct((B, HDP), jnp.float32)),
        in_specs=[_VMEM] * 13,
        out_specs=(_VMEM, _VMEM, _VMEM),
    )(emb_flat, valid, p["w_ih_cat"], p["b_ih_cat"], p["w_hh_f_p"], p["b_hh_f_p"],
      p["w_hh_b_p"], p["b_hh_b_p"], p["wa_e_p"], p["b_attn_p"], p["w_fc_f_p"],
      p["w_fc_b_p"], p["b_fc_p"])
    return hidden0, enc_out, enc_proj


def decode_sequence(p, trg, hidden0, enc_out, enc_proj, neg_mask, tf_flags):
    B, T = trg.shape
    Tm1 = T - 1

    # teacher-forced inputs embedded once in the wrapper (gather = glue)
    trg_emb = p["emb_dec_p"][trg[:, :Tm1]]                     # [B,Tm1,EMBP]
    trg_emb = trg_emb.transpose(1, 0, 2)                       # [Tm1,B,EMBP]

    out = pl.pallas_call(
        functools.partial(_decoder_kernel, Tm1=Tm1),
        out_shape=jax.ShapeDtypeStruct((Tm1, B, VP), jnp.float32),
        in_specs=[_SMEM] + [_VMEM] * 12,
        out_specs=_VMEM,
    )(tf_flags, trg_emb, neg_mask, enc_out, enc_proj, p["emb_dec_p"],
      p["wa_h_p"], p["v_p"], p["w_gru_cat"], p["b_gru_cat"],
      p["w_out_cat"], p["b_out_p"], hidden0)

    logits = out.transpose(1, 0, 2)[:, :, :TRG_VOCAB]          # [B, T-1, V]
    zeros0 = jnp.zeros((B, 1, TRG_VOCAB), jnp.float32)         # outputs[:, 0]
    return jnp.concatenate([zeros0, logits], axis=1)           # [B, T, V]


def seq2seq_forward(p, src, trg, src_len, teacher_forcing_ratio=0.5, seed=0,
                    tf_flags=None):
    """Mirrors Seq2Seq.forward. Teacher forcing decisions are precomputed as a
    jnp int vector (one random draw per decode step, like random.random())."""
    B, T = trg.shape
    if tf_flags is None:
        rng = random.Random(seed)   # host-side, once per call (not per step)
        tf_flags = jnp.array(
            [1 if rng.random() < teacher_forcing_ratio else 0
             for _ in range(max(T - 1, 1))], dtype=jnp.int32)
    hidden0, enc_out, enc_proj = encoder_forward(p, src, src_len)
    neg_mask = jnp.where(src != SRC_PAD_IDX, 0.0, -1e10).astype(jnp.float32)
    neg_mask = neg_mask[:, :, None]                            # [B,S,1]
    return decode_sequence(p, trg, hidden0, enc_out, enc_proj, neg_mask, tf_flags)


# ------------------------------------ main ------------------------------------
if __name__ == "__main__":
    key = jax.random.PRNGKey(0)
    pkey, skey, tkey = jax.random.split(key, 3)
    params = prepare_params(init_params(pkey))

    B, S_SRC, S_TRG = 2, 8, 8
    src_len = jnp.array([8, 6], dtype=jnp.int32)
    # tokens in [1, vocab) so pad_idx=0 only appears as actual padding
    src = jax.random.randint(skey, (B, S_SRC), 1, SRC_VOCAB, dtype=jnp.int32)
    pos = jnp.arange(S_SRC)[None, :]
    src = jnp.where(pos < src_len[:, None], src, SRC_PAD_IDX)
    trg = jax.random.randint(tkey, (B, S_TRG), 1, TRG_VOCAB, dtype=jnp.int32)

    out = seq2seq_forward(params, src, trg, src_len, teacher_forcing_ratio=0.5, seed=0)
    out = jax.block_until_ready(out)
    assert out.shape == (B, S_TRG, TRG_VOCAB), out.shape
    assert bool(jnp.all(jnp.isfinite(out)))
    print("KERNEL_OK")
</pallas_src>

<mosaic_0001>
module attributes {stable_mosaic.version = 11 : i64} {
  func.func @_encoder_kernel(%arg0: memref<16x16xf32, #tpu.memory_space<vmem>>, %arg1: memref<2x8xf32, #tpu.memory_space<vmem>>, %arg2: memref<16x768xf32, #tpu.memory_space<vmem>>, %arg3: memref<1x768xf32, #tpu.memory_space<vmem>>, %arg4: memref<128x384xf32, #tpu.memory_space<vmem>>, %arg5: memref<1x384xf32, #tpu.memory_space<vmem>>, %arg6: memref<128x384xf32, #tpu.memory_space<vmem>>, %arg7: memref<1x384xf32, #tpu.memory_space<vmem>>, %arg8: memref<256x128xf32, #tpu.memory_space<vmem>>, %arg9: memref<1x128xf32, #tpu.memory_space<vmem>>, %arg10: memref<128x128xf32, #tpu.memory_space<vmem>>, %arg11: memref<128x128xf32, #tpu.memory_space<vmem>>, %arg12: memref<1x128xf32, #tpu.memory_space<vmem>>, %arg13: memref<2x8x256xf32, #tpu.memory_space<vmem>>, %arg14: memref<2x8x128xf32, #tpu.memory_space<vmem>>, %arg15: memref<2x128xf32, #tpu.memory_space<vmem>>) attributes {dimension_semantics = [], scalar_prefetch = 0 : i64, scratch_operands = 0 : i64, tpu.core_type = #tpu.core_type<tc>} {
    %c0 = arith.constant 0 : index
    %c0_0 = arith.constant 0 : index
    %0 = vector.load %arg0[%c0, %c0_0] : memref<16x16xf32, #tpu.memory_space<vmem>>, vector<16x16xf32>
    %c0_1 = arith.constant 0 : index
    %c0_2 = arith.constant 0 : index
    %1 = vector.load %arg2[%c0_1, %c0_2] : memref<16x768xf32, #tpu.memory_space<vmem>>, vector<16x768xf32>
    %cst = arith.constant dense<0.000000e+00> : vector<16x768xf32>
    %2 = tpu.matmul %0, %1, %cst {dimension_numbers = #tpu.dot_dimension_numbers<[1], [0], [0], [1], [0, 0, 1, 1], [], []>} : vector<16x16xf32>, vector<16x768xf32>, vector<16x768xf32> -> vector<16x768xf32>
    %c0_3 = arith.constant 0 : index
    %c0_4 = arith.constant 0 : index
    %3 = vector.load %arg3[%c0_3, %c0_4] : memref<1x768xf32, #tpu.memory_space<vmem>>, vector<1x768xf32>
    %4 = vector.broadcast %3 : vector<1x768xf32> to vector<16x768xf32>
    %5 = arith.addf %2, %4 : vector<16x768xf32>
    %c0_5 = arith.constant 0 : index
    %c0_6 = arith.constant 0 : index
    %6 = vector.load %arg4[%c0_5, %c0_6] : memref<128x384xf32, #tpu.memory_space<vmem>>, vector<128x384xf32>
    %c0_7 = arith.constant 0 : index
    %c0_8 = arith.constant 0 : index
    %7 = vector.load %arg5[%c0_7, %c0_8] : memref<1x384xf32, #tpu.memory_space<vmem>>, vector<1x384xf32>
    %c0_9 = arith.constant 0 : index
    %c0_10 = arith.constant 0 : index
    %8 = vector.load %arg6[%c0_9, %c0_10] : memref<128x384xf32, #tpu.memory_space<vmem>>, vector<128x384xf32>
    %c0_11 = arith.constant 0 : index
    %c0_12 = arith.constant 0 : index
    %9 = vector.load %arg7[%c0_11, %c0_12] : memref<1x384xf32, #tpu.memory_space<vmem>>, vector<1x384xf32>
    %c0_13 = arith.constant 0 : index
    %c0_14 = arith.constant 0 : index
    %10 = vector.load %arg1[%c0_13, %c0_14] : memref<2x8xf32, #tpu.memory_space<vmem>>, vector<2x8xf32>
    %cst_15 = arith.constant 0.000000e+00 : f32
    %11 = vector.broadcast %cst_15 : f32 to vector<2x128xf32>
    %cst_16 = arith.constant 0.000000e+00 : f32
    %12 = vector.broadcast %cst_16 : f32 to vector<2x128xf32>
    %13 = vector.extract_strided_slice %10 {offsets = [0, 0], sizes = [2, 1], strides = [1, 1]} : vector<2x8xf32> to vector<2x1xf32>
    %14 = vector.extract_strided_slice %10 {offsets = [0, 7], sizes = [2, 1], strides = [1, 1]} : vector<2x8xf32> to vector<2x1xf32>
    %15 = vector.extract_strided_slice %5 {offsets = [0, 0], sizes = [2, 384], strides = [1, 1]} : vector<16x768xf32> to vector<2x384xf32>
    %16 = vector.extract_strided_slice %5 {offsets = [14, 384], sizes = [2, 384], strides = [1, 1]} : vector<16x768xf32> to vector<2x384xf32>
    %cst_17 = arith.constant dense<0.000000e+00> : vector<2x384xf32>
    %17 = tpu.matmul %11, %6, %cst_17 {dimension_numbers = #tpu.dot_dimension_numbers<[1], [0], [0], [1], [0, 0, 1, 1], [], []>} : vector<2x128xf32>, vector<128x384xf32>, vector<2x384xf32> -> vector<2x384xf32>
    %18 = vector.broadcast %7 : vector<1x384xf32> to vector<2x384xf32>
    %19 = arith.addf %17, %18 : vector<2x384xf32>
    %cst_18 = arith.constant dense<0.000000e+00> : vector<2x384xf32>
    %20 = tpu.matmul %12, %8, %cst_18 {dimension_numbers = #tpu.dot_dimension_numbers<[1], [0], [0], [1], [0, 0, 1, 1], [], []>} : vector<2x128xf32>, vector<128x384xf32>, vector<2x384xf32> -> vector<2x384xf32>
    %21 = vector.broadcast %9 : vector<1x384xf32> to vector<2x384xf32>
    %22 = arith.addf %20, %21 : vector<2x384xf32>
    %23 = vector.extract_strided_slice %15 {offsets = [0, 0], sizes = [2, 128], strides = [1, 1]} : vector<2x384xf32> to vector<2x128xf32>
    %24 = vector.extract_strided_slice %19 {offsets = [0, 0], sizes = [2, 128], strides = [1, 1]} : vector<2x384xf32> to vector<2x128xf32>
    %25 = arith.addf %23, %24 : vector<2x128xf32>
    %26 = arith.negf %25 : vector<2x128xf32>
    %27 = math.exp %26 : vector<2x128xf32>
    %cst_19 = arith.constant 1.000000e+00 : f32
    %28 = vector.broadcast %cst_19 : f32 to vector<2x128xf32>
    %29 = arith.addf %28, %27 : vector<2x128xf32>
    %30 = arith.divf %28, %29 : vector<2x128xf32>
    %31 = vector.extract_strided_slice %15 {offsets = [0, 128], sizes = [2, 128], strides = [1, 1]} : vector<2x384xf32> to vector<2x128xf32>
    %32 = vector.extract_strided_slice %19 {offsets = [0, 128], sizes = [2, 128], strides = [1, 1]} : vector<2x384xf32> to vector<2x128xf32>
    %33 = arith.addf %31, %32 : vector<2x128xf32>
    %34 = arith.negf %33 : vector<2x128xf32>
    %35 = math.exp %34 : vector<2x128xf32>
    %cst_20 = arith.constant 1.000000e+00 : f32
    %36 = vector.broadcast %cst_20 : f32 to vector<2x128xf32>
    %37 = arith.addf %36, %35 : vector<2x128xf32>
    %38 = arith.divf %36, %37 : vector<2x128xf32>
    %39 = vector.extract_strided_slice %15 {offsets = [0, 256], sizes = [2, 128], strides = [1, 1]} : vector<2x384xf32> to vector<2x128xf32>
    %40 = vector.extract_strided_slice %19 {offsets = [0, 256], sizes = [2, 128], strides = [1, 1]} : vector<2x384xf32> to vector<2x128xf32>
    %41 = arith.mulf %30, %40 : vector<2x128xf32>
    %42 = arith.addf %39, %41 : vector<2x128xf32>
    %43 = math.tanh %42 : vector<2x128xf32>
    %cst_21 = arith.constant 1.000000e+00 : f32
    %44 = vector.broadcast %cst_21 : f32 to vector<2x128xf32>
    %45 = arith.subf %44, %38 : vector<2x128xf32>
    %46 = arith.mulf %45, %43 : vector<2x128xf32>
    %47 = arith.mulf %38, %11 : vector<2x128xf32>
    %48 = arith.addf %46, %47 : vector<2x128xf32>
    %49 = vector.broadcast %13 : vector<2x1xf32> to vector<2x128xf32>
    %50 = arith.mulf %49, %48 : vector<2x128xf32>
    %cst_22 = arith.constant 1.000000e+00 : f32
    %51 = vector.broadcast %cst_22 : f32 to vector<2x1xf32>
    %52 = arith.subf %51, %13 : vector<2x1xf32>
    %53 = vector.broadcast %52 : vector<2x1xf32> to vector<2x128xf32>
    %54 = arith.mulf %53, %11 : vector<2x128xf32>
    %55 = arith.addf %50, %54 : vector<2x128xf32>
    %56 = vector.extract_strided_slice %16 {offsets = [0, 0], sizes = [2, 128], strides = [1, 1]} : vector<2x384xf32> to vector<2x128xf32>
    %57 = vector.extract_strided_slice %22 {offsets = [0, 0], sizes = [2, 128], strides = [1, 1]} : vector<2x384xf32> to vector<2x128xf32>
    %58 = arith.addf %56, %57 : vector<2x128xf32>
    %59 = arith.negf %58 : vector<2x128xf32>
    %60 = math.exp %59 : vector<2x128xf32>
    %cst_23 = arith.constant 1.000000e+00 : f32
    %61 = vector.broadcast %cst_23 : f32 to vector<2x128xf32>
    %62 = arith.addf %61, %60 : vector<2x128xf32>
    %63 = arith.divf %61, %62 : vector<2x128xf32>
    %64 = vector.extract_strided_slice %16 {offsets = [0, 128], sizes = [2, 128], strides = [1, 1]} : vector<2x384xf32> to vector<2x128xf32>
    %65 = vector.extract_strided_slice %22 {offsets = [0, 128], sizes = [2, 128], strides = [1, 1]} : vector<2x384xf32> to vector<2x128xf32>
    %66 = arith.addf %64, %65 : vector<2x128xf32>
    %67 = arith.negf %66 : vector<2x128xf32>
    %68 = math.exp %67 : vector<2x128xf32>
    %cst_24 = arith.constant 1.000000e+00 : f32
    %69 = vector.broadcast %cst_24 : f32 to vector<2x128xf32>
    %70 = arith.addf %69, %68 : vector<2x128xf32>
    %71 = arith.divf %69, %70 : vector<2x128xf32>
    %72 = vector.extract_strided_slice %16 {offsets = [0, 256], sizes = [2, 128], strides = [1, 1]} : vector<2x384xf32> to vector<2x128xf32>
    %73 = vector.extract_strided_slice %22 {offsets = [0, 256], sizes = [2, 128], strides = [1, 1]} : vector<2x384xf32> to vector<2x128xf32>
    %74 = arith.mulf %63, %73 : vector<2x128xf32>
    %75 = arith.addf %72, %74 : vector<2x128xf32>
    %76 = math.tanh %75 : vector<2x128xf32>
    %cst_25 = arith.constant 1.000000e+00 : f32
    %77 = vector.broadcast %cst_25 : f32 to vector<2x128xf32>
    %78 = arith.subf %77, %71 : vector<2x128xf32>
    %79 = arith.mulf %78, %76 : vector<2x128xf32>
    %80 = arith.mulf %71, %12 : vector<2x128xf32>
    %81 = arith.addf %79, %80 : vector<2x128xf32>
    %82 = vector.broadcast %14 : vector<2x1xf32> to vector<2x128xf32>
    %83 = arith.mulf %82, %81 : vector<2x128xf32>
    %cst_26 = arith.constant 1.000000e+00 : f32
    %84 = vector.broadcast %cst_26 : f32 to vector<2x1xf32>
    %85 = arith.subf %84, %14 : vector<2x1xf32>
    %86 = vector.broadcast %85 : vector<2x1xf32> to vector<2x128xf32>
    %87 = arith.mulf %86, %12 : vector<2x128xf32>
    %88 = arith.addf %83, %87 : vector<2x128xf32>
    %89 = vector.broadcast %13 : vector<2x1xf32> to vector<2x128xf32>
    %90 = arith.mulf %89, %55 : vector<2x128xf32>
    %c0_27 = arith.constant 0 : index
    %c0_28 = arith.constant 0 : index
    %c0_29 = arith.constant 0 : index
    %91 = vector.load %arg13[%c0_27, %c0_28, %c0_29] : memref<2x8x256xf32, #tpu.memory_space<vmem>>, vector<2x1x128xf32>
    %92 = vector.shape_cast %91 : vector<2x1x128xf32> to vector<2x128xf32>
    %93 = vector.shape_cast %90 : vector<2x128xf32> to vector<2x1x128xf32>
    tpu.vector_store %arg13[%c0_27, %c0_28, %c0_29], %93 {strides = array<i32>} : memref<2x8x256xf32, #tpu.memory_space<vmem>>, vector<2x1x128xf32>,
    %94 = vector.broadcast %14 : vector<2x1xf32> to vector<2x128xf32>
    %95 = arith.mulf %94, %88 : vector<2x128xf32>
    %c0_30 = arith.constant 0 : index
    %c7 = arith.constant 7 : index
    %c128 = arith.constant 128 : index
    %96 = vector.load %arg13[%c0_30, %c7, %c128] : memref<2x8x256xf32, #tpu.memory_space<vmem>>, vector<2x1x128xf32>
    %97 = vector.shape_cast %96 : vector<2x1x128xf32> to vector<2x128xf32>
    %98 = vector.shape_cast %95 : vector<2x128xf32> to vector<2x1x128xf32>
    tpu.vector_store %arg13[%c0_30, %c7, %c128], %98 {strides = array<i32>} : memref<2x8x256xf32, #tpu.memory_space<vmem>>, vector<2x1x128xf32>,
    %99 = vector.extract_strided_slice %10 {offsets = [0, 1], sizes = [2, 1], strides = [1, 1]} : vector<2x8xf32> to vector<2x1xf32>
    %100 = vector.extract_strided_slice %10 {offsets = [0, 6], sizes = [2, 1], strides = [1, 1]} : vector<2x8xf32> to vector<2x1xf32>
    %101 = vector.extract_strided_slice %5 {offsets = [2, 0], sizes = [2, 384], strides = [1, 1]} : vector<16x768xf32> to vector<2x384xf32>
    %102 = vector.extract_strided_slice %5 {offsets = [12, 384], sizes = [2, 384], strides = [1, 1]} : vector<16x768xf32> to vector<2x384xf32>
    %cst_31 = arith.constant dense<0.000000e+00> : vector<2x384xf32>
    %103 = tpu.matmul %55, %6, %cst_31 {dimension_numbers = #tpu.dot_dimension_numbers<[1], [0], [0], [1], [0, 0, 1, 1], [], []>} : vector<2x128xf32>, vector<128x384xf32>, vector<2x384xf32> -> vector<2x384xf32>
    %104 = vector.broadcast %7 : vector<1x384xf32> to vector<2x384xf32>
    %105 = arith.addf %103, %104 : vector<2x384xf32>
    %cst_32 = arith.constant dense<0.000000e+00> : vector<2x384xf32>
    %106 = tpu.matmul %88, %8, %cst_32 {dimension_numbers = #tpu.dot_dimension_numbers<[1], [0], [0], [1], [0, 0, 1, 1], [], []>} : vector<2x128xf32>, vector<128x384xf32>, vector<2x384xf32> -> vector<2x384xf32>
    %107 = vector.broadcast %9 : vector<1x384xf32> to vector<2x384xf32>
    %108 = arith.addf %106, %107 : vector<2x384xf32>
    %109 = vector.extract_strided_slice %101 {offsets = [0, 0], sizes = [2, 128], strides = [1, 1]} : vector<2x384xf32> to vector<2x128xf32>
    %110 = vector.extract_strided_slice %105 {offsets = [0, 0], sizes = [2, 128], strides = [1, 1]} : vector<2x384xf32> to vector<2x128xf32>
    %111 = arith.addf %109, %110 : vector<2x128xf32>
    %112 = arith.negf %111 : vector<2x128xf32>
    %113 = math.exp %112 : vector<2x128xf32>
    %cst_33 = arith.constant 1.000000e+00 : f32
    %114 = vector.broadcast %cst_33 : f32 to vector<2x128xf32>
    %115 = arith.addf %114, %113 : vector<2x128xf32>
    %116 = arith.divf %114, %115 : vector<2x128xf32>
    %117 = vector.extract_strided_slice %101 {offsets = [0, 128], sizes = [2, 128], strides = [1, 1]} : vector<2x384xf32> to vector<2x128xf32>
    %118 = vector.extract_strided_slice %105 {offsets = [0, 128], sizes = [2, 128], strides = [1, 1]} : vector<2x384xf32> to vector<2x128xf32>
    %119 = arith.addf %117, %118 : vector<2x128xf32>
    %120 = arith.negf %119 : vector<2x128xf32>
    %121 = math.exp %120 : vector<2x128xf32>
    %cst_34 = arith.constant 1.000000e+00 : f32
    %122 = vector.broadcast %cst_34 : f32 to vector<2x128xf32>
    %123 = arith.addf %122, %121 : vector<2x128xf32>
    %124 = arith.divf %122, %123 : vector<2x128xf32>
    %125 = vector.extract_strided_slice %101 {offsets = [0, 256], sizes = [2, 128], strides = [1, 1]} : vector<2x384xf32> to vector<2x128xf32>
    %126 = vector.extract_strided_slice %105 {offsets = [0, 256], sizes = [2, 128], strides = [1, 1]} : vector<2x384xf32> to vector<2x128xf32>
    %127 = arith.mulf %116, %126 : vector<2x128xf32>
    %128 = arith.addf %125, %127 : vector<2x128xf32>
    %129 = math.tanh %128 : vector<2x128xf32>
    %cst_35 = arith.constant 1.000000e+00 : f32
    %130 = vector.broadcast %cst_35 : f32 to vector<2x128xf32>
    %131 = arith.subf %130, %124 : vector<2x128xf32>
    %132 = arith.mulf %131, %129 : vector<2x128xf32>
    %133 = arith.mulf %124, %55 : vector<2x128xf32>
    %134 = arith.addf %132, %133 : vector<2x128xf32>
    %135 = vector.broadcast %99 : vector<2x1xf32> to vector<2x128xf32>
    %136 = arith.mulf %135, %134 : vector<2x128xf32>
    %cst_36 = arith.constant 1.000000e+00 : f32
    %137 = vector.broadcast %cst_36 : f32 to vector<2x1xf32>
    %138 = arith.subf %137, %99 : vector<2x1xf32>
    %139 = vector.broadcast %138 : vector<2x1xf32> to vector<2x128xf32>
    %140 = arith.mulf %139, %55 : vector<2x128xf32>
    %141 = arith.addf %136, %140 : vector<2x128xf32>
    %142 = vector.extract_strided_slice %102 {offsets = [0, 0], sizes = [2, 128], strides = [1, 1]} : vector<2x384xf32> to vector<2x128xf32>
    %143 = vector.extract_strided_slice %108 {offsets = [0, 0], sizes = [2, 128], strides = [1, 1]} : vector<2x384xf32> to vector<2x128xf32>
    %144 = arith.addf %142, %143 : vector<2x128xf32>
    %145 = arith.negf %144 : vector<2x128xf32>
    %146 = math.exp %145 : vector<2x128xf32>
    %cst_37 = arith.constant 1.000000e+00 : f32
    %147 = vector.broadcast %cst_37 : f32 to vector<2x128xf32>
    %148 = arith.addf %147, %146 : vector<2x128xf32>
    %149 = arith.divf %147, %148 : vector<2x128xf32>
    %150 = vector.extract_strided_slice %102 {offsets = [0, 128], sizes = [2, 128], strides = [1, 1]} : vector<2x384xf32> to vector<2x128xf32>
    %151 = vector.extract_strided_slice %108 {offsets = [0, 128], sizes = [2, 128], strides = [1, 1]} : vector<2x384xf32> to vector<2x128xf32>
    %152 = arith.addf %150, %151 : vector<2x128xf32>
    %153 = arith.negf %152 : vector<2x128xf32>
    %154 = math.exp %153 : vector<2x128xf32>
    %cst_38 = arith.constant 1.000000e+00 : f32
    %155 = vector.broadcast %cst_38 : f32 to vector<2x128xf32>
    %156 = arith.addf %155, %154 : vector<2x128xf32>
    %157 = arith.divf %155, %156 : vector<2x128xf32>
    %158 = vector.extract_strided_slice %102 {offsets = [0, 256], sizes = [2, 128], strides = [1, 1]} : vector<2x384xf32> to vector<2x128xf32>
    %159 = vector.extract_strided_slice %108 {offsets = [0, 256], sizes = [2, 128], strides = [1, 1]} : vector<2x384xf32> to vector<2x128xf32>
    %160 = arith.mulf %149, %159 : vector<2x128xf32>
    %161 = arith.addf %158, %160 : vector<2x128xf32>
    %162 = math.tanh %161 : vector<2x128xf32>
    %cst_39 = arith.constant 1.000000e+00 : f32
    %163 = vector.broadcast %cst_39 : f32 to vector<2x128xf32>
    %164 = arith.subf %163, %157 : vector<2x128xf32>
    %165 = arith.mulf %164, %162 : vector<2x128xf32>
    %166 = arith.mulf %157, %88 : vector<2x128xf32>
    %167 = arith.addf %165, %166 : vector<2x128xf32>
    %168 = vector.broadcast %100 : vector<2x1xf32> to vector<2x128xf32>
    %169 = arith.mulf %168, %167 : vector<2x128xf32>
    %cst_40 = arith.constant 1.000000e+00 : f32
    %170 = vector.broadcast %cst_40 : f32 to vector<2x1xf32>
    %171 = arith.subf %170, %100 : vector<2x1xf32>
    %172 = vector.broadcast %171 : vector<2x1xf32> to vector<2x128xf32>
    %173 = arith.mulf %172, %88 : vector<2x128xf32>
    %174 = arith.addf %169, %173 : vector<2x128xf32>
    %175 = vector.broadcast %99 : vector<2x1xf32> to vector<2x128xf32>
    %176 = arith.mulf %175, %141 : vector<2x128xf32>
    %c0_41 = arith.constant 0 : index
    %c1 = arith.constant 1 : index
    %c0_42 = arith.constant 0 : index
    %177 = vector.load %arg13[%c0_41, %c1, %c0_42] : memref<2x8x256xf32, #tpu.memory_space<vmem>>, vector<2x1x128xf32>
    %178 = vector.shape_cast %177 : vector<2x1x128xf32> to vector<2x128xf32>
    %179 = vector.shape_cast %176 : vector<2x128xf32> to vector<2x1x128xf32>
    tpu.vector_store %arg13[%c0_41, %c1, %c0_42], %179 {strides = array<i32>} : memref<2x8x256xf32, #tpu.memory_space<vmem>>, vector<2x1x128xf32>,
    %180 = vector.broadcast %100 : vector<2x1xf32> to vector<2x128xf32>
    %181 = arith.mulf %180, %174 : vector<2x128xf32>
    %c0_43 = arith.constant 0 : index
    %c6 = arith.constant 6 : index
    %c128_44 = arith.constant 128 : index
    %182 = vector.load %arg13[%c0_43, %c6, %c128_44] : memref<2x8x256xf32, #tpu.memory_space<vmem>>, vector<2x1x128xf32>
    %183 = vector.shape_cast %182 : vector<2x1x128xf32> to vector<2x128xf32>
    %184 = vector.shape_cast %181 : vector<2x128xf32> to vector<2x1x128xf32>
    tpu.vector_store %arg13[%c0_43, %c6, %c128_44], %184 {strides = array<i32>} : memref<2x8x256xf32, #tpu.memory_space<vmem>>, vector<2x1x128xf32>,
    %185 = vector.extract_strided_slice %10 {offsets = [0, 2], sizes = [2, 1], strides = [1, 1]} : vector<2x8xf32> to vector<2x1xf32>
    %186 = vector.extract_strided_slice %10 {offsets = [0, 5], sizes = [2, 1], strides = [1, 1]} : vector<2x8xf32> to vector<2x1xf32>
    %187 = vector.extract_strided_slice %5 {offsets = [4, 0], sizes = [2, 384], strides = [1, 1]} : vector<16x768xf32> to vector<2x384xf32>
    %188 = vector.extract_strided_slice %5 {offsets = [10, 384], sizes = [2, 384], strides = [1, 1]} : vector<16x768xf32> to vector<2x384xf32>
    %cst_45 = arith.constant dense<0.000000e+00> : vector<2x384xf32>
    %189 = tpu.matmul %141, %6, %cst_45 {dimension_numbers = #tpu.dot_dimension_numbers<[1], [0], [0], [1], [0, 0, 1, 1], [], []>} : vector<2x128xf32>, vector<128x384xf32>, vector<2x384xf32> -> vector<2x384xf32>
    %190 = vector.broadcast %7 : vector<1x384xf32> to vector<2x384xf32>
    %191 = arith.addf %189, %190 : vector<2x384xf32>
    %cst_46 = arith.constant dense<0.000000e+00> : vector<2x384xf32>
    %192 = tpu.matmul %174, %8, %cst_46 {dimension_numbers = #tpu.dot_dimension_numbers<[1], [0], [0], [1], [0, 0, 1, 1], [], []>} : vector<2x128xf32>, vector<128x384xf32>, vector<2x384xf32> -> vector<2x384xf32>
    %193 = vector.broadcast %9 : vector<1x384xf32> to vector<2x384xf32>
    %194 = arith.addf %192, %193 : vector<2x384xf32>
    %195 = vector.extract_strided_slice %187 {offsets = [0, 0], sizes = [2, 128], strides = [1, 1]} : vector<2x384xf32> to vector<2x128xf32>
    %196 = vector.extract_strided_slice %191 {offsets = [0, 0], sizes = [2, 128], strides = [1, 1]} : vector<2x384xf32> to vector<2x128xf32>
    %197 = arith.addf %195, %196 : vector<2x128xf32>
    %198 = arith.negf %197 : vector<2x128xf32>
    %199 = math.exp %198 : vector<2x128xf32>
    %cst_47 = arith.constant 1.000000e+00 : f32
    %200 = vector.broadcast %cst_47 : f32 to vector<2x128xf32>
    %201 = arith.addf %200, %199 : vector<2x128xf32>
    %202 = arith.divf %200, %201 : vector<2x128xf32>
    %203 = vector.extract_strided_slice %187 {offsets = [0, 128], sizes = [2, 128], strides = [1, 1]} : vector<2x384xf32> to vector<2x128xf32>
    %204 = vector.extract_strided_slice %191 {offsets = [0, 128], sizes = [2, 128], strides = [1, 1]} : vector<2x384xf32> to vector<2x128xf32>
    %205 = arith.addf %203, %204 : vector<2x128xf32>
    %206 = arith.negf %205 : vector<2x128xf32>
    %207 = math.exp %206 : vector<2x128xf32>
    %cst_48 = arith.constant 1.000000e+00 : f32
    %208 = vector.broadcast %cst_48 : f32 to vector<2x128xf32>
    %209 = arith.addf %208, %207 : vector<2x128xf32>
    %210 = arith.divf %208, %209 : vector<2x128xf32>
    %211 = vector.extract_strided_slice %187 {offsets = [0, 256], sizes = [2, 128], strides = [1, 1]} : vector<2x384xf32> to vector<2x128xf32>
    %212 = vector.extract_strided_slice %191 {offsets = [0, 256], sizes = [2, 128], strides = [1, 1]} : vector<2x384xf32> to vector<2x128xf32>
    %213 = arith.mulf %202, %212 : vector<2x128xf32>
    %214 = arith.addf %211, %213 : vector<2x128xf32>
    %215 = math.tanh %214 : vector<2x128xf32>
    %cst_49 = arith.constant 1.000000e+00 : f32
    %216 = vector.broadcast %cst_49 : f32 to vector<2x128xf32>
    %217 = arith.subf %216, %210 : vector<2x128xf32>
    %218 = arith.mulf %217, %215 : vector<2x128xf32>
    %219 = arith.mulf %210, %141 : vector<2x128xf32>
    %220 = arith.addf %218, %219 : vector<2x128xf32>
    %221 = vector.broadcast %185 : vector<2x1xf32> to vector<2x128xf32>
    %222 = arith.mulf %221, %220 : vector<2x128xf32>
    %cst_50 = arith.constant 1.000000e+00 : f32
    %223 = vector.broadcast %cst_50 : f32 to vector<2x1xf32>
    %224 = arith.subf %223, %185 : vector<2x1xf32>
    %225 = vector.broadcast %224 : vector<2x1xf32> to vector<2x128xf32>
    %226 = arith.mulf %225, %141 : vector<2x128xf32>
    %227 = arith.addf %222, %226 : vector<2x128xf32>
    %228 = vector.extract_strided_slice %188 {offsets = [0, 0], sizes = [2, 128], strides = [1, 1]} : vector<2x384xf32> to vector<2x128xf32>
    %229 = vector.extract_strided_slice %194 {offsets = [0, 0], sizes = [2, 128], strides = [1, 1]} : vector<2x384xf32> to vector<2x128xf32>
    %230 = arith.addf %228, %229 : vector<2x128xf32>
    %231 = arith.negf %230 : vector<2x128xf32>
    %232 = math.exp %231 : vector<2x128xf32>
    %cst_51 = arith.constant 1.000000e+00 : f32
    %233 = vector.broadcast %cst_51 : f32 to vector<2x128xf32>
    %234 = arith.addf %233, %232 : vector<2x128xf32>
    %235 = arith.divf %233, %234 : vector<2x128xf32>
    %236 = vector.extract_strided_slice %188 {offsets = [0, 128], sizes = [2, 128], strides = [1, 1]} : vector<2x384xf32> to vector<2x128xf32>
    %237 = vector.extract_strided_slice %194 {offsets = [0, 128], sizes = [2, 128], strides = [1, 1]} : vector<2x384xf32> to vector<2x128xf32>
    %238 = arith.addf %236, %237 : vector<2x128xf32>
    %239 = arith.negf %238 : vector<2x128xf32>
    %240 = math.exp %239 : vector<2x128xf32>
    %cst_52 = arith.constant 1.000000e+00 : f32
    %241 = vector.broadcast %cst_52 : f32 to vector<2x128xf32>
    %242 = arith.addf %241, %240 : vector<2x128xf32>
    %243 = arith.divf %241, %242 : vector<2x128xf32>
    %244 = vector.extract_strided_slice %188 {offsets = [0, 256], sizes = [2, 128], strides = [1, 1]} : vector<2x384xf32> to vector<2x128xf32>
    %245 = vector.extract_strided_slice %194 {offsets = [0, 256], sizes = [2, 128], strides = [1, 1]} : vector<2x384xf32> to vector<2x128xf32>
    %246 = arith.mulf %235, %245 : vector<2x128xf32>
    %247 = arith.addf %244, %246 : vector<2x128xf32>
    %248 = math.tanh %247 : vector<2x128xf32>
    %cst_53 = arith.constant 1.000000e+00 : f32
    %249 = vector.broadcast %cst_53 : f32 to vector<2x128xf32>
    %250 = arith.subf %249, %243 : vector<2x128xf32>
    %251 = arith.mulf %250, %248 : vector<2x128xf32>
    %252 = arith.mulf %243, %174 : vector<2x128xf32>
    %253 = arith.addf %251, %252 : vector<2x128xf32>
    %254 = vector.broadcast %186 : vector<2x1xf32> to vector<2x128xf32>
    %255 = arith.mulf %254, %253 : vector<2x128xf32>
    %cst_54 = arith.constant 1.000000e+00 : f32
    %256 = vector.broadcast %cst_54 : f32 to vector<2x1xf32>
    %257 = arith.subf %256, %186 : vector<2x1xf32>
    %258 = vector.broadcast %257 : vector<2x1xf32> to vector<2x128xf32>
    %259 = arith.mulf %258, %174 : vector<2x128xf32>
    %260 = arith.addf %255, %259 : vector<2x128xf32>
    %261 = vector.broadcast %185 : vector<2x1xf32> to vector<2x128xf32>
    %262 = arith.mulf %261, %227 : vector<2x128xf32>
    %c0_55 = arith.constant 0 : index
    %c2 = arith.constant 2 : index
    %c0_56 = arith.constant 0 : index
    %263 = vector.load %arg13[%c0_55, %c2, %c0_56] : memref<2x8x256xf32, #tpu.memory_space<vmem>>, vector<2x1x128xf32>
    %264 = vector.shape_cast %263 : vector<2x1x128xf32> to vector<2x128xf32>
    %265 = vector.shape_cast %262 : vector<2x128xf32> to vector<2x1x128xf32>
    tpu.vector_store %arg13[%c0_55, %c2, %c0_56], %265 {strides = array<i32>} : memref<2x8x256xf32, #tpu.memory_space<vmem>>, vector<2x1x128xf32>,
    %266 = vector.broadcast %186 : vector<2x1xf32> to vector<2x128xf32>
    %267 = arith.mulf %266, %260 : vector<2x128xf32>
    %c0_57 = arith.constant 0 : index
    %c5 = arith.constant 5 : index
    %c128_58 = arith.constant 128 : index
    %268 = vector.load %arg13[%c0_57, %c5, %c128_58] : memref<2x8x256xf32, #tpu.memory_space<vmem>>, vector<2x1x128xf32>
    %269 = vector.shape_cast %268 : vector<2x1x128xf32> to vector<2x128xf32>
    %270 = vector.shape_cast %267 : vector<2x128xf32> to vector<2x1x128xf32>
    tpu.vector_store %arg13[%c0_57, %c5, %c128_58], %270 {strides = array<i32>} : memref<2x8x256xf32, #tpu.memory_space<vmem>>, vector<2x1x128xf32>,
    %271 = vector.extract_strided_slice %10 {offsets = [0, 3], sizes = [2, 1], strides = [1, 1]} : vector<2x8xf32> to vector<2x1xf32>
    %272 = vector.extract_strided_slice %10 {offsets = [0, 4], sizes = [2, 1], strides = [1, 1]} : vector<2x8xf32> to vector<2x1xf32>
    %273 = vector.extract_strided_slice %5 {offsets = [6, 0], sizes = [2, 384], strides = [1, 1]} : vector<16x768xf32> to vector<2x384xf32>
    %274 = vector.extract_strided_slice %5 {offsets = [8, 384], sizes = [2, 384], strides = [1, 1]} : vector<16x768xf32> to vector<2x384xf32>
    %cst_59 = arith.constant dense<0.000000e+00> : vector<2x384xf32>
    %275 = tpu.matmul %227, %6, %cst_59 {dimension_numbers = #tpu.dot_dimension_numbers<[1], [0], [0], [1], [0, 0, 1, 1], [], []>} : vector<2x128xf32>, vector<128x384xf32>, vector<2x384xf32> -> vector<2x384xf32>
    %276 = vector.broadcast %7 : vector<1x384xf32> to vector<2x384xf32>
    %277 = arith.addf %275, %276 : vector<2x384xf32>
    %cst_60 = arith.constant dense<0.000000e+00> : vector<2x384xf32>
    %278 = tpu.matmul %260, %8, %cst_60 {dimension_numbers = #tpu.dot_dimension_numbers<[1], [0], [0], [1], [0, 0, 1, 1], [], []>} : vector<2x128xf32>, vector<128x384xf32>, vector<2x384xf32> -> vector<2x384xf32>
    %279 = vector.broadcast %9 : vector<1x384xf32> to vector<2x384xf32>
    %280 = arith.addf %278, %279 : vector<2x384xf32>
    %281 = vector.extract_strided_slice %273 {offsets = [0, 0], sizes = [2, 128], strides = [1, 1]} : vector<2x384xf32> to vector<2x128xf32>
    %282 = vector.extract_strided_slice %277 {offsets = [0, 0], sizes = [2, 128], strides = [1, 1]} : vector<2x384xf32> to vector<2x128xf32>
    %283 = arith.addf %281, %282 : vector<2x128xf32>
    %284 = arith.negf %283 : vector<2x128xf32>
    %285 = math.exp %284 : vector<2x128xf32>
    %cst_61 = arith.constant 1.000000e+00 : f32
    %286 = vector.broadcast %cst_61 : f32 to vector<2x128xf32>
    %287 = arith.addf %286, %285 : vector<2x128xf32>
    %288 = arith.divf %286, %287 : vector<2x128xf32>
    %289 = vector.extract_strided_slice %273 {offsets = [0, 128], sizes = [2, 128], strides = [1, 1]} : vector<2x384xf32> to vector<2x128xf32>
    %290 = vector.extract_strided_slice %277 {offsets = [0, 128], sizes = [2, 128], strides = [1, 1]} : vector<2x384xf32> to vector<2x128xf32>
    %291 = arith.addf %289, %290 : vector<2x128xf32>
    %292 = arith.negf %291 : vector<2x128xf32>
    %293 = math.exp %292 : vector<2x128xf32>
    %cst_62 = arith.constant 1.000000e+00 : f32
    %294 = vector.broadcast %cst_62 : f32 to vector<2x128xf32>
    %295 = arith.addf %294, %293 : vector<2x128xf32>
    %296 = arith.divf %294, %295 : vector<2x128xf32>
    %297 = vector.extract_strided_slice %273 {offsets = [0, 256], sizes = [2, 128], strides = [1, 1]} : vector<2x384xf32> to vector<2x128xf32>
    %298 = vector.extract_strided_slice %277 {offsets = [0, 256], sizes = [2, 128], strides = [1, 1]} : vector<2x384xf32> to vector<2x128xf32>
    %299 = arith.mulf %288, %298 : vector<2x128xf32>
    %300 = arith.addf %297, %299 : vector<2x128xf32>
    %301 = math.tanh %300 : vector<2x128xf32>
    %cst_63 = arith.constant 1.000000e+00 : f32
    %302 = vector.broadcast %cst_63 : f32 to vector<2x128xf32>
    %303 = arith.subf %302, %296 : vector<2x128xf32>
    %304 = arith.mulf %303, %301 : vector<2x128xf32>
    %305 = arith.mulf %296, %227 : vector<2x128xf32>
    %306 = arith.addf %304, %305 : vector<2x128xf32>
    %307 = vector.broadcast %271 : vector<2x1xf32> to vector<2x128xf32>
    %308 = arith.mulf %307, %306 : vector<2x128xf32>
    %cst_64 = arith.constant 1.000000e+00 : f32
    %309 = vector.broadcast %cst_64 : f32 to vector<2x1xf32>
    %310 = arith.subf %309, %271 : vector<2x1xf32>
    %311 = vector.broadcast %310 : vector<2x1xf32> to vector<2x128xf32>
    %312 = arith.mulf %311, %227 : vector<2x128xf32>
    %313 = arith.addf %308, %312 : vector<2x128xf32>
    %314 = vector.extract_strided_slice %274 {offsets = [0, 0], sizes = [2, 128], strides = [1, 1]} : vector<2x384xf32> to vector<2x128xf32>
    %315 = vector.extract_strided_slice %280 {offsets = [0, 0], sizes = [2, 128], strides = [1, 1]} : vector<2x384xf32> to vector<2x128xf32>
    %316 = arith.addf %314, %315 : vector<2x128xf32>
    %317 = arith.negf %316 : vector<2x128xf32>
    %318 = math.exp %317 : vector<2x128xf32>
    %cst_65 = arith.constant 1.000000e+00 : f32
    %319 = vector.broadcast %cst_65 : f32 to vector<2x128xf32>
    %320 = arith.addf %319, %318 : vector<2x128xf32>
    %321 = arith.divf %319, %320 : vector<2x128xf32>
    %322 = vector.extract_strided_slice %274 {offsets = [0, 128], sizes = [2, 128], strides = [1, 1]} : vector<2x384xf32> to vector<2x128xf32>
    %323 = vector.extract_strided_slice %280 {offsets = [0, 128], sizes = [2, 128], strides = [1, 1]} : vector<2x384xf32> to vector<2x128xf32>
    %324 = arith.addf %322, %323 : vector<2x128xf32>
    %325 = arith.negf %324 : vector<2x128xf32>
    %326 = math.exp %325 : vector<2x128xf32>
    %cst_66 = arith.constant 1.000000e+00 : f32
    %327 = vector.broadcast %cst_66 : f32 to vector<2x128xf32>
    %328 = arith.addf %327, %326 : vector<2x128xf32>
    %329 = arith.divf %327, %328 : vector<2x128xf32>
    %330 = vector.extract_strided_slice %274 {offsets = [0, 256], sizes = [2, 128], strides = [1, 1]} : vector<2x384xf32> to vector<2x128xf32>
    %331 = vector.extract_strided_slice %280 {offsets = [0, 256], sizes = [2, 128], strides = [1, 1]} : vector<2x384xf32> to vector<2x128xf32>
    %332 = arith.mulf %321, %331 : vector<2x128xf32>
    %333 = arith.addf %330, %332 : vector<2x128xf32>
    %334 = math.tanh %333 : vector<2x128xf32>
    %cst_67 = arith.constant 1.000000e+00 : f32
    %335 = vector.broadcast %cst_67 : f32 to vector<2x128xf32>
    %336 = arith.subf %335, %329 : vector<2x128xf32>
    %337 = arith.mulf %336, %334 : vector<2x128xf32>
    %338 = arith.mulf %329, %260 : vector<2x128xf32>
    %339 = arith.addf %337, %338 : vector<2x128xf32>
    %340 = vector.broadcast %272 : vector<2x1xf32> to vector<2x128xf32>
    %341 = arith.mulf %340, %339 : vector<2x128xf32>
    %cst_68 = arith.constant 1.000000e+00 : f32
    %342 = vector.broadcast %cst_68 : f32 to vector<2x1xf32>
    %343 = arith.subf %342, %272 : vector<2x1xf32>
    %344 = vector.broadcast %343 : vector<2x1xf32> to vector<2x128xf32>
    %345 = arith.mulf %344, %260 : vector<2x128xf32>
    %346 = arith.addf %341, %345 : vector<2x128xf32>
    %347 = vector.broadcast %271 : vector<2x1xf32> to vector<2x128xf32>
    %348 = arith.mulf %347, %313 : vector<2x128xf32>
    %c0_69 = arith.constant 0 : index
    %c3 = arith.constant 3 : index
    %c0_70 = arith.constant 0 : index
    %349 = vector.load %arg13[%c0_69, %c3, %c0_70] : memref<2x8x256xf32, #tpu.memory_space<vmem>>, vector<2x1x128xf32>
    %350 = vector.shape_cast %349 : vector<2x1x128xf32> to vector<2x128xf32>
    %351 = vector.shape_cast %348 : vector<2x128xf32> to vector<2x1x128xf32>
    tpu.vector_store %arg13[%c0_69, %c3, %c0_70], %351 {strides = array<i32>} : memref<2x8x256xf32, #tpu.memory_space<vmem>>, vector<2x1x128xf32>,
    %352 = vector.broadcast %272 : vector<2x1xf32> to vector<2x128xf32>
    %353 = arith.mulf %352, %346 : vector<2x128xf32>
    %c0_71 = arith.constant 0 : index
    %c4 = arith.constant 4 : index
    %c128_72 = arith.constant 128 : index
    %354 = vector.load %arg13[%c0_71, %c4, %c128_72] : memref<2x8x256xf32, #tpu.memory_space<vmem>>, vector<2x1x128xf32>
    %355 = vector.shape_cast %354 : vector<2x1x128xf32> to vector<2x128xf32>
    %356 = vector.shape_cast %353 : vector<2x128xf32> to vector<2x1x128xf32>
    tpu.vector_store %arg13[%c0_71, %c4, %c128_72], %356 {strides = array<i32>} : memref<2x8x256xf32, #tpu.memory_space<vmem>>, vector<2x1x128xf32>,
    %357 = vector.extract_strided_slice %10 {offsets = [0, 4], sizes = [2, 1], strides = [1, 1]} : vector<2x8xf32> to vector<2x1xf32>
    %358 = vector.extract_strided_slice %10 {offsets = [0, 3], sizes = [2, 1], strides = [1, 1]} : vector<2x8xf32> to vector<2x1xf32>
    %359 = vector.extract_strided_slice %5 {offsets = [8, 0], sizes = [2, 384], strides = [1, 1]} : vector<16x768xf32> to vector<2x384xf32>
    %360 = vector.extract_strided_slice %5 {offsets = [6, 384], sizes = [2, 384], strides = [1, 1]} : vector<16x768xf32> to vector<2x384xf32>
    %cst_73 = arith.constant dense<0.000000e+00> : vector<2x384xf32>
    %361 = tpu.matmul %313, %6, %cst_73 {dimension_numbers = #tpu.dot_dimension_numbers<[1], [0], [0], [1], [0, 0, 1, 1], [], []>} : vector<2x128xf32>, vector<128x384xf32>, vector<2x384xf32> -> vector<2x384xf32>
    %362 = vector.broadcast %7 : vector<1x384xf32> to vector<2x384xf32>
    %363 = arith.addf %361, %362 : vector<2x384xf32>
    %cst_74 = arith.constant dense<0.000000e+00> : vector<2x384xf32>
    %364 = tpu.matmul %346, %8, %cst_74 {dimension_numbers = #tpu.dot_dimension_numbers<[1], [0], [0], [1], [0, 0, 1, 1], [], []>} : vector<2x128xf32>, vector<128x384xf32>, vector<2x384xf32> -> vector<2x384xf32>
    %365 = vector.broadcast %9 : vector<1x384xf32> to vector<2x384xf32>
    %366 = arith.addf %364, %365 : vector<2x384xf32>
    %367 = vector.extract_strided_slice %359 {offsets = [0, 0], sizes = [2, 128], strides = [1, 1]} : vector<2x384xf32> to vector<2x128xf32>
    %368 = vector.extract_strided_slice %363 {offsets = [0, 0], sizes = [2, 128], strides = [1, 1]} : vector<2x384xf32> to vector<2x128xf32>
    %369 = arith.addf %367, %368 : vector<2x128xf32>
    %370 = arith.negf %369 : vector<2x128xf32>
    %371 = math.exp %370 : vector<2x128xf32>
    %cst_75 = arith.constant 1.000000e+00 : f32
    %372 = vector.broadcast %cst_75 : f32 to vector<2x128xf32>
    %373 = arith.addf %372, %371 : vector<2x128xf32>
    %374 = arith.divf %372, %373 : vector<2x128xf32>
    %375 = vector.extract_strided_slice %359 {offsets = [0, 128], sizes = [2, 128], strides = [1, 1]} : vector<2x384xf32> to vector<2x128xf32>
    %376 = vector.extract_strided_slice %363 {offsets = [0, 128], sizes = [2, 128], strides = [1, 1]} : vector<2x384xf32> to vector<2x128xf32>
    %377 = arith.addf %375, %376 : vector<2x128xf32>
    %378 = arith.negf %377 : vector<2x128xf32>
    %379 = math.exp %378 : vector<2x128xf32>
    %cst_76 = arith.constant 1.000000e+00 : f32
    %380 = vector.broadcast %cst_76 : f32 to vector<2x128xf32>
    %381 = arith.addf %380, %379 : vector<2x128xf32>
    %382 = arith.divf %380, %381 : vector<2x128xf32>
    %383 = vector.extract_strided_slice %359 {offsets = [0, 256], sizes = [2, 128], strides = [1, 1]} : vector<2x384xf32> to vector<2x128xf32>
    %384 = vector.extract_strided_slice %363 {offsets = [0, 256], sizes = [2, 128], strides = [1, 1]} : vector<2x384xf32> to vector<2x128xf32>
    %385 = arith.mulf %374, %384 : vector<2x128xf32>
    %386 = arith.addf %383, %385 : vector<2x128xf32>
    %387 = math.tanh %386 : vector<2x128xf32>
    %cst_77 = arith.constant 1.000000e+00 : f32
    %388 = vector.broadcast %cst_77 : f32 to vector<2x128xf32>
    %389 = arith.subf %388, %382 : vector<2x128xf32>
    %390 = arith.mulf %389, %387 : vector<2x128xf32>
    %391 = arith.mulf %382, %313 : vector<2x128xf32>
    %392 = arith.addf %390, %391 : vector<2x128xf32>
    %393 = vector.broadcast %357 : vector<2x1xf32> to vector<2x128xf32>
    %394 = arith.mulf %393, %392 : vector<2x128xf32>
    %cst_78 = arith.constant 1.000000e+00 : f32
    %395 = vector.broadcast %cst_78 : f32 to vector<2x1xf32>
    %396 = arith.subf %395, %357 : vector<2x1xf32>
    %397 = vector.broadcast %396 : vector<2x1xf32> to vector<2x128xf32>
    %398 = arith.mulf %397, %313 : vector<2x128xf32>
    %399 = arith.addf %394, %398 : vector<2x128xf32>
    %400 = vector.extract_strided_slice %360 {offsets = [0, 0], sizes = [2, 128], strides = [1, 1]} : vector<2x384xf32> to vector<2x128xf32>
    %401 = vector.extract_strided_slice %366 {offsets = [0, 0], sizes = [2, 128], strides = [1, 1]} : vector<2x384xf32> to vector<2x128xf32>
    %402 = arith.addf %400, %401 : vector<2x128xf32>
    %403 = arith.negf %402 : vector<2x128xf32>
    %404 = math.exp %403 : vector<2x128xf32>
    %cst_79 = arith.constant 1.000000e+00 : f32
    %405 = vector.broadcast %cst_79 : f32 to vector<2x128xf32>
    %406 = arith.addf %405, %404 : vector<2x128xf32>
    %407 = arith.divf %405, %406 : vector<2x128xf32>
    %408 = vector.extract_strided_slice %360 {offsets = [0, 128], sizes = [2, 128], strides = [1, 1]} : vector<2x384xf32> to vector<2x128xf32>
    %409 = vector.extract_strided_slice %366 {offsets = [0, 128], sizes = [2, 128], strides = [1, 1]} : vector<2x384xf32> to vector<2x128xf32>
    %410 = arith.addf %408, %409 : vector<2x128xf32>
    %411 = arith.negf %410 : vector<2x128xf32>
    %412 = math.exp %411 : vector<2x128xf32>
    %cst_80 = arith.constant 1.000000e+00 : f32
    %413 = vector.broadcast %cst_80 : f32 to vector<2x128xf32>
    %414 = arith.addf %413, %412 : vector<2x128xf32>
    %415 = arith.divf %413, %414 : vector<2x128xf32>
    %416 = vector.extract_strided_slice %360 {offsets = [0, 256], sizes = [2, 128], strides = [1, 1]} : vector<2x384xf32> to vector<2x128xf32>
    %417 = vector.extract_strided_slice %366 {offsets = [0, 256], sizes = [2, 128], strides = [1, 1]} : vector<2x384xf32> to vector<2x128xf32>
    %418 = arith.mulf %407, %417 : vector<2x128xf32>
    %419 = arith.addf %416, %418 : vector<2x128xf32>
    %420 = math.tanh %419 : vector<2x128xf32>
    %cst_81 = arith.constant 1.000000e+00 : f32
    %421 = vector.broadcast %cst_81 : f32 to vector<2x128xf32>
    %422 = arith.subf %421, %415 : vector<2x128xf32>
    %423 = arith.mulf %422, %420 : vector<2x128xf32>
    %424 = arith.mulf %415, %346 : vector<2x128xf32>
    %425 = arith.addf %423, %424 : vector<2x128xf32>
    %426 = vector.broadcast %358 : vector<2x1xf32> to vector<2x128xf32>
    %427 = arith.mulf %426, %425 : vector<2x128xf32>
    %cst_82 = arith.constant 1.000000e+00 : f32
    %428 = vector.broadcast %cst_82 : f32 to vector<2x1xf32>
    %429 = arith.subf %428, %358 : vector<2x1xf32>
    %430 = vector.broadcast %429 : vector<2x1xf32> to vector<2x128xf32>
    %431 = arith.mulf %430, %346 : vector<2x128xf32>
    %432 = arith.addf %427, %431 : vector<2x128xf32>
    %433 = vector.broadcast %357 : vector<2x1xf32> to vector<2x128xf32>
    %434 = arith.mulf %433, %399 : vector<2x128xf32>
    %c0_83 = arith.constant 0 : index
    %c4_84 = arith.constant 4 : index
    %c0_85 = arith.constant 0 : index
    %435 = vector.load %arg13[%c0_83, %c4_84, %c0_85] : memref<2x8x256xf32, #tpu.memory_space<vmem>>, vector<2x1x128xf32>
    %436 = vector.shape_cast %435 : vector<2x1x128xf32> to vector<2x128xf32>
    %437 = vector.shape_cast %434 : vector<2x128xf32> to vector<2x1x128xf32>
    tpu.vector_store %arg13[%c0_83, %c4_84, %c0_85], %437 {strides = array<i32>} : memref<2x8x256xf32, #tpu.memory_space<vmem>>, vector<2x1x128xf32>,
    %438 = vector.broadcast %358 : vector<2x1xf32> to vector<2x128xf32>
    %439 = arith.mulf %438, %432 : vector<2x128xf32>
    %c0_86 = arith.constant 0 : index
    %c3_87 = arith.constant 3 : index
    %c128_88 = arith.constant 128 : index
    %440 = vector.load %arg13[%c0_86, %c3_87, %c128_88] : memref<2x8x256xf32, #tpu.memory_space<vmem>>, vector<2x1x128xf32>
    %441 = vector.shape_cast %440 : vector<2x1x128xf32> to vector<2x128xf32>
    %442 = vector.shape_cast %439 : vector<2x128xf32> to vector<2x1x128xf32>
    tpu.vector_store %arg13[%c0_86, %c3_87, %c128_88], %442 {strides = array<i32>} : memref<2x8x256xf32, #tpu.memory_space<vmem>>, vector<2x1x128xf32>,
    %443 = vector.extract_strided_slice %10 {offsets = [0, 5], sizes = [2, 1], strides = [1, 1]} : vector<2x8xf32> to vector<2x1xf32>
    %444 = vector.extract_strided_slice %10 {offsets = [0, 2], sizes = [2, 1], strides = [1, 1]} : vector<2x8xf32> to vector<2x1xf32>
    %445 = vector.extract_strided_slice %5 {offsets = [10, 0], sizes = [2, 384], strides = [1, 1]} : vector<16x768xf32> to vector<2x384xf32>
    %446 = vector.extract_strided_slice %5 {offsets = [4, 384], sizes = [2, 384], strides = [1, 1]} : vector<16x768xf32> to vector<2x384xf32>
    %cst_89 = arith.constant dense<0.000000e+00> : vector<2x384xf32>
    %447 = tpu.matmul %399, %6, %cst_89 {dimension_numbers = #tpu.dot_dimension_numbers<[1], [0], [0], [1], [0, 0, 1, 1], [], []>} : vector<2x128xf32>, vector<128x384xf32>, vector<2x384xf32> -> vector<2x384xf32>
    %448 = vector.broadcast %7 : vector<1x384xf32> to vector<2x384xf32>
    %449 = arith.addf %447, %448 : vector<2x384xf32>
    %cst_90 = arith.constant dense<0.000000e+00> : vector<2x384xf32>
    %450 = tpu.matmul %432, %8, %cst_90 {dimension_numbers = #tpu.dot_dimension_numbers<[1], [0], [0], [1], [0, 0, 1, 1], [], []>} : vector<2x128xf32>, vector<128x384xf32>, vector<2x384xf32> -> vector<2x384xf32>
    %451 = vector.broadcast %9 : vector<1x384xf32> to vector<2x384xf32>
    %452 = arith.addf %450, %451 : vector<2x384xf32>
    %453 = vector.extract_strided_slice %445 {offsets = [0, 0], sizes = [2, 128], strides = [1, 1]} : vector<2x384xf32> to vector<2x128xf32>
    %454 = vector.extract_strided_slice %449 {offsets = [0, 0], sizes = [2, 128], strides = [1, 1]} : vector<2x384xf32> to vector<2x128xf32>
    %455 = arith.addf %453, %454 : vector<2x128xf32>
    %456 = arith.negf %455 : vector<2x128xf32>
    %457 = math.exp %456 : vector<2x128xf32>
    %cst_91 = arith.constant 1.000000e+00 : f32
    %458 = vector.broadcast %cst_91 : f32 to vector<2x128xf32>
    %459 = arith.addf %458, %457 : vector<2x128xf32>
    %460 = arith.divf %458, %459 : vector<2x128xf32>
    %461 = vector.extract_strided_slice %445 {offsets = [0, 128], sizes = [2, 128], strides = [1, 1]} : vector<2x384xf32> to vector<2x128xf32>
    %462 = vector.extract_strided_slice %449 {offsets = [0, 128], sizes = [2, 128], strides = [1, 1]} : vector<2x384xf32> to vector<2x128xf32>
    %463 = arith.addf %461, %462 : vector<2x128xf32>
    %464 = arith.negf %463 : vector<2x128xf32>
    %465 = math.exp %464 : vector<2x128xf32>
    %cst_92 = arith.constant 1.000000e+00 : f32
    %466 = vector.broadcast %cst_92 : f32 to vector<2x128xf32>
    %467 = arith.addf %466, %465 : vector<2x128xf32>
    %468 = arith.divf %466, %467 : vector<2x128xf32>
    %469 = vector.extract_strided_slice %445 {offsets = [0, 256], sizes = [2, 128], strides = [1, 1]} : vector<2x384xf32> to vector<2x128xf32>
    %470 = vector.extract_strided_slice %449 {offsets = [0, 256], sizes = [2, 128], strides = [1, 1]} : vector<2x384xf32> to vector<2x128xf32>
    %471 = arith.mulf %460, %470 : vector<2x128xf32>
    %472 = arith.addf %469, %471 : vector<2x128xf32>
    %473 = math.tanh %472 : vector<2x128xf32>
    %cst_93 = arith.constant 1.000000e+00 : f32
    %474 = vector.broadcast %cst_93 : f32 to vector<2x128xf32>
    %475 = arith.subf %474, %468 : vector<2x128xf32>
    %476 = arith.mulf %475, %473 : vector<2x128xf32>
    %477 = arith.mulf %468, %399 : vector<2x128xf32>
    %478 = arith.addf %476, %477 : vector<2x128xf32>
    %479 = vector.broadcast %443 : vector<2x1xf32> to vector<2x128xf32>
    %480 = arith.mulf %479, %478 : vector<2x128xf32>
    %cst_94 = arith.constant 1.000000e+00 : f32
    %481 = vector.broadcast %cst_94 : f32 to vector<2x1xf32>
    %482 = arith.subf %481, %443 : vector<2x1xf32>
    %483 = vector.broadcast %482 : vector<2x1xf32> to vector<2x128xf32>
    %484 = arith.mulf %483, %399 : vector<2x128xf32>
    %485 = arith.addf %480, %484 : vector<2x128xf32>
    %486 = vector.extract_strided_slice %446 {offsets = [0, 0], sizes = [2, 128], strides = [1, 1]} : vector<2x384xf32> to vector<2x128xf32>
    %487 = vector.extract_strided_slice %452 {offsets = [0, 0], sizes = [2, 128], strides = [1, 1]} : vector<2x384xf32> to vector<2x128xf32>
    %488 = arith.addf %486, %487 : vector<2x128xf32>
    %489 = arith.negf %488 : vector<2x128xf32>
    %490 = math.exp %489 : vector<2x128xf32>
    %cst_95 = arith.constant 1.000000e+00 : f32
    %491 = vector.broadcast %cst_95 : f32 to vector<2x128xf32>
    %492 = arith.addf %491, %490 : vector<2x128xf32>
    %493 = arith.divf %491, %492 : vector<2x128xf32>
    %494 = vector.extract_strided_slice %446 {offsets = [0, 128], sizes = [2, 128], strides = [1, 1]} : vector<2x384xf32> to vector<2x128xf32>
    %495 = vector.extract_strided_slice %452 {offsets = [0, 128], sizes = [2, 128], strides = [1, 1]} : vector<2x384xf32> to vector<2x128xf32>
    %496 = arith.addf %494, %495 : vector<2x128xf32>
    %497 = arith.negf %496 : vector<2x128xf32>
    %498 = math.exp %497 : vector<2x128xf32>
    %cst_96 = arith.constant 1.000000e+00 : f32
    %499 = vector.broadcast %cst_96 : f32 to vector<2x128xf32>
    %500 = arith.addf %499, %498 : vector<2x128xf32>
    %501 = arith.divf %499, %500 : vector<2x128xf32>
    %502 = vector.extract_strided_slice %446 {offsets = [0, 256], sizes = [2, 128], strides = [1, 1]} : vector<2x384xf32> to vector<2x128xf32>
    %503 = vector.extract_strided_slice %452 {offsets = [0, 256], sizes = [2, 128], strides = [1, 1]} : vector<2x384xf32> to vector<2x128xf32>
    %504 = arith.mulf %493, %503 : vector<2x128xf32>
    %505 = arith.addf %502, %504 : vector<2x128xf32>
    %506 = math.tanh %505 : vector<2x128xf32>
    %cst_97 = arith.constant 1.000000e+00 : f32
    %507 = vector.broadcast %cst_97 : f32 to vector<2x128xf32>
    %508 = arith.subf %507, %501 : vector<2x128xf32>
    %509 = arith.mulf %508, %506 : vector<2x128xf32>
    %510 = arith.mulf %501, %432 : vector<2x128xf32>
    %511 = arith.addf %509, %510 : vector<2x128xf32>
    %512 = vector.broadcast %444 : vector<2x1xf32> to vector<2x128xf32>
    %513 = arith.mulf %512, %511 : vector<2x128xf32>
    %cst_98 = arith.constant 1.000000e+00 : f32
    %514 = vector.broadcast %cst_98 : f32 to vector<2x1xf32>
    %515 = arith.subf %514, %444 : vector<2x1xf32>
    %516 = vector.broadcast %515 : vector<2x1xf32> to vector<2x128xf32>
    %517 = arith.mulf %516, %432 : vector<2x128xf32>
    %518 = arith.addf %513, %517 : vector<2x128xf32>
    %519 = vector.broadcast %443 : vector<2x1xf32> to vector<2x128xf32>
    %520 = arith.mulf %519, %485 : vector<2x128xf32>
    %c0_99 = arith.constant 0 : index
    %c5_100 = arith.constant 5 : index
    %c0_101 = arith.constant 0 : index
    %521 = vector.load %arg13[%c0_99, %c5_100, %c0_101] : memref<2x8x256xf32, #tpu.memory_space<vmem>>, vector<2x1x128xf32>
    %522 = vector.shape_cast %521 : vector<2x1x128xf32> to vector<2x128xf32>
    %523 = vector.shape_cast %520 : vector<2x128xf32> to vector<2x1x128xf32>
    tpu.vector_store %arg13[%c0_99, %c5_100, %c0_101], %523 {strides = array<i32>} : memref<2x8x256xf32, #tpu.memory_space<vmem>>, vector<2x1x128xf32>,
    %524 = vector.broadcast %444 : vector<2x1xf32> to vector<2x128xf32>
    %525 = arith.mulf %524, %518 : vector<2x128xf32>
    %c0_102 = arith.constant 0 : index
    %c2_103 = arith.constant 2 : index
    %c128_104 = arith.constant 128 : index
    %526 = vector.load %arg13[%c0_102, %c2_103, %c128_104] : memref<2x8x256xf32, #tpu.memory_space<vmem>>, vector<2x1x128xf32>
    %527 = vector.shape_cast %526 : vector<2x1x128xf32> to vector<2x128xf32>
    %528 = vector.shape_cast %525 : vector<2x128xf32> to vector<2x1x128xf32>
    tpu.vector_store %arg13[%c0_102, %c2_103, %c128_104], %528 {strides = array<i32>} : memref<2x8x256xf32, #tpu.memory_space<vmem>>, vector<2x1x128xf32>,
    %529 = vector.extract_strided_slice %10 {offsets = [0, 6], sizes = [2, 1], strides = [1, 1]} : vector<2x8xf32> to vector<2x1xf32>
    %530 = vector.extract_strided_slice %10 {offsets = [0, 1], sizes = [2, 1], strides = [1, 1]} : vector<2x8xf32> to vector<2x1xf32>
    %531 = vector.extract_strided_slice %5 {offsets = [12, 0], sizes = [2, 384], strides = [1, 1]} : vector<16x768xf32> to vector<2x384xf32>
    %532 = vector.extract_strided_slice %5 {offsets = [2, 384], sizes = [2, 384], strides = [1, 1]} : vector<16x768xf32> to vector<2x384xf32>
    %cst_105 = arith.constant dense<0.000000e+00> : vector<2x384xf32>
    %533 = tpu.matmul %485, %6, %cst_105 {dimension_numbers = #tpu.dot_dimension_numbers<[1], [0], [0], [1], [0, 0, 1, 1], [], []>} : vector<2x128xf32>, vector<128x384xf32>, vector<2x384xf32> -> vector<2x384xf32>
    %534 = vector.broadcast %7 : vector<1x384xf32> to vector<2x384xf32>
    %535 = arith.addf %533, %534 : vector<2x384xf32>
    %cst_106 = arith.constant dense<0.000000e+00> : vector<2x384xf32>
    %536 = tpu.matmul %518, %8, %cst_106 {dimension_numbers = #tpu.dot_dimension_numbers<[1], [0], [0], [1], [0, 0, 1, 1], [], []>} : vector<2x128xf32>, vector<128x384xf32>, vector<2x384xf32> -> vector<2x384xf32>
    %537 = vector.broadcast %9 : vector<1x384xf32> to vector<2x384xf32>
    %538 = arith.addf %536, %537 : vector<2x384xf32>
    %539 = vector.extract_strided_slice %531 {offsets = [0, 0], sizes = [2, 128], strides = [1, 1]} : vector<2x384xf32> to vector<2x128xf32>
    %540 = vector.extract_strided_slice %535 {offsets = [0, 0], sizes = [2, 128], strides = [1, 1]} : vector<2x384xf32> to vector<2x128xf32>
    %541 = arith.addf %539, %540 : vector<2x128xf32>
    %542 = arith.negf %541 : vector<2x128xf32>
    %543 = math.exp %542 : vector<2x128xf32>
    %cst_107 = arith.constant 1.000000e+00 : f32
    %544 = vector.broadcast %cst_107 : f32 to vector<2x128xf32>
    %545 = arith.addf %544, %543 : vector<2x128xf32>
    %546 = arith.divf %544, %545 : vector<2x128xf32>
    %547 = vector.extract_strided_slice %531 {offsets = [0, 128], sizes = [2, 128], strides = [1, 1]} : vector<2x384xf32> to vector<2x128xf32>
    %548 = vector.extract_strided_slice %535 {offsets = [0, 128], sizes = [2, 128], strides = [1, 1]} : vector<2x384xf32> to vector<2x128xf32>
    %549 = arith.addf %547, %548 : vector<2x128xf32>
    %550 = arith.negf %549 : vector<2x128xf32>
    %551 = math.exp %550 : vector<2x128xf32>
    %cst_108 = arith.constant 1.000000e+00 : f32
    %552 = vector.broadcast %cst_108 : f32 to vector<2x128xf32>
    %553 = arith.addf %552, %551 : vector<2x128xf32>
    %554 = arith.divf %552, %553 : vector<2x128xf32>
    %555 = vector.extract_strided_slice %531 {offsets = [0, 256], sizes = [2, 128], strides = [1, 1]} : vector<2x384xf32> to vector<2x128xf32>
    %556 = vector.extract_strided_slice %535 {offsets = [0, 256], sizes = [2, 128], strides = [1, 1]} : vector<2x384xf32> to vector<2x128xf32>
    %557 = arith.mulf %546, %556 : vector<2x128xf32>
    %558 = arith.addf %555, %557 : vector<2x128xf32>
    %559 = math.tanh %558 : vector<2x128xf32>
    %cst_109 = arith.constant 1.000000e+00 : f32
    %560 = vector.broadcast %cst_109 : f32 to vector<2x128xf32>
    %561 = arith.subf %560, %554 : vector<2x128xf32>
    %562 = arith.mulf %561, %559 : vector<2x128xf32>
    %563 = arith.mulf %554, %485 : vector<2x128xf32>
    %564 = arith.addf %562, %563 : vector<2x128xf32>
    %565 = vector.broadcast %529 : vector<2x1xf32> to vector<2x128xf32>
    %566 = arith.mulf %565, %564 : vector<2x128xf32>
    %cst_110 = arith.constant 1.000000e+00 : f32
    %567 = vector.broadcast %cst_110 : f32 to vector<2x1xf32>
    %568 = arith.subf %567, %529 : vector<2x1xf32>
    %569 = vector.broadcast %568 : vector<2x1xf32> to vector<2x128xf32>
    %570 = arith.mulf %569, %485 : vector<2x128xf32>
    %571 = arith.addf %566, %570 : vector<2x128xf32>
    %572 = vector.extract_strided_slice %532 {offsets = [0, 0], sizes = [2, 128], strides = [1, 1]} : vector<2x384xf32> to vector<2x128xf32>
    %573 = vector.extract_strided_slice %538 {offsets = [0, 0], sizes = [2, 128], strides = [1, 1]} : vector<2x384xf32> to vector<2x128xf32>
    %574 = arith.addf %572, %573 : vector<2x128xf32>
    %575 = arith.negf %574 : vector<2x128xf32>
    %576 = math.exp %575 : vector<2x128xf32>
    %cst_111 = arith.constant 1.000000e+00 : f32
    %577 = vector.broadcast %cst_111 : f32 to vector<2x128xf32>
    %578 = arith.addf %577, %576 : vector<2x128xf32>
    %579 = arith.divf %577, %578 : vector<2x128xf32>
    %580 = vector.extract_strided_slice %532 {offsets = [0, 128], sizes = [2, 128], strides = [1, 1]} : vector<2x384xf32> to vector<2x128xf32>
    %581 = vector.extract_strided_slice %538 {offsets = [0, 128], sizes = [2, 128], strides = [1, 1]} : vector<2x384xf32> to vector<2x128xf32>
    %582 = arith.addf %580, %581 : vector<2x128xf32>
    %583 = arith.negf %582 : vector<2x128xf32>
    %584 = math.exp %583 : vector<2x128xf32>
    %cst_112 = arith.constant 1.000000e+00 : f32
    %585 = vector.broadcast %cst_112 : f32 to vector<2x128xf32>
    %586 = arith.addf %585, %584 : vector<2x128xf32>
    %587 = arith.divf %585, %586 : vector<2x128xf32>
    %588 = vector.extract_strided_slice %532 {offsets = [0, 256], sizes = [2, 128], strides = [1, 1]} : vector<2x384xf32> to vector<2x128xf32>
    %589 = vector.extract_strided_slice %538 {offsets = [0, 256], sizes = [2, 128], strides = [1, 1]} : vector<2x384xf32> to vector<2x128xf32>
    %590 = arith.mulf %579, %589 : vector<2x128xf32>
    %591 = arith.addf %588, %590 : vector<2x128xf32>
    %592 = math.tanh %591 : vector<2x128xf32>
    %cst_113 = arith.constant 1.000000e+00 : f32
    %593 = vector.broadcast %cst_113 : f32 to vector<2x128xf32>
    %594 = arith.subf %593, %587 : vector<2x128xf32>
    %595 = arith.mulf %594, %592 : vector<2x128xf32>
    %596 = arith.mulf %587, %518 : vector<2x128xf32>
    %597 = arith.addf %595, %596 : vector<2x128xf32>
    %598 = vector.broadcast %530 : vector<2x1xf32> to vector<2x128xf32>
    %599 = arith.mulf %598, %597 : vector<2x128xf32>
    %cst_114 = arith.constant 1.000000e+00 : f32
    %600 = vector.broadcast %cst_114 : f32 to vector<2x1xf32>
    %601 = arith.subf %600, %530 : vector<2x1xf32>
    %602 = vector.broadcast %601 : vector<2x1xf32> to vector<2x128xf32>
    %603 = arith.mulf %602, %518 : vector<2x128xf32>
    %604 = arith.addf %599, %603 : vector<2x128xf32>
    %605 = vector.broadcast %529 : vector<2x1xf32> to vector<2x128xf32>
    %606 = arith.mulf %605, %571 : vector<2x128xf32>
    %c0_115 = arith.constant 0 : index
    %c6_116 = arith.constant 6 : index
    %c0_117 = arith.constant 0 : index
    %607 = vector.load %arg13[%c0_115, %c6_116, %c0_117] : memref<2x8x256xf32, #tpu.memory_space<vmem>>, vector<2x1x128xf32>
    %608 = vector.shape_cast %607 : vector<2x1x128xf32> to vector<2x128xf32>
    %609 = vector.shape_cast %606 : vector<2x128xf32> to vector<2x1x128xf32>
    tpu.vector_store %arg13[%c0_115, %c6_116, %c0_117], %609 {strides = array<i32>} : memref<2x8x256xf32, #tpu.memory_space<vmem>>, vector<2x1x128xf32>,
    %610 = vector.broadcast %530 : vector<2x1xf32> to vector<2x128xf32>
    %611 = arith.mulf %610, %604 : vector<2x128xf32>
    %c0_118 = arith.constant 0 : index
    %c1_119 = arith.constant 1 : index
    %c128_120 = arith.constant 128 : index
    %612 = vector.load %arg13[%c0_118, %c1_119, %c128_120] : memref<2x8x256xf32, #tpu.memory_space<vmem>>, vector<2x1x128xf32>
    %613 = vector.shape_cast %612 : vector<2x1x128xf32> to vector<2x128xf32>
    %614 = vector.shape_cast %611 : vector<2x128xf32> to vector<2x1x128xf32>
    tpu.vector_store %arg13[%c0_118, %c1_119, %c128_120], %614 {strides = array<i32>} : memref<2x8x256xf32, #tpu.memory_space<vmem>>, vector<2x1x128xf32>,
    %615 = vector.extract_strided_slice %10 {offsets = [0, 7], sizes = [2, 1], strides = [1, 1]} : vector<2x8xf32> to vector<2x1xf32>
    %616 = vector.extract_strided_slice %10 {offsets = [0, 0], sizes = [2, 1], strides = [1, 1]} : vector<2x8xf32> to vector<2x1xf32>
    %617 = vector.extract_strided_slice %5 {offsets = [14, 0], sizes = [2, 384], strides = [1, 1]} : vector<16x768xf32> to vector<2x384xf32>
    %618 = vector.extract_strided_slice %5 {offsets = [0, 384], sizes = [2, 384], strides = [1, 1]} : vector<16x768xf32> to vector<2x384xf32>
    %cst_121 = arith.constant dense<0.000000e+00> : vector<2x384xf32>
    %619 = tpu.matmul %571, %6, %cst_121 {dimension_numbers = #tpu.dot_dimension_numbers<[1], [0], [0], [1], [0, 0, 1, 1], [], []>} : vector<2x128xf32>, vector<128x384xf32>, vector<2x384xf32> -> vector<2x384xf32>
    %620 = vector.broadcast %7 : vector<1x384xf32> to vector<2x384xf32>
    %621 = arith.addf %619, %620 : vector<2x384xf32>
    %cst_122 = arith.constant dense<0.000000e+00> : vector<2x384xf32>
    %622 = tpu.matmul %604, %8, %cst_122 {dimension_numbers = #tpu.dot_dimension_numbers<[1], [0], [0], [1], [0, 0, 1, 1], [], []>} : vector<2x128xf32>, vector<128x384xf32>, vector<2x384xf32> -> vector<2x384xf32>
    %623 = vector.broadcast %9 : vector<1x384xf32> to vector<2x384xf32>
    %624 = arith.addf %622, %623 : vector<2x384xf32>
    %625 = vector.extract_strided_slice %617 {offsets = [0, 0], sizes = [2, 128], strides = [1, 1]} : vector<2x384xf32> to vector<2x128xf32>
    %626 = vector.extract_strided_slice %621 {offsets = [0, 0], sizes = [2, 128], strides = [1, 1]} : vector<2x384xf32> to vector<2x128xf32>
    %627 = arith.addf %625, %626 : vector<2x128xf32>
    %628 = arith.negf %627 : vector<2x128xf32>
    %629 = math.exp %628 : vector<2x128xf32>
    %cst_123 = arith.constant 1.000000e+00 : f32
    %630 = vector.broadcast %cst_123 : f32 to vector<2x128xf32>
    %631 = arith.addf %630, %629 : vector<2x128xf32>
    %632 = arith.divf %630, %631 : vector<2x128xf32>
    %633 = vector.extract_strided_slice %617 {offsets = [0, 128], sizes = [2, 128], strides = [1, 1]} : vector<2x384xf32> to vector<2x128xf32>
    %634 = vector.extract_strided_slice %621 {offsets = [0, 128], sizes = [2, 128], strides = [1, 1]} : vector<2x384xf32> to vector<2x128xf32>
    %635 = arith.addf %633, %634 : vector<2x128xf32>
    %636 = arith.negf %635 : vector<2x128xf32>
    %637 = math.exp %636 : vector<2x128xf32>
    %cst_124 = arith.constant 1.000000e+00 : f32
    %638 = vector.broadcast %cst_124 : f32 to vector<2x128xf32>
    %639 = arith.addf %638, %637 : vector<2x128xf32>
    %640 = arith.divf %638, %639 : vector<2x128xf32>
    %641 = vector.extract_strided_slice %617 {offsets = [0, 256], sizes = [2, 128], strides = [1, 1]} : vector<2x384xf32> to vector<2x128xf32>
    %642 = vector.extract_strided_slice %621 {offsets = [0, 256], sizes = [2, 128], strides = [1, 1]} : vector<2x384xf32> to vector<2x128xf32>
    %643 = arith.mulf %632, %642 : vector<2x128xf32>
    %644 = arith.addf %641, %643 : vector<2x128xf32>
    %645 = math.tanh %644 : vector<2x128xf32>
    %cst_125 = arith.constant 1.000000e+00 : f32
    %646 = vector.broadcast %cst_125 : f32 to vector<2x128xf32>
    %647 = arith.subf %646, %640 : vector<2x128xf32>
    %648 = arith.mulf %647, %645 : vector<2x128xf32>
    %649 = arith.mulf %640, %571 : vector<2x128xf32>
    %650 = arith.addf %648, %649 : vector<2x128xf32>
    %651 = vector.broadcast %615 : vector<2x1xf32> to vector<2x128xf32>
    %652 = arith.mulf %651, %650 : vector<2x128xf32>
    %cst_126 = arith.constant 1.000000e+00 : f32
    %653 = vector.broadcast %cst_126 : f32 to vector<2x1xf32>
    %654 = arith.subf %653, %615 : vector<2x1xf32>
    %655 = vector.broadcast %654 : vector<2x1xf32> to vector<2x128xf32>
    %656 = arith.mulf %655, %571 : vector<2x128xf32>
    %657 = arith.addf %652, %656 : vector<2x128xf32>
    %658 = vector.extract_strided_slice %618 {offsets = [0, 0], sizes = [2, 128], strides = [1, 1]} : vector<2x384xf32> to vector<2x128xf32>
    %659 = vector.extract_strided_slice %624 {offsets = [0, 0], sizes = [2, 128], strides = [1, 1]} : vector<2x384xf32> to vector<2x128xf32>
    %660 = arith.addf %658, %659 : vector<2x128xf32>
    %661 = arith.negf %660 : vector<2x128xf32>
    %662 = math.exp %661 : vector<2x128xf32>
    %cst_127 = arith.constant 1.000000e+00 : f32
    %663 = vector.broadcast %cst_127 : f32 to vector<2x128xf32>
    %664 = arith.addf %663, %662 : vector<2x128xf32>
    %665 = arith.divf %663, %664 : vector<2x128xf32>
    %666 = vector.extract_strided_slice %618 {offsets = [0, 128], sizes = [2, 128], strides = [1, 1]} : vector<2x384xf32> to vector<2x128xf32>
    %667 = vector.extract_strided_slice %624 {offsets = [0, 128], sizes = [2, 128], strides = [1, 1]} : vector<2x384xf32> to vector<2x128xf32>
    %668 = arith.addf %666, %667 : vector<2x128xf32>
    %669 = arith.negf %668 : vector<2x128xf32>
    %670 = math.exp %669 : vector<2x128xf32>
    %cst_128 = arith.constant 1.000000e+00 : f32
    %671 = vector.broadcast %cst_128 : f32 to vector<2x128xf32>
    %672 = arith.addf %671, %670 : vector<2x128xf32>
    %673 = arith.divf %671, %672 : vector<2x128xf32>
    %674 = vector.extract_strided_slice %618 {offsets = [0, 256], sizes = [2, 128], strides = [1, 1]} : vector<2x384xf32> to vector<2x128xf32>
    %675 = vector.extract_strided_slice %624 {offsets = [0, 256], sizes = [2, 128], strides = [1, 1]} : vector<2x384xf32> to vector<2x128xf32>
    %676 = arith.mulf %665, %675 : vector<2x128xf32>
    %677 = arith.addf %674, %676 : vector<2x128xf32>
    %678 = math.tanh %677 : vector<2x128xf32>
    %cst_129 = arith.constant 1.000000e+00 : f32
    %679 = vector.broadcast %cst_129 : f32 to vector<2x128xf32>
    %680 = arith.subf %679, %673 : vector<2x128xf32>
    %681 = arith.mulf %680, %678 : vector<2x128xf32>
    %682 = arith.mulf %673, %604 : vector<2x128xf32>
    %683 = arith.addf %681, %682 : vector<2x128xf32>
    %684 = vector.broadcast %616 : vector<2x1xf32> to vector<2x128xf32>
    %685 = arith.mulf %684, %683 : vector<2x128xf32>
    %cst_130 = arith.constant 1.000000e+00 : f32
    %686 = vector.broadcast %cst_130 : f32 to vector<2x1xf32>
    %687 = arith.subf %686, %616 : vector<2x1xf32>
    %688 = vector.broadcast %687 : vector<2x1xf32> to vector<2x128xf32>
    %689 = arith.mulf %688, %604 : vector<2x128xf32>
    %690 = arith.addf %685, %689 : vector<2x128xf32>
    %691 = vector.broadcast %615 : vector<2x1xf32> to vector<2x128xf32>
    %692 = arith.mulf %691, %657 : vector<2x128xf32>
    %c0_131 = arith.constant 0 : index
    %c7_132 = arith.constant 7 : index
    %c0_133 = arith.constant 0 : index
    %693 = vector.load %arg13[%c0_131, %c7_132, %c0_133] : memref<2x8x256xf32, #tpu.memory_space<vmem>>, vector<2x1x128xf32>
    %694 = vector.shape_cast %693 : vector<2x1x128xf32> to vector<2x128xf32>
    %695 = vector.shape_cast %692 : vector<2x128xf32> to vector<2x1x128xf32>
    tpu.vector_store %arg13[%c0_131, %c7_132, %c0_133], %695 {strides = array<i32>} : memref<2x8x256xf32, #tpu.memory_space<vmem>>, vector<2x1x128xf32>,
    %696 = vector.broadcast %616 : vector<2x1xf32> to vector<2x128xf32>
    %697 = arith.mulf %696, %690 : vector<2x128xf32>
    %c0_134 = arith.constant 0 : index
    %c0_135 = arith.constant 0 : index
    %c128_136 = arith.constant 128 : index
    %698 = vector.load %arg13[%c0_134, %c0_135, %c128_136] : memref<2x8x256xf32, #tpu.memory_space<vmem>>, vector<2x1x128xf32>
    %699 = vector.shape_cast %698 : vector<2x1x128xf32> to vector<2x128xf32>
    %700 = vector.shape_cast %697 : vector<2x128xf32> to vector<2x1x128xf32>
    tpu.vector_store %arg13[%c0_134, %c0_135, %c128_136], %700 {strides = array<i32>} : memref<2x8x256xf32, #tpu.memory_space<vmem>>, vector<2x1x128xf32>,
    %c0_137 = arith.constant 0 : index
    %c0_138 = arith.constant 0 : index
    %701 = vector.load %arg10[%c0_137, %c0_138] : memref<128x128xf32, #tpu.memory_space<vmem>>, vector<128x128xf32>
    %cst_139 = arith.constant dense<0.000000e+00> : vector<2x128xf32>
    %702 = tpu.matmul %657, %701, %cst_139 {dimension_numbers = #tpu.dot_dimension_numbers<[1], [0], [0], [1], [0, 0, 1, 1], [], []>} : vector<2x128xf32>, vector<128x128xf32>, vector<2x128xf32> -> vector<2x128xf32>
    %c0_140 = arith.constant 0 : index
    %c0_141 = arith.constant 0 : index
    %703 = vector.load %arg11[%c0_140, %c0_141] : memref<128x128xf32, #tpu.memory_space<vmem>>, vector<128x128xf32>
    %cst_142 = arith.constant dense<0.000000e+00> : vector<2x128xf32>
    %704 = tpu.matmul %690, %703, %cst_142 {dimension_numbers = #tpu.dot_dimension_numbers<[1], [0], [0], [1], [0, 0, 1, 1], [], []>} : vector<2x128xf32>, vector<128x128xf32>, vector<2x128xf32> -> vector<2x128xf32>
    %705 = arith.addf %702, %704 : vector<2x128xf32>
    %c0_143 = arith.constant 0 : index
    %c0_144 = arith.constant 0 : index
    %706 = vector.load %arg12[%c0_143, %c0_144] : memref<1x128xf32, #tpu.memory_space<vmem>>, vector<1x128xf32>
    %707 = vector.broadcast %706 : vector<1x128xf32> to vector<2x128xf32>
    %708 = arith.addf %705, %707 : vector<2x128xf32>
    %709 = math.tanh %708 : vector<2x128xf32>
    %c0_145 = arith.constant 0 : index
    %c0_146 = arith.constant 0 : index
    %710 = vector.load %arg15[%c0_145, %c0_146] : memref<2x128xf32, #tpu.memory_space<vmem>>, vector<2x128xf32>
    tpu.vector_store %arg15[%c0_145, %c0_146], %709 {strides = array<i32>} : memref<2x128xf32, #tpu.memory_space<vmem>>, vector<2x128xf32>,
    %c0_147 = arith.constant 0 : index
    %c0_148 = arith.constant 0 : index
    %c0_149 = arith.constant 0 : index
    %711 = vector.load %arg13[%c0_147, %c0_148, %c0_149] : memref<2x8x256xf32, #tpu.memory_space<vmem>>, vector<2x8x256xf32>
    %712 = vector.shape_cast %711 : vector<2x8x256xf32> to vector<16x256xf32>
    %c0_150 = arith.constant 0 : index
    %c0_151 = arith.constant 0 : index
    %713 = vector.load %arg8[%c0_150, %c0_151] : memref<256x128xf32, #tpu.memory_space<vmem>>, vector<256x128xf32>
    %cst_152 = arith.constant dense<0.000000e+00> : vector<16x128xf32>
    %714 = tpu.matmul %712, %713, %cst_152 {dimension_numbers = #tpu.dot_dimension_numbers<[1], [0], [0], [1], [0, 0, 1, 1], [], []>} : vector<16x256xf32>, vector<256x128xf32>, vector<16x128xf32> -> vector<16x128xf32>
    %c0_153 = arith.constant 0 : index
    %c0_154 = arith.constant 0 : index
    %715 = vector.load %arg9[%c0_153, %c0_154] : memref<1x128xf32, #tpu.memory_space<vmem>>, vector<1x128xf32>
    %716 = vector.broadcast %715 : vector<1x128xf32> to vector<16x128xf32>
    %717 = arith.addf %714, %716 : vector<16x128xf32>
    %718 = vector.shape_cast %717 : vector<16x128xf32> to vector<2x8x128xf32>
    %c0_155 = arith.constant 0 : index
    %c0_156 = arith.constant 0 : index
    %c0_157 = arith.constant 0 : index
    %719 = vector.load %arg14[%c0_155, %c0_156, %c0_157] : memref<2x8x128xf32, #tpu.memory_space<vmem>>, vector<2x8x128xf32>
    tpu.vector_store %arg14[%c0_155, %c0_156, %c0_157], %718 {strides = array<i32>} : memref<2x8x128xf32, #tpu.memory_space<vmem>>, vector<2x8x128xf32>,
    return
  }
}

</mosaic_0001>

<llo_original>
// kernel: tpu_custom_call.1
$region0: #{tpu_custom_call.1}
  #allocation0 [shape = 'u32[]', space=smem, size = 0x4, offset = 0x4, fixed_abs, tag = 'smem constant byte address 0x4 - core index']
  #allocation1 [shape = 'u32[144,128]{1,0:T(1,128)}', space=vmem, size = 0x12000, scoped, tag = 'internal scratch']
  %s0 = inlined_call_operand.hbm [shape: f32[16,16], index: 0, kind: input, shape index: {}]
  %s1 = inlined_call_operand.vmem [shape: f32[2,8], index: 1, kind: input, shape index: {}]
  %s2 = inlined_call_operand.hbm [shape: f32[16,768], index: 2, kind: input, shape index: {}]
  %s3 = inlined_call_operand.vmem [shape: f32[1,768], index: 3, kind: input, shape index: {}]
  %s4 = inlined_call_operand.hbm [shape: f32[128,384], index: 4, kind: input, shape index: {}]
  %s5 = inlined_call_operand.vmem [shape: f32[1,384], index: 5, kind: input, shape index: {}]
  %s6 = inlined_call_operand.hbm [shape: f32[128,384], index: 6, kind: input, shape index: {}]
  %s7 = inlined_call_operand.vmem [shape: f32[1,384], index: 7, kind: input, shape index: {}]
  %s8 = inlined_call_operand.hbm [shape: f32[256,128], index: 8, kind: input, shape index: {}]
  %s9 = inlined_call_operand.vmem [shape: f32[1,128], index: 9, kind: input, shape index: {}]
  %s10 = inlined_call_operand.hbm [shape: f32[128,128], index: 10, kind: input, shape index: {}]
  %s11 = inlined_call_operand.hbm [shape: f32[128,128], index: 11, kind: input, shape index: {}]
  %s12 = inlined_call_operand.vmem [shape: f32[1,128], index: 12, kind: input, shape index: {}]
  %s13 = inlined_call_operand.hbm [shape: f32[2,8,256], index: 13, kind: output, shape index: {0}]
  %s14 = inlined_call_operand.hbm [shape: f32[2,8,128], index: 14, kind: output, shape index: {1}]
  %s15 = inlined_call_operand.hbm [shape: f32[2,128], index: 15, kind: output, shape index: {2}]
  %16 = xla_tuple %s13, %s14, %s15
  %s17 = sld [smem:[#allocation0]]
  $region106: #{tpu_custom_call.1} parent=0
    _
  %s19 = ssub.s32 1, %s17
  %s20 = scalar_select 0, %s19, %s17
  $region1: #{tpu_custom_call.1} parent=0
    #allocation2 [shape = 'u8[8192]{0}', space=vmem, size = 0x2000, scoped, tag = 'input window, operand 0, single buffered']
    #allocation3 [shape = 's32[1]{0}', space=sflag, size = 0x4, scoped, tag = 'scoped memory for tpu_custom_call.1']
    #allocation4 [shape = 's32[1]{0}', space=sflag, size = 0x4, scoped, tag = 'scoped memory for tpu_custom_call.1']
    #allocation5 [shape = 'u8[49152]{0}', space=vmem, size = 0xc000, scoped, tag = 'input window, operand 2, single buffered']
    #allocation6 [shape = 's32[1]{0}', space=sflag, size = 0x4, scoped, tag = 'scoped memory for tpu_custom_call.1']
    #allocation7 [shape = 'u8[196608]{0}', space=vmem, size = 0x30000, scoped, tag = 'input window, operand 4, single buffered']
    #allocation8 [shape = 'u8[196608]{0}', space=vmem, size = 0x30000, scoped, tag = 'input window, operand 6, single buffered']
    #allocation9 [shape = 's32[1]{0}', space=sflag, size = 0x4, scoped, tag = 'scoped memory for tpu_custom_call.1']
    #allocation10 [shape = 'u8[131072]{0}', space=vmem, size = 0x20000, scoped, tag = 'input window, operand 8, single buffered']
    #allocation11 [shape = 'u8[65536]{0}', space=vmem, size = 0x10000, scoped, tag = 'input window, operand 10, single buffered']
    #allocation12 [shape = 's32[1]{0}', space=sflag, size = 0x4, scoped, tag = 'scoped memory for tpu_custom_call.1']
    #allocation13 [shape = 'u8[65536]{0}', space=vmem, size = 0x10000, scoped, tag = 'input window, operand 11, single buffered']
    #allocation14 [shape = 'u8[16384]{0}', space=vmem, size = 0x4000, scoped, tag = 'output window, operand 0, single buffered']
    #allocation15 [shape = 'u8[8192]{0}', space=vmem, size = 0x2000, scoped, tag = 'output window, operand 1, single buffered']
    #allocation16 [shape = 's32[1]{0}', space=sflag, size = 0x4, scoped, tag = 'scoped memory for tpu_custom_call.1']
    #allocation17 [shape = 'u8[1024]{0}', space=vmem, size = 0x400, scoped, tag = 'output window, operand 2, single buffered']
    %21 = vsyncpa [#allocation3], 0
    %22 = vsyncpa [#allocation6], 0
    %23 = vsyncpa [#allocation9], 0
    %24 = vsyncpa [#allocation12], 0
    %25 = vsyncpa [#allocation4], 0
    %26 = vsyncpa [#allocation16], 0
    // Predicated region
    $region2: #{tpu_custom_call.1} parent=1 // pred_check
      _
    $region3: #{tpu_custom_call.1} parent=1 // pred_check_branch
      %28 = sbr.rel (0) target = $region5
    $region4: #{tpu_custom_call.1} parent=1 // pred_region
      %s30 = ssub.s32 256, 256
      %31 = vsyncadd [#allocation3], %s30
      %s32 = sshll.u32 [#allocation2], 4
      %s33 = int_to_ptr.vmem [resolvable:$true] %s32
      %38 = dma.hbm_to_vmem [thread:$0]  %s0, 256, %s33, [#allocation3], 128, 128, 8
    $region5: #{tpu_custom_call.1} parent=1 // pred_fallthru
      _
    // Predicated region
    $region6: #{tpu_custom_call.1} parent=1 // pred_check
      _
    $region7: #{tpu_custom_call.1} parent=1 // pred_check_branch
      %40 = sbr.rel (0) target = $region9
    $region8: #{tpu_custom_call.1} parent=1 // pred_region
      _
    $region9: #{tpu_custom_call.1} parent=1 // pred_fallthru
      _
    // Predicated region
    $region10: #{tpu_custom_call.1} parent=1 // pred_check
      _
    $region11: #{tpu_custom_call.1} parent=1 // pred_check_branch
      %42 = sbr.rel (0) target = $region13
    $region12: #{tpu_custom_call.1} parent=1 // pred_region
      %s44 = ssub.s32 1536, 1536
      %45 = vsyncadd [#allocation6], %s44
      %s46 = sshll.u32 [#allocation5], 4
      %s47 = int_to_ptr.vmem [resolvable:$true] %s46
      %52 = dma.hbm_to_vmem [thread:$0]  %s2, 1536, %s47, [#allocation6], 768, 768, 48
    $region13: #{tpu_custom_call.1} parent=1 // pred_fallthru
      _
    // Predicated region
    $region14: #{tpu_custom_call.1} parent=1 // pred_check
      _
    $region15: #{tpu_custom_call.1} parent=1 // pred_check_branch
      %54 = sbr.rel (0) target = $region17
    $region16: #{tpu_custom_call.1} parent=1 // pred_region
      _
    $region17: #{tpu_custom_call.1} parent=1 // pred_fallthru
      _
    // Predicated region
    $region18: #{tpu_custom_call.1} parent=1 // pred_check
      _
    $region19: #{tpu_custom_call.1} parent=1 // pred_check_branch
      %56 = sbr.rel (0) target = $region21
    $region20: #{tpu_custom_call.1} parent=1 // pred_region
      %s58 = ssub.s32 6144, 6144
      %59 = vsyncadd [#allocation6], %s58
      %s60 = sshll.u32 [#allocation7], 4
      %s61 = int_to_ptr.vmem [resolvable:$true] %s60
      %66 = dma.hbm_to_vmem [thread:$0]  %s4, 6144, %s61, [#allocation6], 384, 384, 24
    $region21: #{tpu_custom_call.1} parent=1 // pred_fallthru
      _
    // Predicated region
    $region22: #{tpu_custom_call.1} parent=1 // pred_check
      _
    $region23: #{tpu_custom_call.1} parent=1 // pred_check_branch
      %68 = sbr.rel (0) target = $region25
    $region24: #{tpu_custom_call.1} parent=1 // pred_region
      _
    $region25: #{tpu_custom_call.1} parent=1 // pred_fallthru
      _
    // Predicated region
    $region26: #{tpu_custom_call.1} parent=1 // pred_check
      _
    $region27: #{tpu_custom_call.1} parent=1 // pred_check_branch
      %70 = sbr.rel (0) target = $region29
    $region28: #{tpu_custom_call.1} parent=1 // pred_region
      %s72 = ssub.s32 6144, 6144
      %73 = vsyncadd [#allocation9], %s72
      %s74 = sshll.u32 [#allocation8], 4
      %s75 = int_to_ptr.vmem [resolvable:$true] %s74
      %80 = dma.hbm_to_vmem [thread:$0]  %s6, 6144, %s75, [#allocation9], 384, 384, 24
    $region29: #{tpu_custom_call.1} parent=1 // pred_fallthru
      _
    // Predicated region
    $region30: #{tpu_custom_call.1} parent=1 // pred_check
      _
    $region31: #{tpu_custom_call.1} parent=1 // pred_check_branch
      %82 = sbr.rel (0) target = $region33
    $region32: #{tpu_custom_call.1} parent=1 // pred_region
      _
    $region33: #{tpu_custom_call.1} parent=1 // pred_fallthru
      _
    // Predicated region
    $region34: #{tpu_custom_call.1} parent=1 // pred_check
      _
    $region35: #{tpu_custom_call.1} parent=1 // pred_check_branch
      %84 = sbr.rel (0) target = $region37
    $region36: #{tpu_custom_call.1} parent=1 // pred_region
      %s86 = ssub.s32 4096, 4096
      %87 = vsyncadd [#allocation9], %s86
      %s88 = sshll.u32 [#allocation10], 4
      %s89 = int_to_ptr.vmem [resolvable:$true] %s88
      %94 = dma.hbm_to_vmem [thread:$0]  %s8, 4096, %s89, [#allocation9], 128, 128, 8
    $region37: #{tpu_custom_call.1} parent=1 // pred_fallthru
      _
    // Predicated region
    $region38: #{tpu_custom_call.1} parent=1 // pred_check
      _
    $region39: #{tpu_custom_call.1} parent=1 // pred_check_branch
      %96 = sbr.rel (0) target = $region41
    $region40: #{tpu_custom_call.1} parent=1 // pred_region
      _
    $region41: #{tpu_custom_call.1} parent=1 // pred_fallthru
      _
    // Predicated region
    $region42: #{tpu_custom_call.1} parent=1 // pred_check
      _
    $region43: #{tpu_custom_call.1} parent=1 // pred_check_branch
      %98 = sbr.rel (0) target = $region45
    $region44: #{tpu_custom_call.1} parent=1 // pred_region
      %s100 = ssub.s32 2048, 2048
      %101 = vsyncadd [#allocation12], %s100
      %s102 = sshll.u32 [#allocation11], 4
      %s103 = int_to_ptr.vmem [resolvable:$true] %s102
      %108 = dma.hbm_to_vmem [thread:$0]  %s10, 2048, %s103, [#allocation12], 128, 128, 8
    $region45: #{tpu_custom_call.1} parent=1 // pred_fallthru
      _
    // Predicated region
    $region46: #{tpu_custom_call.1} parent=1 // pred_check
      _
    $region47: #{tpu_custom_call.1} parent=1 // pred_check_branch
      %110 = sbr.rel (0) target = $region49
    $region48: #{tpu_custom_call.1} parent=1 // pred_region
      %s112 = ssub.s32 2048, 2048
      %113 = vsyncadd [#allocation12], %s112
      %s114 = sshll.u32 [#allocation13], 4
      %s115 = int_to_ptr.vmem [resolvable:$true] %s114
      %120 = dma.hbm_to_vmem [thread:$0]  %s11, 2048, %s115, [#allocation12], 128, 128, 8
    $region49: #{tpu_custom_call.1} parent=1 // pred_fallthru
      _
    // Predicated region
    $region50: #{tpu_custom_call.1} parent=1 // pred_check
      _
    $region51: #{tpu_custom_call.1} parent=1 // pred_check_branch
      %122 = sbr.rel (0) target = $region53
    $region52: #{tpu_custom_call.1} parent=1 // pred_region
      _
    $region53: #{tpu_custom_call.1} parent=1 // pred_fallthru
      _
    // Predicated region
    $region54: #{tpu_custom_call.1} parent=1 // pred_check
      _
    $region55: #{tpu_custom_call.1} parent=1 // pred_check_branch
      %124 = sbr.rel (0) target = $region57
    $region56: #{tpu_custom_call.1} parent=1 // pred_region
      %125 = dma.done [#allocation3], 256
    $region57: #{tpu_custom_call.1} parent=1 // pred_fallthru
      _
    // Predicated region
    $region58: #{tpu_custom_call.1} parent=1 // pred_check
      _
    $region59: #{tpu_custom_call.1} parent=1 // pred_check_branch
      %127 = sbr.rel (0) target = $region61
    $region60: #{tpu_custom_call.1} parent=1 // pred_region
      %128 = dma.done [#allocation6], 1536
    $region61: #{tpu_custom_call.1} parent=1 // pred_fallthru
      _
    // Predicated region
    $region62: #{tpu_custom_call.1} parent=1 // pred_check
      _
    $region63: #{tpu_custom_call.1} parent=1 // pred_check_branch
      %130 = sbr.rel (0) target = $region65
    $region64: #{tpu_custom_call.1} parent=1 // pred_region
      %131 = dma.done [#allocation6], 6144
    $region65: #{tpu_custom_call.1} parent=1 // pred_fallthru
      _
    // Predicated region
    $region66: #{tpu_custom_call.1} parent=1 // pred_check
      _
    $region67: #{tpu_custom_call.1} parent=1 // pred_check_branch
      %133 = sbr.rel (0) target = $region69
    $region68: #{tpu_custom_call.1} parent=1 // pred_region
      %134 = dma.done [#allocation9], 6144
    $region69: #{tpu_custom_call.1} parent=1 // pred_fallthru
      _
    // Predicated region
    $region70: #{tpu_custom_call.1} parent=1 // pred_check
      _
    $region71: #{tpu_custom_call.1} parent=1 // pred_check_branch
      %136 = sbr.rel (0) target = $region73
    $region72: #{tpu_custom_call.1} parent=1 // pred_region
      %137 = dma.done [#allocation9], 4096
    $region73: #{tpu_custom_call.1} parent=1 // pred_fallthru
      _
    // Predicated region
    $region74: #{tpu_custom_call.1} parent=1 // pred_check
      _
    $region75: #{tpu_custom_call.1} parent=1 // pred_check_branch
      %139 = sbr.rel (0) target = $region77
    $region76: #{tpu_custom_call.1} parent=1 // pred_region
      %140 = dma.done [#allocation12], 2048
    $region77: #{tpu_custom_call.1} parent=1 // pred_fallthru
      _
    // Predicated region
    $region78: #{tpu_custom_call.1} parent=1 // pred_check
      _
    $region79: #{tpu_custom_call.1} parent=1 // pred_check_branch
      %142 = sbr.rel (0) target = $region81
    $region80: #{tpu_custom_call.1} parent=1 // pred_region
      %143 = dma.done [#allocation12], 2048
    $region81: #{tpu_custom_call.1} parent=1 // pred_fallthru
      _
    %v144 = vld [vmem:[#allocation2] sm:$0xff]
    %v145 = vld [vmem:[#allocation2 + $0x8] sm:$0xff]
    %v146 = vld [vmem:[#allocation5] sm:$0xff]
    %v147 = vld [vmem:[#allocation5 + $0x8] sm:$0xff]
    %v148 = vld [vmem:[#allocation5 + $0x10] sm:$0xff]
    %v149 = vld [vmem:[#allocation5 + $0x18] sm:$0xff]
    %v150 = vld [vmem:[#allocation5 + $0x20] sm:$0xff]
    %v151 = vld [vmem:[#allocation5 + $0x28] sm:$0xff]
    %v152 = vld [vmem:[#allocation5 + $0x30] sm:$0xff]
    %v153 = vld [vmem:[#allocation5 + $0x38] sm:$0xff]
    %v154 = vld [vmem:[#allocation5 + $0x40] sm:$0xff]
    %v155 = vld [vmem:[#allocation5 + $0x48] sm:$0xff]
    %v156 = vld [vmem:[#allocation5 + $0x50] sm:$0xff]
    %v157 = vld [vmem:[#allocation5 + $0x58] sm:$0xff]
    %v158 = vld [vmem:[%s3] sm:$0x3f]
    %v160 = vlaneseq
    %v161 = vshrl.u32 %v160, 7
    %v162 = vsub.s32 0, %v161
    %v163 = vrot.slane %v158, %v162
    %v164 = vlaneseq
    %v165 = vshrl.u32 %v164, 7
    %v166 = vsub.s32 1, %v165
    %v167 = vrot.slane %v158, %v166
    %v168 = vlaneseq
    %v169 = vshrl.u32 %v168, 7
    %v170 = vsub.s32 2, %v169
    %v171 = vrot.slane %v158, %v170
    %v172 = vlaneseq
    %v173 = vshrl.u32 %v172, 7
    %v174 = vsub.s32 3, %v173
    %v175 = vrot.slane %v158, %v174
    %v176 = vlaneseq
    %v177 = vshrl.u32 %v176, 7
    %v178 = vsub.s32 4, %v177
    %v179 = vrot.slane %v158, %v178
    %v180 = vlaneseq
    %v181 = vshrl.u32 %v180, 7
    %v182 = vsub.s32 5, %v181
    %v183 = vrot.slane %v158, %v182
    %vm190 = vcmask 130048
    %v192 = vsel %vm190, %v144, 0
    %v195 = vsel %vm190, %v145, 0
    %197 = vmatprep.subr.mxu0 %v147
    %198 = vmatpush1.msra.mxu0 %v146
    %199 = vmatprep.subr.mxu0 %v153
    %200 = vmatpush1.msra.mxu0 %v152
    %201 = vmatprep.subr.mxu0 0.0
    %202 = vmatpush1.msra.mxu0 0.0
    %203 = vmatprep.subr.mxu0 0.0
    %204 = vmatpush1.msra.mxu0 0.0
    %205 = vmatprep.subr.mxu0 0.0
    %206 = vmatpush1.msra.mxu0 0.0
    %207 = vmatprep.subr.mxu0 0.0
    %208 = vmatpush1.msra.mxu0 0.0
    %209 = vmatprep.subr.mxu0 0.0
    %210 = vmatpush1.msra.mxu0 0.0
    %211 = vmatprep.subr.mxu0 0.0
    %212 = vmatpush1.msra.mxu0 0.0
    %213 = vmatprep.subr.mxu0 0.0
    %214 = vmatpush1.msra.mxu0 0.0
    %215 = vmatprep.subr.mxu0 0.0
    %216 = vmatpush1.msra.mxu0 0.0
    %217 = vmatprep.subr.mxu0 0.0
    %218 = vmatpush1.msra.mxu0 0.0
    %219 = vmatprep.subr.mxu0 0.0
    %220 = vmatpush1.msra.mxu0 0.0
    %221 = vmatprep.subr.mxu0 0.0
    %222 = vmatpush1.msra.mxu0 0.0
    %223 = vmatprep.subr.mxu0 0.0
    %224 = vmatpush1.msra.mxu0 0.0
    %225 = vmatprep.subr.mxu0 0.0
    %226 = vmatpush1.msra.mxu0 0.0
    %227 = vmatprep.subr.mxu0 0.0
    %228 = vmatpush1.msra.mxu0 0.0
    %229 = vmatprep.subr.mxu0 0.0
    %230 = vmatpush1.msra.mxu0 0.0
    %231 = vmatprep.subr.mxu0 0.0
    %232 = vmatpush1.msra.mxu0 0.0
    %233 = vmatprep.subr.mxu0 0.0
    %234 = vmatpush1.msra.mxu0 0.0
    %235 = vmatprep.subr.mxu0 0.0
    %236 = vmatpush1.msra.mxu0 0.0
    %237 = vmatprep.subr.mxu0 0.0
    %238 = vmatpush1.msra.mxu0 0.0
    %239 = vmatprep.subr.mxu0 0.0
    %240 = vmatpush1.msra.mxu0 0.0
    %241 = vmatprep.subr.mxu0 0.0
    %242 = vmatpush1.msra.mxu0 0.0
    %243 = vmatprep.subr.mxu0 0.0
    %244 = vmatpush1.msra.mxu0 0.0
    %245 = vmatprep.subr.mxu0 0.0
    %246 = vmatpush1.msra.mxu0 0.0
    %247 = vmatprep.subr.mxu0 0.0
    %248 = vmatpush1.msra.mxu0 0.0
    %249 = vmatprep.subr.mxu0 0.0
    %250 = vmatpush1.msra.mxu0 0.0
    %251 = vmatprep.subr.mxu0 0.0
    %252 = vmatpush1.msra.mxu0 0.0
    %253 = vmatprep.subr.mxu0 0.0
    %254 = vmatpush1.msra.mxu0 0.0
    %255 = vmatprep.subr.mxu0 0.0
    %256 = vmatpush1.msra.mxu0 0.0
    %257 = vmatprep.subr.mxu0 0.0
    %258 = vmatpush1.msra.mxu0 0.0
    %259 = vmatprep.subr.mxu0 0.0
    %260 = vmatpush1.msra.mxu0 0.0
    %261 = vmatprep.mubr.f32.mxu0 0.0
    %262 = vmatmul.mubr.f32.gmra.mrb[0].mxu0 %v192
    %v263 = vpop.f32.mrb[0].mxu0
    %v264 = vadd.f32 %v163, %v263
    %v265 = vpop.f32.mrb[0].mxu0
    %v266 = vadd.f32 %v167, %v265
    %267 = vmatprep.mubr.f32.mxu0 0.0
    %268 = vmatmul.mubr.f32.gmra.mrb[0].mxu0 %v195
    %v269 = vpop.f32.mrb[0].mxu0
    %v270 = vadd.f32 %v163, %v269
    %v271 = vpop.f32.mrb[0].mxu0
    %v272 = vadd.f32 %v167, %v271
    %273 = vdwg.mxu0
    %274 = vmatprep.subr.mxu0 %v149
    %275 = vmatpush1.msra.mxu0 %v148
    %276 = vmatprep.subr.mxu0 %v155
    %277 = vmatpush1.msra.mxu0 %v154
    %278 = vmatprep.subr.mxu0 0.0
    %279 = vmatpush1.msra.mxu0 0.0
    %280 = vmatprep.subr.mxu0 0.0
    %281 = vmatpush1.msra.mxu0 0.0
    %282 = vmatprep.subr.mxu0 0.0
    %283 = vmatpush1.msra.mxu0 0.0
    %284 = vmatprep.subr.mxu0 0.0
    %285 = vmatpush1.msra.mxu0 0.0
    %286 = vmatprep.subr.mxu0 0.0
    %287 = vmatpush1.msra.mxu0 0.0
    %288 = vmatprep.subr.mxu0 0.0
    %289 = vmatpush1.msra.mxu0 0.0
    %290 = vmatprep.subr.mxu0 0.0
    %291 = vmatpush1.msra.mxu0 0.0
    %292 = vmatprep.subr.mxu0 0.0
    %293 = vmatpush1.msra.mxu0 0.0
    %294 = vmatprep.subr.mxu0 0.0
    %295 = vmatpush1.msra.mxu0 0.0
    %296 = vmatprep.subr.mxu0 0.0
    %297 = vmatpush1.msra.mxu0 0.0
    %298 = vmatprep.subr.mxu0 0.0
    %299 = vmatpush1.msra.mxu0 0.0
    %300 = vmatprep.subr.mxu0 0.0
    %301 = vmatpush1.msra.mxu0 0.0
    %302 = vmatprep.subr.mxu0 0.0
    %303 = vmatpush1.msra.mxu0 0.0
    %304 = vmatprep.subr.mxu0 0.0
    %305 = vmatpush1.msra.mxu0 0.0
    %306 = vmatprep.subr.mxu0 0.0
    %307 = vmatpush1.msra.mxu0 0.0
    %308 = vmatprep.subr.mxu0 0.0
    %309 = vmatpush1.msra.mxu0 0.0
    %310 = vmatprep.subr.mxu0 0.0
    %311 = vmatpush1.msra.mxu0 0.0
    %312 = vmatprep.subr.mxu0 0.0
    %313 = vmatpush1.msra.mxu0 0.0
    %314 = vmatprep.subr.mxu0 0.0
    %315 = vmatpush1.msra.mxu0 0.0
    %316 = vmatprep.subr.mxu0 0.0
    %317 = vmatpush1.msra.mxu0 0.0
    %318 = vmatprep.subr.mxu0 0.0
    %319 = vmatpush1.msra.mxu0 0.0
    %320 = vmatprep.subr.mxu0 0.0
    %321 = vmatpush1.msra.mxu0 0.0
    %322 = vmatprep.subr.mxu0 0.0
    %323 = vmatpush1.msra.mxu0 0.0
    %324 = vmatprep.subr.mxu0 0.0
    %325 = vmatpush1.msra.mxu0 0.0
    %326 = vmatprep.subr.mxu0 0.0
    %327 = vmatpush1.msra.mxu0 0.0
    %328 = vmatprep.subr.mxu0 0.0
    %329 = vmatpush1.msra.mxu0 0.0
    %330 = vmatprep.subr.mxu0 0.0
    %331 = vmatpush1.msra.mxu0 0.0
    %332 = vmatprep.subr.mxu0 0.0
    %333 = vmatpush1.msra.mxu0 0.0
    %334 = vmatprep.subr.mxu0 0.0
    %335 = vmatpush1.msra.mxu0 0.0
    %336 = vmatprep.subr.mxu0 0.0
    %337 = vmatpush1.msra.mxu0 0.0
    %338 = vmatprep.mubr.f32.mxu0 0.0
    %339 = vmatmul.mubr.f32.gmra.mrb[0].mxu0 %v192
    %v340 = vpop.f32.mrb[0].mxu0
    %v341 = vadd.f32 %v171, %v340
    %v342 = vpop.f32.mrb[0].mxu0
    %v343 = vadd.f32 %v175, %v342
    %344 = vmatprep.mubr.f32.mxu0 0.0
    %345 = vmatmul.mubr.f32.gmra.mrb[0].mxu0 %v195
    %v346 = vpop.f32.mrb[0].mxu0
    %v347 = vadd.f32 %v171, %v346
    %v348 = vpop.f32.mrb[0].mxu0
    %v349 = vadd.f32 %v175, %v348
    %350 = vdwg.mxu0
    %351 = vmatprep.subr.mxu0 %v151
    %352 = vmatpush1.msra.mxu0 %v150
    %353 = vmatprep.subr.mxu0 %v157
    %354 = vmatpush1.msra.mxu0 %v156
    %355 = vmatprep.subr.mxu0 0.0
    %356 = vmatpush1.msra.mxu0 0.0
    %357 = vmatprep.subr.mxu0 0.0
    %358 = vmatpush1.msra.mxu0 0.0
    %359 = vmatprep.subr.mxu0 0.0
    %360 = vmatpush1.msra.mxu0 0.0
    %361 = vmatprep.subr.mxu0 0.0
    %362 = vmatpush1.msra.mxu0 0.0
    %363 = vmatprep.subr.mxu0 0.0
    %364 = vmatpush1.msra.mxu0 0.0
    %365 = vmatprep.subr.mxu0 0.0
    %366 = vmatpush1.msra.mxu0 0.0
    %367 = vmatprep.subr.mxu0 0.0
    %368 = vmatpush1.msra.mxu0 0.0
    %369 = vmatprep.subr.mxu0 0.0
    %370 = vmatpush1.msra.mxu0 0.0
    %371 = vmatprep.subr.mxu0 0.0
    %372 = vmatpush1.msra.mxu0 0.0
    %373 = vmatprep.subr.mxu0 0.0
    %374 = vmatpush1.msra.mxu0 0.0
    %375 = vmatprep.subr.mxu0 0.0
    %376 = vmatpush1.msra.mxu0 0.0
    %377 = vmatprep.subr.mxu0 0.0
    %378 = vmatpush1.msra.mxu0 0.0
    %379 = vmatprep.subr.mxu0 0.0
    %380 = vmatpush1.msra.mxu0 0.0
    %381 = vmatprep.subr.mxu0 0.0
    %382 = vmatpush1.msra.mxu0 0.0
    %383 = vmatprep.subr.mxu0 0.0
    %384 = vmatpush1.msra.mxu0 0.0
    %385 = vmatprep.subr.mxu0 0.0
    %386 = vmatpush1.msra.mxu0 0.0
    %387 = vmatprep.subr.mxu0 0.0
    %388 = vmatpush1.msra.mxu0 0.0
    %389 = vmatprep.subr.mxu0 0.0
    %390 = vmatpush1.msra.mxu0 0.0
    %391 = vmatprep.subr.mxu0 0.0
    %392 = vmatpush1.msra.mxu0 0.0
    %393 = vmatprep.subr.mxu0 0.0
    %394 = vmatpush1.msra.mxu0 0.0
    %395 = vmatprep.subr.mxu0 0.0
    %396 = vmatpush1.msra.mxu0 0.0
    %397 = vmatprep.subr.mxu0 0.0
    %398 = vmatpush1.msra.mxu0 0.0
    %399 = vmatprep.subr.mxu0 0.0
    %400 = vmatpush1.msra.mxu0 0.0
    %401 = vmatprep.subr.mxu0 0.0
    %402 = vmatpush1.msra.mxu0 0.0
    %403 = vmatprep.subr.mxu0 0.0
    %404 = vmatpush1.msra.mxu0 0.0
    %405 = vmatprep.subr.mxu0 0.0
    %406 = vmatpush1.msra.mxu0 0.0
    %407 = vmatprep.subr.mxu0 0.0
    %408 = vmatpush1.msra.mxu0 0.0
    %409 = vmatprep.subr.mxu0 0.0
    %410 = vmatpush1.msra.mxu0 0.0
    %411 = vmatprep.subr.mxu0 0.0
    %412 = vmatpush1.msra.mxu0 0.0
    %413 = vmatprep.subr.mxu0 0.0
    %414 = vmatpush1.msra.mxu0 0.0
    %415 = vmatprep.mubr.f32.mxu0 0.0
    %416 = vmatmul.mubr.f32.gmra.mrb[0].mxu0 %v192
    %v417 = vpop.f32.mrb[0].mxu0
    %v418 = vadd.f32 %v179, %v417
    %v419 = vpop.f32.mrb[0].mxu0
    %v420 = vadd.f32 %v183, %v419
    %421 = vmatprep.mubr.f32.mxu0 0.0
    %422 = vmatmul.mubr.f32.gmra.mrb[0].mxu0 %v195
    %v423 = vpop.f32.mrb[0].mxu0
    %v424 = vadd.f32 %v179, %v423
    %v425 = vpop.f32.mrb[0].mxu0
    %v426 = vadd.f32 %v183, %v425
    %427 = vdwg.mxu0
    %v428 = vld [vmem:[#allocation7] sm:$0xff]
    %v429 = vld [vmem:[#allocation7 + $0x8] sm:$0xff]
    %v430 = vld [vmem:[#allocation7 + $0x10] sm:$0xff]
    %v431 = vld [vmem:[#allocation7 + $0x18] sm:$0xff]
    %v432 = vld [vmem:[#allocation7 + $0x20] sm:$0xff]
    %v433 = vld [vmem:[#allocation7 + $0x28] sm:$0xff]
    %v434 = vld [vmem:[#allocation7 + $0x30] sm:$0xff]
    %v435 = vld [vmem:[#allocation7 + $0x38] sm:$0xff]
    %v436 = vld [vmem:[#allocation7 + $0x40] sm:$0xff]
    %v437 = vld [vmem:[#allocation7 + $0x48] sm:$0xff]
    %v438 = vld [vmem:[#allocation7 + $0x50] sm:$0xff]
    %v439 = vld [vmem:[#allocation7 + $0x58] sm:$0xff]
    %v440 = vld [vmem:[#allocation7 + $0x60] sm:$0xff]
    %v441 = vld [vmem:[#allocation7 + $0x68] sm:$0xff]
    %v442 = vld [vmem:[#allocation7 + $0x70] sm:$0xff]
    %v443 = vld [vmem:[#allocation7 + $0x78] sm:$0xff]
    %v444 = vld [vmem:[#allocation7 + $0x80] sm:$0xff]
    %v445 = vld [vmem:[#allocation7 + $0x88] sm:$0xff]
    %v446 = vld [vmem:[#allocation7 + $0x90] sm:$0xff]
    %v447 = vld [vmem:[#allocation7 + $0x98] sm:$0xff]
    %v448 = vld [vmem:[#allocation7 + $0xa0] sm:$0xff]
    %v449 = vld [vmem:[#allocation7 + $0xa8] sm:$0xff]
    %v450 = vld [vmem:[#allocation7 + $0xb0] sm:$0xff]
    %v451 = vld [vmem:[#allocation7 + $0xb8] sm:$0xff]
    %v452 = vld [vmem:[#allocation7 + $0xc0] sm:$0xff]
    %v453 = vld [vmem:[#allocation7 + $0xc8] sm:$0xff]
    %v454 = vld [vmem:[#allocation7 + $0xd0] sm:$0xff]
    %v455 = vld [vmem:[#allocation7 + $0xd8] sm:$0xff]
    %v456 = vld [vmem:[#allocation7 + $0xe0] sm:$0xff]
    %v457 = vld [vmem:[#allocation7 + $0xe8] sm:$0xff]
    %v458 = vld [vmem:[#allocation7 + $0xf0] sm:$0xff]
    %v459 = vld [vmem:[#allocation7 + $0xf8] sm:$0xff]
    %v460 = vld [vmem:[#allocation7 + $0x100] sm:$0xff]
    %v461 = vld [vmem:[#allocation7 + $0x108] sm:$0xff]
    %v462 = vld [vmem:[#allocation7 + $0x110] sm:$0xff]
    %v463 = vld [vmem:[#allocation7 + $0x118] sm:$0xff]
    %v464 = vld [vmem:[#allocation7 + $0x120] sm:$0xff]
    %v465 = vld [vmem:[#allocation7 + $0x128] sm:$0xff]
    %v466 = vld [vmem:[#allocation7 + $0x130] sm:$0xff]
    %v467 = vld [vmem:[#allocation7 + $0x138] sm:$0xff]
    %v468 = vld [vmem:[#allocation7 + $0x140] sm:$0xff]
    %v469 = vld [vmem:[#allocation7 + $0x148] sm:$0xff]
    %v470 = vld [vmem:[#allocation7 + $0x150] sm:$0xff]
    %v471 = vld [vmem:[#allocation7 + $0x158] sm:$0xff]
    %v472 = vld [vmem:[#allocation7 + $0x160] sm:$0xff]
    %v473 = vld [vmem:[#allocation7 + $0x168] sm:$0xff]
    %v474 = vld [vmem:[#allocation7 + $0x170] sm:$0xff]
    %v475 = vld [vmem:[#allocation7 + $0x178] sm:$0xff]
    %v476 = vld [vmem:[%s5] sm:$0x7]
    %v477 = vld [vmem:[#allocation8] sm:$0xff]
    %v478 = vld [vmem:[#allocation8 + $0x8] sm:$0xff]
    %v479 = vld [vmem:[#allocation8 + $0x10] sm:$0xff]
    %v480 = vld [vmem:[#allocation8 + $0x18] sm:$0xff]
    %v481 = vld [vmem:[#allocation8 + $0x20] sm:$0xff]
    %v482 = vld [vmem:[#allocation8 + $0x28] sm:$0xff]
    %v483 = vld [vmem:[#allocation8 + $0x30] sm:$0xff]
    %v484 = vld [vmem:[#allocation8 + $0x38] sm:$0xff]
    %v485 = vld [vmem:[#allocation8 + $0x40] sm:$0xff]
    %v486 = vld [vmem:[#allocation8 + $0x48] sm:$0xff]
    %v487 = vld [vmem:[#allocation8 + $0x50] sm:$0xff]
    %v488 = vld [vmem:[#allocation8 + $0x58] sm:$0xff]
    %v489 = vld [vmem:[#allocation8 + $0x60] sm:$0xff]
    %v490 = vld [vmem:[#allocation8 + $0x68] sm:$0xff]
    %v491 = vld [vmem:[#allocation8 + $0x70] sm:$0xff]
    %v492 = vld [vmem:[#allocation8 + $0x78] sm:$0xff]
    %v493 = vld [vmem:[#allocation8 + $0x80] sm:$0xff]
    %v494 = vld [vmem:[#allocation8 + $0x88] sm:$0xff]
    %v495 = vld [vmem:[#allocation8 + $0x90] sm:$0xff]
    %v496 = vld [vmem:[#allocation8 + $0x98] sm:$0xff]
    %v497 = vld [vmem:[#allocation8 + $0xa0] sm:$0xff]
    %v498 = vld [vmem:[#allocation8 + $0xa8] sm:$0xff]
    %v499 = vld [vmem:[#allocation8 + $0xb0] sm:$0xff]
    %v500 = vld [vmem:[#allocation8 + $0xb8] sm:$0xff]
    %v501 = vld [vmem:[#allocation8 + $0xc0] sm:$0xff]
    %v502 = vld [vmem:[#allocation8 + $0xc8] sm:$0xff]
    %v503 = vld [vmem:[#allocation8 + $0xd0] sm:$0xff]
    %v504 = vld [vmem:[#allocation8 + $0xd8] sm:$0xff]
    %v505 = vld [vmem:[#allocation8 + $0xe0] sm:$0xff]
    %v506 = vld [vmem:[#allocation8 + $0xe8] sm:$0xff]
    %v507 = vld [vmem:[#allocation8 + $0xf0] sm:$0xff]
    %v508 = vld [vmem:[#allocation8 + $0xf8] sm:$0xff]
    %v509 = vld [vmem:[#allocation8 + $0x100] sm:$0xff]
    %v510 = vld [vmem:[#allocation8 + $0x108] sm:$0xff]
    %v511 = vld [vmem:[#allocation8 + $0x110] sm:$0xff]
    %v512 = vld [vmem:[#allocation8 + $0x118] sm:$0xff]
    %v513 = vld [vmem:[#allocation8 + $0x120] sm:$0xff]
    %v514 = vld [vmem:[#allocation8 + $0x128] sm:$0xff]
    %v515 = vld [vmem:[#allocation8 + $0x130] sm:$0xff]
    %v516 = vld [vmem:[#allocation8 + $0x138] sm:$0xff]
    %v517 = vld [vmem:[#allocation8 + $0x140] sm:$0xff]
    %v518 = vld [vmem:[#allocation8 + $0x148] sm:$0xff]
    %v519 = vld [vmem:[#allocation8 + $0x150] sm:$0xff]
    %v520 = vld [vmem:[#allocation8 + $0x158] sm:$0xff]
    %v521 = vld [vmem:[#allocation8 + $0x160] sm:$0xff]
    %v522 = vld [vmem:[#allocation8 + $0x168] sm:$0xff]
    %v523 = vld [vmem:[#allocation8 + $0x170] sm:$0xff]
    %v524 = vld [vmem:[#allocation8 + $0x178] sm:$0xff]
    %v525 = vld [vmem:[%s7] sm:$0x7]
    %v526 = vld [vmem:[%s1] sm:$0x3]
    %v528 = vlaneseq
    %v529 = vshrl.u32 %v528, 7
    %v530 = vsub.s32 0, %v529
    %v531 = vrot.slane %v476, %v530
    %v532 = vlaneseq
    %v533 = vshrl.u32 %v532, 7
    %v534 = vsub.s32 1, %v533
    %v535 = vrot.slane %v476, %v534
    %v536 = vlaneseq
    %v537 = vshrl.u32 %v536, 7
    %v538 = vsub.s32 2, %v537
    %v539 = vrot.slane %v476, %v538
    %543 = vmatprep.subr.mxu0 %v429
    %544 = vmatpush1.msra.mxu0 %v428
    %545 = vmatprep.subr.mxu0 %v432
    %546 = vmatpush1.msra.mxu0 %v431
    %547 = vmatprep.subr.mxu0 %v435
    %548 = vmatpush1.msra.mxu0 %v434
    %549 = vmatprep.subr.mxu0 %v438
    %550 = vmatpush1.msra.mxu0 %v437
    %551 = vmatprep.subr.mxu0 %v441
    %552 = vmatpush1.msra.mxu0 %v440
    %553 = vmatprep.subr.mxu0 %v444
    %554 = vmatpush1.msra.mxu0 %v443
    %555 = vmatprep.subr.mxu0 %v447
    %556 = vmatpush1.msra.mxu0 %v446
    %557 = vmatprep.subr.mxu0 %v450
    %558 = vmatpush1.msra.mxu0 %v449
    %559 = vmatprep.subr.mxu0 %v453
    %560 = vmatpush1.msra.mxu0 %v452
    %561 = vmatprep.subr.mxu0 %v456
    %562 = vmatpush1.msra.mxu0 %v455
    %563 = vmatprep.subr.mxu0 %v459
    %564 = vmatpush1.msra.mxu0 %v458
    %565 = vmatprep.subr.mxu0 %v462
    %566 = vmatpush1.msra.mxu0 %v461
    %567 = vmatprep.subr.mxu0 %v465
    %568 = vmatpush1.msra.mxu0 %v464
    %569 = vmatprep.subr.mxu0 %v468
    %570 = vmatpush1.msra.mxu0 %v467
    %571 = vmatprep.subr.mxu0 %v471
    %572 = vmatpush1.msra.mxu0 %v470
    %573 = vmatprep.subr.mxu0 %v474
    %574 = vmatpush1.msra.mxu0 %v473
    %575 = vmatprep.subr.mxu0 0.0
    %576 = vmatpush1.msra.mxu0 0.0
    %577 = vmatprep.subr.mxu0 0.0
    %578 = vmatpush1.msra.mxu0 0.0
    %579 = vmatprep.subr.mxu0 0.0
    %580 = vmatpush1.msra.mxu0 0.0
    %581 = vmatprep.subr.mxu0 0.0
    %582 = vmatpush1.msra.mxu0 0.0
    %583 = vmatprep.subr.mxu0 0.0
    %584 = vmatpush1.msra.mxu0 0.0
    %585 = vmatprep.subr.mxu0 0.0
    %586 = vmatpush1.msra.mxu0 0.0
    %587 = vmatprep.subr.mxu0 0.0
    %588 = vmatpush1.msra.mxu0 0.0
    %589 = vmatprep.subr.mxu0 0.0
    %590 = vmatpush1.msra.mxu0 0.0
    %591 = vmatprep.subr.mxu0 0.0
    %592 = vmatpush1.msra.mxu0 0.0
    %593 = vmatprep.subr.mxu0 0.0
    %594 = vmatpush1.msra.mxu0 0.0
    %595 = vmatprep.subr.mxu0 0.0
    %596 = vmatpush1.msra.mxu0 0.0
    %597 = vmatprep.subr.mxu0 0.0
    %598 = vmatpush1.msra.mxu0 0.0
    %599 = vmatprep.subr.mxu0 0.0
    %600 = vmatpush1.msra.mxu0 0.0
    %601 = vmatprep.subr.mxu0 0.0
    %602 = vmatpush1.msra.mxu0 0.0
    %603 = vmatprep.subr.mxu0 0.0
    %604 = vmatpush1.msra.mxu0 0.0
    %605 = vmatprep.subr.mxu0 0.0
    %606 = vmatpush1.msra.mxu0 0.0
    %607 = vmatprep.mubr.f32.mxu0 0.0
    %608 = vmatmul.mubr.f32.gmra.mrb[0].mxu0 0.0
    %v609 = vpop.f32.mrb[0].mxu0
    %v610 = vadd.f32 %v531, %v609
    %v611 = vpop.f32.mrb[0].mxu0
    %v612 = vadd.f32 %v535, %v611
    %613 = vdwg.mxu0
    %614 = vmatprep.subr.mxu0 0.0
    %615 = vmatpush1.msra.mxu0 %v430
    %616 = vmatprep.subr.mxu0 0.0
    %617 = vmatpush1.msra.mxu0 %v433
    %618 = vmatprep.subr.mxu0 0.0
    %619 = vmatpush1.msra.mxu0 %v436
    %620 = vmatprep.subr.mxu0 0.0
    %621 = vmatpush1.msra.mxu0 %v439
    %622 = vmatprep.subr.mxu0 0.0
    %623 = vmatpush1.msra.mxu0 %v442
    %624 = vmatprep.subr.mxu0 0.0
    %625 = vmatpush1.msra.mxu0 %v445
    %626 = vmatprep.subr.mxu0 0.0
    %627 = vmatpush1.msra.mxu0 %v448
    %628 = vmatprep.subr.mxu0 0.0
    %629 = vmatpush1.msra.mxu0 %v451
    %630 = vmatprep.subr.mxu0 0.0
    %631 = vmatpush1.msra.mxu0 %v454
    %632 = vmatprep.subr.mxu0 0.0
    %633 = vmatpush1.msra.mxu0 %v457
    %634 = vmatprep.subr.mxu0 0.0
    %635 = vmatpush1.msra.mxu0 %v460
    %636 = vmatprep.subr.mxu0 0.0
    %637 = vmatpush1.msra.mxu0 %v463
    %638 = vmatprep.subr.mxu0 0.0
    %639 = vmatpush1.msra.mxu0 %v466
    %640 = vmatprep.subr.mxu0 0.0
    %641 = vmatpush1.msra.mxu0 %v469
    %642 = vmatprep.subr.mxu0 0.0
    %643 = vmatpush1.msra.mxu0 %v472
    %644 = vmatprep.subr.mxu0 0.0
    %645 = vmatpush1.msra.mxu0 %v475
    %646 = vmatprep.subr.mxu0 0.0
    %647 = vmatpush1.msra.mxu0 0.0
    %648 = vmatprep.subr.mxu0 0.0
    %649 = vmatpush1.msra.mxu0 0.0
    %650 = vmatprep.subr.mxu0 0.0
    %651 = vmatpush1.msra.mxu0 0.0
    %652 = vmatprep.subr.mxu0 0.0
    %653 = vmatpush1.msra.mxu0 0.0
    %654 = vmatprep.subr.mxu0 0.0
    %655 = vmatpush1.msra.mxu0 0.0
    %656 = vmatprep.subr.mxu0 0.0
    %657 = vmatpush1.msra.mxu0 0.0
    %658 = vmatprep.subr.mxu0 0.0
    %659 = vmatpush1.msra.mxu0 0.0
    %660 = vmatprep.subr.mxu0 0.0
    %661 = vmatpush1.msra.mxu0 0.0
    %662 = vmatprep.subr.mxu0 0.0
    %663 = vmatpush1.msra.mxu0 0.0
    %664 = vmatprep.subr.mxu0 0.0
    %665 = vmatpush1.msra.mxu0 0.0
    %666 = vmatprep.subr.mxu0 0.0
    %667 = vmatpush1.msra.mxu0 0.0
    %668 = vmatprep.subr.mxu0 0.0
    %669 = vmatpush1.msra.mxu0 0.0
    %670 = vmatprep.subr.mxu0 0.0
    %671 = vmatpush1.msra.mxu0 0.0
    %672 = vmatprep.subr.mxu0 0.0
    %673 = vmatpush1.msra.mxu0 0.0
    %674 = vmatprep.subr.mxu0 0.0
    %675 = vmatpush1.msra.mxu0 0.0
    %676 = vmatprep.subr.mxu0 0.0
    %677 = vmatpush1.msra.mxu0 0.0
    %678 = vmatprep.mubr.f32.mxu0 0.0
    %679 = vmatmul.mubr.f32.gmra.mrb[0].mxu0 0.0
    %v680 = vpop.f32.mrb[0].mxu0
    %v681 = vadd.f32 %v539, %v680
    %v682 = vpop.f32.mrb[0].mxu0
    %683 = vdwg.mxu0
    %v685 = vlaneseq
    %v686 = vshrl.u32 %v685, 7
    %v687 = vsub.s32 0, %v686
    %v688 = vrot.slane %v525, %v687
    %v689 = vlaneseq
    %v690 = vshrl.u32 %v689, 7
    %v691 = vsub.s32 1, %v690
    %v692 = vrot.slane %v525, %v691
    %v693 = vlaneseq
    %v694 = vshrl.u32 %v693, 7
    %v695 = vsub.s32 2, %v694
    %v696 = vrot.slane %v525, %v695
    %700 = vmatprep.subr.mxu0 %v478
    %701 = vmatpush1.msra.mxu0 %v477
    %702 = vmatprep.subr.mxu0 %v481
    %703 = vmatpush1.msra.mxu0 %v480
    %704 = vmatprep.subr.mxu0 %v484
    %705 = vmatpush1.msra.mxu0 %v483
    %706 = vmatprep.subr.mxu0 %v487
    %707 = vmatpush1.msra.mxu0 %v486
    %708 = vmatprep.subr.mxu0 %v490
    %709 = vmatpush1.msra.mxu0 %v489
    %710 = vmatprep.subr.mxu0 %v493
    %711 = vmatpush1.msra.mxu0 %v492
    %712 = vmatprep.subr.mxu0 %v496
    %713 = vmatpush1.msra.mxu0 %v495
    %714 = vmatprep.subr.mxu0 %v499
    %715 = vmatpush1.msra.mxu0 %v498
    %716 = vmatprep.subr.mxu0 %v502
    %717 = vmatpush1.msra.mxu0 %v501
    %718 = vmatprep.subr.mxu0 %v505
    %719 = vmatpush1.msra.mxu0 %v504
    %720 = vmatprep.subr.mxu0 %v508
    %721 = vmatpush1.msra.mxu0 %v507
    %722 = vmatprep.subr.mxu0 %v511
    %723 = vmatpush1.msra.mxu0 %v510
    %724 = vmatprep.subr.mxu0 %v514
    %725 = vmatpush1.msra.mxu0 %v513
    %726 = vmatprep.subr.mxu0 %v517
    %727 = vmatpush1.msra.mxu0 %v516
    %728 = vmatprep.subr.mxu0 %v520
    %729 = vmatpush1.msra.mxu0 %v519
    %730 = vmatprep.subr.mxu0 %v523
    %731 = vmatpush1.msra.mxu0 %v522
    %732 = vmatprep.subr.mxu0 0.0
    %733 = vmatpush1.msra.mxu0 0.0
    %734 = vmatprep.subr.mxu0 0.0
    %735 = vmatpush1.msra.mxu0 0.0
    %736 = vmatprep.subr.mxu0 0.0
    %737 = vmatpush1.msra.mxu0 0.0
    %738 = vmatprep.subr.mxu0 0.0
    %739 = vmatpush1.msra.mxu0 0.0
    %740 = vmatprep.subr.mxu0 0.0
    %741 = vmatpush1.msra.mxu0 0.0
    %742 = vmatprep.subr.mxu0 0.0
    %743 = vmatpush1.msra.mxu0 0.0
    %744 = vmatprep.subr.mxu0 0.0
    %745 = vmatpush1.msra.mxu0 0.0
    %746 = vmatprep.subr.mxu0 0.0
    %747 = vmatpush1.msra.mxu0 0.0
    %748 = vmatprep.subr.mxu0 0.0
    %749 = vmatpush1.msra.mxu0 0.0
    %750 = vmatprep.subr.mxu0 0.0
    %751 = vmatpush1.msra.mxu0 0.0
    %752 = vmatprep.subr.mxu0 0.0
    %753 = vmatpush1.msra.mxu0 0.0
    %754 = vmatprep.subr.mxu0 0.0
    %755 = vmatpush1.msra.mxu0 0.0
    %756 = vmatprep.subr.mxu0 0.0
    %757 = vmatpush1.msra.mxu0 0.0
    %758 = vmatprep.subr.mxu0 0.0
    %759 = vmatpush1.msra.mxu0 0.0
    %760 = vmatprep.subr.mxu0 0.0
    %761 = vmatpush1.msra.mxu0 0.0
    %762 = vmatprep.subr.mxu0 0.0
    %763 = vmatpush1.msra.mxu0 0.0
    %764 = vmatprep.mubr.f32.mxu0 0.0
    %765 = vmatmul.mubr.f32.gmra.mrb[0].mxu0 0.0
    %v766 = vpop.f32.mrb[0].mxu0
    %v767 = vadd.f32 %v688, %v766
    %v768 = vpop.f32.mrb[0].mxu0
    %v769 = vadd.f32 %v692, %v768
    %770 = vdwg.mxu0
    %771 = vmatprep.subr.mxu0 0.0
    %772 = vmatpush1.msra.mxu0 %v479
    %773 = vmatprep.subr.mxu0 0.0
    %774 = vmatpush1.msra.mxu0 %v482
    %775 = vmatprep.subr.mxu0 0.0
    %776 = vmatpush1.msra.mxu0 %v485
    %777 = vmatprep.subr.mxu0 0.0
    %778 = vmatpush1.msra.mxu0 %v488
    %779 = vmatprep.subr.mxu0 0.0
    %780 = vmatpush1.msra.mxu0 %v491
    %781 = vmatprep.subr.mxu0 0.0
    %782 = vmatpush1.msra.mxu0 %v494
    %783 = vmatprep.subr.mxu0 0.0
    %784 = vmatpush1.msra.mxu0 %v497
    %785 = vmatprep.subr.mxu0 0.0
    %786 = vmatpush1.msra.mxu0 %v500
    %787 = vmatprep.subr.mxu0 0.0
    %788 = vmatpush1.msra.mxu0 %v503
    %789 = vmatprep.subr.mxu0 0.0
    %790 = vmatpush1.msra.mxu0 %v506
    %791 = vmatprep.subr.mxu0 0.0
    %792 = vmatpush1.msra.mxu0 %v509
    %793 = vmatprep.subr.mxu0 0.0
    %794 = vmatpush1.msra.mxu0 %v512
    %795 = vmatprep.subr.mxu0 0.0
    %796 = vmatpush1.msra.mxu0 %v515
    %797 = vmatprep.subr.mxu0 0.0
    %798 = vmatpush1.msra.mxu0 %v518
    %799 = vmatprep.subr.mxu0 0.0
    %800 = vmatpush1.msra.mxu0 %v521
    %801 = vmatprep.subr.mxu0 0.0
    %802 = vmatpush1.msra.mxu0 %v524
    %803 = vmatprep.subr.mxu0 0.0
    %804 = vmatpush1.msra.mxu0 0.0
    %805 = vmatprep.subr.mxu0 0.0
    %806 = vmatpush1.msra.mxu0 0.0
    %807 = vmatprep.subr.mxu0 0.0
    %808 = vmatpush1.msra.mxu0 0.0
    %809 = vmatprep.subr.mxu0 0.0
    %810 = vmatpush1.msra.mxu0 0.0
    %811 = vmatprep.subr.mxu0 0.0
    %812 = vmatpush1.msra.mxu0 0.0
    %813 = vmatprep.subr.mxu0 0.0
    %814 = vmatpush1.msra.mxu0 0.0
    %815 = vmatprep.subr.mxu0 0.0
    %816 = vmatpush1.msra.mxu0 0.0
    %817 = vmatprep.subr.mxu0 0.0
    %818 = vmatpush1.msra.mxu0 0.0
    %819 = vmatprep.subr.mxu0 0.0
    %820 = vmatpush1.msra.mxu0 0.0
    %821 = vmatprep.subr.mxu0 0.0
    %822 = vmatpush1.msra.mxu0 0.0
    %823 = vmatprep.subr.mxu0 0.0
    %824 = vmatpush1.msra.mxu0 0.0
    %825 = vmatprep.subr.mxu0 0.0
    %826 = vmatpush1.msra.mxu0 0.0
    %827 = vmatprep.subr.mxu0 0.0
    %828 = vmatpush1.msra.mxu0 0.0
    %829 = vmatprep.subr.mxu0 0.0
    %830 = vmatpush1.msra.mxu0 0.0
    %831 = vmatprep.subr.mxu0 0.0
    %832 = vmatpush1.msra.mxu0 0.0
    %833 = vmatprep.subr.mxu0 0.0
    %834 = vmatpush1.msra.mxu0 0.0
    %835 = vmatprep.mubr.f32.mxu0 0.0
    %836 = vmatmul.mubr.f32.gmra.mrb[0].mxu0 0.0
    %v837 = vpop.f32.mrb[0].mxu0
    %v838 = vadd.f32 %v696, %v837
    %v839 = vpop.f32.mrb[0].mxu0
    %840 = vdwg.mxu0
    %v841 = vadd.f32 %v264, %v610
    %v842 = vxor.u32 %v841, 2147483648
    %v843 = vmul.f32 %v842, 1.442695
    %v844 = vpow.pop %v843
    %v845 = vadd.f32 %v844, 1.0
    %v846 = vrcp.pop %v845
    %v847 = vmul.f32 1.0, %v846
    %v848 = vadd.f32 %v266, %v612
    %v849 = vxor.u32 %v848, 2147483648
    %v850 = vmul.f32 %v849, 1.442695
    %v851 = vpow.pop %v850
    %v852 = vadd.f32 %v851, 1.0
    %v853 = vrcp.pop %v852
    %v854 = vmul.f32 1.0, %v853
    %v855 = vmul.f32 %v847, %v681
    %v856 = vadd.f32 %v341, %v855
    %v857 = vtanh.pop %v856
    %v858 = vsub.f32 1.0, %v854
    %v859 = vmul.f32 %v858, %v857
    %v860 = vmul.f32 %v854, 0.0
    %v861 = vadd.f32 %v859, %v860
    %863 = vset.pattern.permute.xlu0 0
    %864 = vperm.xlu0 %863, %v526
    %v865 = vpop.permute.xlu0 %864
    %v867 = vmul.f32 %v865, %v861
    %v868 = vsub.f32 1.0, %v526
    %870 = vset.pattern.permute.xlu0 0
    %871 = vperm.xlu0 %870, %v868
    %v872 = vpop.permute.xlu0 %871
    %v874 = vmul.f32 %v872, 0.0
    %v875 = vadd.f32 %v867, %v874
    %v877 = vrot.slane %v767, 2
    %v879 = vadd.f32 %v349, %v877
    %v880 = vxor.u32 %v879, 2147483648
    %v881 = vmul.f32 %v880, 1.442695
    %v882 = vpow.pop %v881
    %v883 = vadd.f32 %v882, 1.0
    %v884 = vrcp.pop %v883
    %v885 = vmul.f32 1.0, %v884
    %v887 = vrot.slane %v769, 2
    %v889 = vadd.f32 %v424, %v887
    %v890 = vxor.u32 %v889, 2147483648
    %v891 = vmul.f32 %v890, 1.442695
    %v892 = vpow.pop %v891
    %v893 = vadd.f32 %v892, 1.0
    %v894 = vrcp.pop %v893
    %v895 = vmul.f32 1.0, %v894
    %v897 = vrot.slane %v838, 2
    %v899 = vmul.f32 %v885, %v897
    %v900 = vadd.f32 %v426, %v899
    %v901 = vtanh.pop %v900
    %v902 = vsub.f32 1.0, %v895
    %v903 = vmul.f32 %v902, %v901
    %v904 = vmul.f32 %v895, 0.0
    %v905 = vadd.f32 %v903, %v904
    %906 = vset.pattern.permute.xlu0 7
    %907 = vperm.xlu0 %906, %v526
    %v908 = vpop.permute.xlu0 %907
    %v911 = vrot.slane %v905, 6
    %v913 = vmul.f32 %v908, %v911
    %914 = vset.pattern.permute.xlu0 7
    %915 = vperm.xlu0 %914, %v868
    %v916 = vpop.permute.xlu0 %915
    %v918 = vmul.f32 %v916, 0.0
    %v919 = vadd.f32 %v913, %v918
    %v920 = vmul.f32 %v865, %v875
    %v923 = vunpack.c.l.s4 1966171168
    %v924 = vunpack.c.0.s8 %v923
    %v925 = vlaneseq
    %v926 = vshrl.u32 %v925, 7
    %v927 = vsub.s32 %v924, %v926
    %v928 = vrot.slane %v920, %v927
    %v929 = vcombine.high %v928, %v928
    %v931 = vunpack.c.l.s4 1966171168
    %v932 = vunpack.c.0.s8 %v931
    %v933 = vlaneseq
    %v934 = vshrl.u32 %v933, 7
    %v935 = vsub.s32 %v932, %v934
    %v936 = vrot.slane %v928, %v935
    %v938 = vunpack.c.l.s4 1966171168
    %v939 = vunpack.c.0.s8 %v938
    %v940 = vlaneseq
    %v941 = vshrl.u32 %v940, 7
    %v942 = vsub.s32 %v939, %v941
    %v943 = vrot.slane %v929, %v942
    %946 = vst [vmem:[#allocation14] sm:$0x1] %v936
    %947 = vst [vmem:[#allocation14 + $0x10] sm:$0x1] %v943
    %v948 = vmul.f32 %v908, %v919
    %v951 = vunpack.c.l.s4 1966171168
    %v952 = vunpack.c.0.s8 %v951
    %v953 = vlaneseq
    %v954 = vshrl.u32 %v953, 7
    %v955 = vsub.s32 %v952, %v954
    %v956 = vrot.slane %v948, %v955
    %v957 = vcombine.high %v956, %v956
    %v959 = vunpack.c.l.s4 1966171168
    %v960 = vunpack.c.0.s8 %v959
    %v961 = vlaneseq
    %v962 = vshrl.u32 %v961, 7
    %v963 = vsub.s32 %v960, %v962
    %v964 = vrot.slane %v956, %v963
    %v966 = vunpack.c.l.s4 1966171168
    %v967 = vunpack.c.0.s8 %v966
    %v968 = vlaneseq
    %v969 = vshrl.u32 %v968, 7
    %v970 = vsub.s32 %v967, %v969
    %v971 = vrot.slane %v957, %v970
    %974 = vst [vmem:[#allocation14 + $0xf] sm:$0x1] %v964
    %975 = vst [vmem:[#allocation14 + $0x1f] sm:$0x1] %v971
    %976 = vmatprep.subr.mxu0 %v429
    %977 = vmatpush1.msra.mxu0 %v428
    %978 = vmatprep.subr.mxu0 %v432
    %979 = vmatpush1.msra.mxu0 %v431
    %980 = vmatprep.subr.mxu0 %v435
    %981 = vmatpush1.msra.mxu0 %v434
    %982 = vmatprep.subr.mxu0 %v438
    %983 = vmatpush1.msra.mxu0 %v437
    %984 = vmatprep.subr.mxu0 %v441
    %985 = vmatpush1.msra.mxu0 %v440
    %986 = vmatprep.subr.mxu0 %v444
    %987 = vmatpush1.msra.mxu0 %v443
    %988 = vmatprep.subr.mxu0 %v447
    %989 = vmatpush1.msra.mxu0 %v446
    %990 = vmatprep.subr.mxu0 %v450
    %991 = vmatpush1.msra.mxu0 %v449
    %992 = vmatprep.subr.mxu0 %v453
    %993 = vmatpush1.msra.mxu0 %v452
    %994 = vmatprep.subr.mxu0 %v456
    %995 = vmatpush1.msra.mxu0 %v455
    %996 = vmatprep.subr.mxu0 %v459
    %997 = vmatpush1.msra.mxu0 %v458
    %998 = vmatprep.subr.mxu0 %v462
    %999 = vmatpush1.msra.mxu0 %v461
    %1000 = vmatprep.subr.mxu0 %v465
    %1001 = vmatpush1.msra.mxu0 %v464
    %1002 = vmatprep.subr.mxu0 %v468
    %1003 = vmatpush1.msra.mxu0 %v467
    %1004 = vmatprep.subr.mxu0 %v471
    %1005 = vmatpush1.msra.mxu0 %v470
    %1006 = vmatprep.subr.mxu0 %v474
    %1007 = vmatpush1.msra.mxu0 %v473
    %1008 = vmatprep.subr.mxu0 0.0
    %1009 = vmatpush1.msra.mxu0 0.0
    %1010 = vmatprep.subr.mxu0 0.0
    %1011 = vmatpush1.msra.mxu0 0.0
    %1012 = vmatprep.subr.mxu0 0.0
    %1013 = vmatpush1.msra.mxu0 0.0
    %1014 = vmatprep.subr.mxu0 0.0
    %1015 = vmatpush1.msra.mxu0 0.0
    %1016 = vmatprep.subr.mxu0 0.0
    %1017 = vmatpush1.msra.mxu0 0.0
    %1018 = vmatprep.subr.mxu0 0.0
    %1019 = vmatpush1.msra.mxu0 0.0
    %1020 = vmatprep.subr.mxu0 0.0
    %1021 = vmatpush1.msra.mxu0 0.0
    %1022 = vmatprep.subr.mxu0 0.0
    %1023 = vmatpush1.msra.mxu0 0.0
    %1024 = vmatprep.subr.mxu0 0.0
    %1025 = vmatpush1.msra.mxu0 0.0
    %1026 = vmatprep.subr.mxu0 0.0
    %1027 = vmatpush1.msra.mxu0 0.0
    %1028 = vmatprep.subr.mxu0 0.0
    %1029 = vmatpush1.msra.mxu0 0.0
    %1030 = vmatprep.subr.mxu0 0.0
    %1031 = vmatpush1.msra.mxu0 0.0
    %1032 = vmatprep.subr.mxu0 0.0
    %1033 = vmatpush1.msra.mxu0 0.0
    %1034 = vmatprep.subr.mxu0 0.0
    %1035 = vmatpush1.msra.mxu0 0.0
    %1036 = vmatprep.subr.mxu0 0.0
    %1037 = vmatpush1.msra.mxu0 0.0
    %1038 = vmatprep.subr.mxu0 0.0
    %1039 = vmatpush1.msra.mxu0 0.0
    %1040 = vmatprep.mubr.f32.mxu0 0.0
    %1041 = vmatmul.mubr.f32.gmra.mrb[0].mxu0 %v875
    %v1042 = vpop.f32.mrb[0].mxu0
    %v1043 = vadd.f32 %v531, %v1042
    %v1044 = vpop.f32.mrb[0].mxu0
    %v1045 = vadd.f32 %v535, %v1044
    %1046 = vdwg.mxu0
    %1047 = vmatprep.subr.mxu0 0.0
    %1048 = vmatpush1.msra.mxu0 %v430
    %1049 = vmatprep.subr.mxu0 0.0
    %1050 = vmatpush1.msra.mxu0 %v433
    %1051 = vmatprep.subr.mxu0 0.0
    %1052 = vmatpush1.msra.mxu0 %v436
    %1053 = vmatprep.subr.mxu0 0.0
    %1054 = vmatpush1.msra.mxu0 %v439
    %1055 = vmatprep.subr.mxu0 0.0
    %1056 = vmatpush1.msra.mxu0 %v442
    %1057 = vmatprep.subr.mxu0 0.0
    %1058 = vmatpush1.msra.mxu0 %v445
    %1059 = vmatprep.subr.mxu0 0.0
    %1060 = vmatpush1.msra.mxu0 %v448
    %1061 = vmatprep.subr.mxu0 0.0
    %1062 = vmatpush1.msra.mxu0 %v451
    %1063 = vmatprep.subr.mxu0 0.0
    %1064 = vmatpush1.msra.mxu0 %v454
    %1065 = vmatprep.subr.mxu0 0.0
    %1066 = vmatpush1.msra.mxu0 %v457
    %1067 = vmatprep.subr.mxu0 0.0
    %1068 = vmatpush1.msra.mxu0 %v460
    %1069 = vmatprep.subr.mxu0 0.0
    %1070 = vmatpush1.msra.mxu0 %v463
    %1071 = vmatprep.subr.mxu0 0.0
    %1072 = vmatpush1.msra.mxu0 %v466
    %1073 = vmatprep.subr.mxu0 0.0
    %1074 = vmatpush1.msra.mxu0 %v469
    %1075 = vmatprep.subr.mxu0 0.0
    %1076 = vmatpush1.msra.mxu0 %v472
    %1077 = vmatprep.subr.mxu0 0.0
    %1078 = vmatpush1.msra.mxu0 %v475
    %1079 = vmatprep.subr.mxu0 0.0
    %1080 = vmatpush1.msra.mxu0 0.0
    %1081 = vmatprep.subr.mxu0 0.0
    %1082 = vmatpush1.msra.mxu0 0.0
    %1083 = vmatprep.subr.mxu0 0.0
    %1084 = vmatpush1.msra.mxu0 0.0
    %1085 = vmatprep.subr.mxu0 0.0
    %1086 = vmatpush1.msra.mxu0 0.0
    %1087 = vmatprep.subr.mxu0 0.0
    %1088 = vmatpush1.msra.mxu0 0.0
    %1089 = vmatprep.subr.mxu0 0.0
    %1090 = vmatpush1.msra.mxu0 0.0
    %1091 = vmatprep.subr.mxu0 0.0
    %1092 = vmatpush1.msra.mxu0 0.0
    %1093 = vmatprep.subr.mxu0 0.0
    %1094 = vmatpush1.msra.mxu0 0.0
    %1095 = vmatprep.subr.mxu0 0.0
    %1096 = vmatpush1.msra.mxu0 0.0
    %1097 = vmatprep.subr.mxu0 0.0
    %1098 = vmatpush1.msra.mxu0 0.0
    %1099 = vmatprep.subr.mxu0 0.0
    %1100 = vmatpush1.msra.mxu0 0.0
    %1101 = vmatprep.subr.mxu0 0.0
    %1102 = vmatpush1.msra.mxu0 0.0
    %1103 = vmatprep.subr.mxu0 0.0
    %1104 = vmatpush1.msra.mxu0 0.0
    %1105 = vmatprep.subr.mxu0 0.0
    %1106 = vmatpush1.msra.mxu0 0.0
    %1107 = vmatprep.subr.mxu0 0.0
    %1108 = vmatpush1.msra.mxu0 0.0
    %1109 = vmatprep.subr.mxu0 0.0
    %1110 = vmatpush1.msra.mxu0 0.0
    %1111 = vmatprep.mubr.f32.mxu0 0.0
    %1112 = vmatmul.mubr.f32.gmra.mrb[0].mxu0 %v875
    %v1113 = vpop.f32.mrb[0].mxu0
    %v1114 = vadd.f32 %v539, %v1113
    %v1115 = vpop.f32.mrb[0].mxu0
    %1116 = vdwg.mxu0
    %1117 = vmatprep.subr.mxu0 %v478
    %1118 = vmatpush1.msra.mxu0 %v477
    %1119 = vmatprep.subr.mxu0 %v481
    %1120 = vmatpush1.msra.mxu0 %v480
    %1121 = vmatprep.subr.mxu0 %v484
    %1122 = vmatpush1.msra.mxu0 %v483
    %1123 = vmatprep.subr.mxu0 %v487
    %1124 = vmatpush1.msra.mxu0 %v486
    %1125 = vmatprep.subr.mxu0 %v490
    %1126 = vmatpush1.msra.mxu0 %v489
    %1127 = vmatprep.subr.mxu0 %v493
    %1128 = vmatpush1.msra.mxu0 %v492
    %1129 = vmatprep.subr.mxu0 %v496
    %1130 = vmatpush1.msra.mxu0 %v495
    %1131 = vmatprep.subr.mxu0 %v499
    %1132 = vmatpush1.msra.mxu0 %v498
    %1133 = vmatprep.subr.mxu0 %v502
    %1134 = vmatpush1.msra.mxu0 %v501
    %1135 = vmatprep.subr.mxu0 %v505
    %1136 = vmatpush1.msra.mxu0 %v504
    %1137 = vmatprep.subr.mxu0 %v508
    %1138 = vmatpush1.msra.mxu0 %v507
    %1139 = vmatprep.subr.mxu0 %v511
    %1140 = vmatpush1.msra.mxu0 %v510
    %1141 = vmatprep.subr.mxu0 %v514
    %1142 = vmatpush1.msra.mxu0 %v513
    %1143 = vmatprep.subr.mxu0 %v517
    %1144 = vmatpush1.msra.mxu0 %v516
    %1145 = vmatprep.subr.mxu0 %v520
    %1146 = vmatpush1.msra.mxu0 %v519
    %1147 = vmatprep.subr.mxu0 %v523
    %1148 = vmatpush1.msra.mxu0 %v522
    %1149 = vmatprep.subr.mxu0 0.0
    %1150 = vmatpush1.msra.mxu0 0.0
    %1151 = vmatprep.subr.mxu0 0.0
    %1152 = vmatpush1.msra.mxu0 0.0
    %1153 = vmatprep.subr.mxu0 0.0
    %1154 = vmatpush1.msra.mxu0 0.0
    %1155 = vmatprep.subr.mxu0 0.0
    %1156 = vmatpush1.msra.mxu0 0.0
    %1157 = vmatprep.subr.mxu0 0.0
    %1158 = vmatpush1.msra.mxu0 0.0
    %1159 = vmatprep.subr.mxu0 0.0
    %1160 = vmatpush1.msra.mxu0 0.0
    %1161 = vmatprep.subr.mxu0 0.0
    %1162 = vmatpush1.msra.mxu0 0.0
    %1163 = vmatprep.subr.mxu0 0.0
    %1164 = vmatpush1.msra.mxu0 0.0
    %1165 = vmatprep.subr.mxu0 0.0
    %1166 = vmatpush1.msra.mxu0 0.0
    %1167 = vmatprep.subr.mxu0 0.0
    %1168 = vmatpush1.msra.mxu0 0.0
    %1169 = vmatprep.subr.mxu0 0.0
    %1170 = vmatpush1.msra.mxu0 0.0
    %1171 = vmatprep.subr.mxu0 0.0
    %1172 = vmatpush1.msra.mxu0 0.0
    %1173 = vmatprep.subr.mxu0 0.0
    %1174 = vmatpush1.msra.mxu0 0.0
    %1175 = vmatprep.subr.mxu0 0.0
    %1176 = vmatpush1.msra.mxu0 0.0
    %1177 = vmatprep.subr.mxu0 0.0
    %1178 = vmatpush1.msra.mxu0 0.0
    %1179 = vmatprep.subr.mxu0 0.0
    %1180 = vmatpush1.msra.mxu0 0.0
    %1181 = vmatprep.mubr.f32.mxu0 0.0
    %1182 = vmatmul.mubr.f32.gmra.mrb[0].mxu0 %v919
    %v1183 = vpop.f32.mrb[0].mxu0
    %v1184 = vadd.f32 %v688, %v1183
    %v1185 = vpop.f32.mrb[0].mxu0
    %v1186 = vadd.f32 %v692, %v1185
    %1187 = vdwg.mxu0
    %1188 = vmatprep.subr.mxu0 0.0
    %1189 = vmatpush1.msra.mxu0 %v479
    %1190 = vmatprep.subr.mxu0 0.0
    %1191 = vmatpush1.msra.mxu0 %v482
    %1192 = vmatprep.subr.mxu0 0.0
    %1193 = vmatpush1.msra.mxu0 %v485
    %1194 = vmatprep.subr.mxu0 0.0
    %1195 = vmatpush1.msra.mxu0 %v488
    %1196 = vmatprep.subr.mxu0 0.0
    %1197 = vmatpush1.msra.mxu0 %v491
    %1198 = vmatprep.subr.mxu0 0.0
    %1199 = vmatpush1.msra.mxu0 %v494
    %1200 = vmatprep.subr.mxu0 0.0
    %1201 = vmatpush1.msra.mxu0 %v497
    %1202 = vmatprep.subr.mxu0 0.0
    %1203 = vmatpush1.msra.mxu0 %v500
    %1204 = vmatprep.subr.mxu0 0.0
    %1205 = vmatpush1.msra.mxu0 %v503
    %1206 = vmatprep.subr.mxu0 0.0
    %1207 = vmatpush1.msra.mxu0 %v506
    %1208 = vmatprep.subr.mxu0 0.0
    %1209 = vmatpush1.msra.mxu0 %v509
    %1210 = vmatprep.subr.mxu0 0.0
    %1211 = vmatpush1.msra.mxu0 %v512
    %1212 = vmatprep.subr.mxu0 0.0
    %1213 = vmatpush1.msra.mxu0 %v515
    %1214 = vmatprep.subr.mxu0 0.0
    %1215 = vmatpush1.msra.mxu0 %v518
    %1216 = vmatprep.subr.mxu0 0.0
    %1217 = vmatpush1.msra.mxu0 %v521
    %1218 = vmatprep.subr.mxu0 0.0
    %1219 = vmatpush1.msra.mxu0 %v524
    %1220 = vmatprep.subr.mxu0 0.0
    %1221 = vmatpush1.msra.mxu0 0.0
    %1222 = vmatprep.subr.mxu0 0.0
    %1223 = vmatpush1.msra.mxu0 0.0
    %1224 = vmatprep.subr.mxu0 0.0
    %1225 = vmatpush1.msra.mxu0 0.0
    %1226 = vmatprep.subr.mxu0 0.0
    %1227 = vmatpush1.msra.mxu0 0.0
    %1228 = vmatprep.subr.mxu0 0.0
    %1229 = vmatpush1.msra.mxu0 0.0
    %1230 = vmatprep.subr.mxu0 0.0
    %1231 = vmatpush1.msra.mxu0 0.0
    %1232 = vmatprep.subr.mxu0 0.0
    %1233 = vmatpush1.msra.mxu0 0.0
    %1234 = vmatprep.subr.mxu0 0.0
    %1235 = vmatpush1.msra.mxu0 0.0
    %1236 = vmatprep.subr.mxu0 0.0
    %1237 = vmatpush1.msra.mxu0 0.0
    %1238 = vmatprep.subr.mxu0 0.0
    %1239 = vmatpush1.msra.mxu0 0.0
    %1240 = vmatprep.subr.mxu0 0.0
    %1241 = vmatpush1.msra.mxu0 0.0
    %1242 = vmatprep.subr.mxu0 0.0
    %1243 = vmatpush1.msra.mxu0 0.0
    %1244 = vmatprep.subr.mxu0 0.0
    %1245 = vmatpush1.msra.mxu0 0.0
    %1246 = vmatprep.subr.mxu0 0.0
    %1247 = vmatpush1.msra.mxu0 0.0
    %1248 = vmatprep.subr.mxu0 0.0
    %1249 = vmatpush1.msra.mxu0 0.0
    %1250 = vmatprep.subr.mxu0 0.0
    %1251 = vmatpush1.msra.mxu0 0.0
    %1252 = vmatprep.mubr.f32.mxu0 0.0
    %1253 = vmatmul.mubr.f32.gmra.mrb[0].mxu0 %v919
    %v1254 = vpop.f32.mrb[0].mxu0
    %v1255 = vadd.f32 %v696, %v1254
    %v1256 = vpop.f32.mrb[0].mxu0
    %1257 = vdwg.mxu0
    %v1259 = vrot.slane %v1043, 6
    %v1261 = vadd.f32 %v264, %v1259
    %v1262 = vxor.u32 %v1261, 2147483648
    %v1263 = vmul.f32 %v1262, 1.442695
    %v1264 = vpow.pop %v1263
    %v1265 = vadd.f32 %v1264, 1.0
    %v1266 = vrcp.pop %v1265
    %v1267 = vmul.f32 1.0, %v1266
    %v1269 = vrot.slane %v1045, 6
    %v1271 = vadd.f32 %v266, %v1269
    %v1272 = vxor.u32 %v1271, 2147483648
    %v1273 = vmul.f32 %v1272, 1.442695
    %v1274 = vpow.pop %v1273
    %v1275 = vadd.f32 %v1274, 1.0
    %v1276 = vrcp.pop %v1275
    %v1277 = vmul.f32 1.0, %v1276
    %v1279 = vrot.slane %v1114, 6
    %v1281 = vmul.f32 %v1267, %v1279
    %v1282 = vadd.f32 %v341, %v1281
    %v1283 = vtanh.pop %v1282
    %v1284 = vsub.f32 1.0, %v1277
    %v1285 = vmul.f32 %v1284, %v1283
    %v1287 = vrot.slane %v875, 6
    %v1289 = vmul.f32 %v1277, %v1287
    %v1290 = vadd.f32 %v1285, %v1289
    %1291 = vset.pattern.permute.xlu0 1
    %1292 = vperm.xlu0 %1291, %v526
    %v1293 = vpop.permute.xlu0 %1292
    %v1296 = vrot.slane %v1290, 2
    %v1298 = vmul.f32 %v1293, %v1296
    %1299 = vset.pattern.permute.xlu0 1
    %1300 = vperm.xlu0 %1299, %v868
    %v1301 = vpop.permute.xlu0 %1300
    %v1303 = vmul.f32 %v1301, %v875
    %v1304 = vadd.f32 %v1298, %v1303
    %v1306 = vrot.slane %v1184, 4
    %v1308 = vadd.f32 %v349, %v1306
    %v1309 = vxor.u32 %v1308, 2147483648
    %v1310 = vmul.f32 %v1309, 1.442695
    %v1311 = vpow.pop %v1310
    %v1312 = vadd.f32 %v1311, 1.0
    %v1313 = vrcp.pop %v1312
    %v1314 = vmul.f32 1.0, %v1313
    %v1316 = vrot.slane %v1186, 4
    %v1318 = vadd.f32 %v424, %v1316
    %v1319 = vxor.u32 %v1318, 2147483648
    %v1320 = vmul.f32 %v1319, 1.442695
    %v1321 = vpow.pop %v1320
    %v1322 = vadd.f32 %v1321, 1.0
    %v1323 = vrcp.pop %v1322
    %v1324 = vmul.f32 1.0, %v1323
    %v1326 = vrot.slane %v1255, 4
    %v1328 = vmul.f32 %v1314, %v1326
    %v1329 = vadd.f32 %v426, %v1328
    %v1330 = vtanh.pop %v1329
    %v1331 = vsub.f32 1.0, %v1324
    %v1332 = vmul.f32 %v1331, %v1330
    %v1334 = vrot.slane %v919, 4
    %v1336 = vmul.f32 %v1324, %v1334
    %v1337 = vadd.f32 %v1332, %v1336
    %1338 = vset.pattern.permute.xlu0 6
    %1339 = vperm.xlu0 %1338, %v526
    %v1340 = vpop.permute.xlu0 %1339
    %v1343 = vrot.slane %v1337, 4
    %v1345 = vmul.f32 %v1340, %v1343
    %1346 = vset.pattern.permute.xlu0 6
    %1347 = vperm.xlu0 %1346, %v868
    %v1348 = vpop.permute.xlu0 %1347
    %v1350 = vmul.f32 %v1348, %v919
    %v1351 = vadd.f32 %v1345, %v1350
    %v1352 = vmul.f32 %v1293, %v1304
    %v1355 = vunpack.c.l.s4 1966171168
    %v1356 = vunpack.c.0.s8 %v1355
    %v1357 = vlaneseq
    %v1358 = vshrl.u32 %v1357, 7
    %v1359 = vsub.s32 %v1356, %v1358
    %v1360 = vrot.slane %v1352, %v1359
    %v1361 = vcombine.high %v1360, %v1360
    %v1363 = vunpack.c.l.s4 1966171168
    %v1364 = vunpack.c.0.s8 %v1363
    %v1365 = vlaneseq
    %v1366 = vshrl.u32 %v1365, 7
    %v1367 = vsub.s32 %v1364, %v1366
    %v1368 = vrot.slane %v1360, %v1367
    %v1370 = vunpack.c.l.s4 1966171168
    %v1371 = vunpack.c.0.s8 %v1370
    %v1372 = vlaneseq
    %v1373 = vshrl.u32 %v1372, 7
    %v1374 = vsub.s32 %v1371, %v1373
    %v1375 = vrot.slane %v1361, %v1374
    %1378 = vst [vmem:[#allocation14 + $0x1] sm:$0x1] %v1368
    %1379 = vst [vmem:[#allocation14 + $0x11] sm:$0x1] %v1375
    %v1380 = vmul.f32 %v1340, %v1351
    %v1383 = vunpack.c.l.s4 1966171168
    %v1384 = vunpack.c.0.s8 %v1383
    %v1385 = vlaneseq
    %v1386 = vshrl.u32 %v1385, 7
    %v1387 = vsub.s32 %v1384, %v1386
    %v1388 = vrot.slane %v1380, %v1387
    %v1389 = vcombine.high %v1388, %v1388
    %v1391 = vunpack.c.l.s4 1966171168
    %v1392 = vunpack.c.0.s8 %v1391
    %v1393 = vlaneseq
    %v1394 = vshrl.u32 %v1393, 7
    %v1395 = vsub.s32 %v1392, %v1394
    %v1396 = vrot.slane %v1388, %v1395
    %v1398 = vunpack.c.l.s4 1966171168
    %v1399 = vunpack.c.0.s8 %v1398
    %v1400 = vlaneseq
    %v1401 = vshrl.u32 %v1400, 7
    %v1402 = vsub.s32 %v1399, %v1401
    %v1403 = vrot.slane %v1389, %v1402
    %1406 = vst [vmem:[#allocation14 + $0xe] sm:$0x1] %v1396
    %1407 = vst [vmem:[#allocation14 + $0x1e] sm:$0x1] %v1403
    %1408 = vmatprep.subr.mxu0 %v429
    %1409 = vmatpush1.msra.mxu0 %v428
    %1410 = vmatprep.subr.mxu0 %v432
    %1411 = vmatpush1.msra.mxu0 %v431
    %1412 = vmatprep.subr.mxu0 %v435
    %1413 = vmatpush1.msra.mxu0 %v434
    %1414 = vmatprep.subr.mxu0 %v438
    %1415 = vmatpush1.msra.mxu0 %v437
    %1416 = vmatprep.subr.mxu0 %v441
    %1417 = vmatpush1.msra.mxu0 %v440
    %1418 = vmatprep.subr.mxu0 %v444
    %1419 = vmatpush1.msra.mxu0 %v443
    %1420 = vmatprep.subr.mxu0 %v447
    %1421 = vmatpush1.msra.mxu0 %v446
    %1422 = vmatprep.subr.mxu0 %v450
    %1423 = vmatpush1.msra.mxu0 %v449
    %1424 = vmatprep.subr.mxu0 %v453
    %1425 = vmatpush1.msra.mxu0 %v452
    %1426 = vmatprep.subr.mxu0 %v456
    %1427 = vmatpush1.msra.mxu0 %v455
    %1428 = vmatprep.subr.mxu0 %v459
    %1429 = vmatpush1.msra.mxu0 %v458
    %1430 = vmatprep.subr.mxu0 %v462
    %1431 = vmatpush1.msra.mxu0 %v461
    %1432 = vmatprep.subr.mxu0 %v465
    %1433 = vmatpush1.msra.mxu0 %v464
    %1434 = vmatprep.subr.mxu0 %v468
    %1435 = vmatpush1.msra.mxu0 %v467
    %1436 = vmatprep.subr.mxu0 %v471
    %1437 = vmatpush1.msra.mxu0 %v470
    %1438 = vmatprep.subr.mxu0 %v474
    %1439 = vmatpush1.msra.mxu0 %v473
    %1440 = vmatprep.subr.mxu0 0.0
    %1441 = vmatpush1.msra.mxu0 0.0
    %1442 = vmatprep.subr.mxu0 0.0
    %1443 = vmatpush1.msra.mxu0 0.0
    %1444 = vmatprep.subr.mxu0 0.0
    %1445 = vmatpush1.msra.mxu0 0.0
    %1446 = vmatprep.subr.mxu0 0.0
    %1447 = vmatpush1.msra.mxu0 0.0
    %1448 = vmatprep.subr.mxu0 0.0
    %1449 = vmatpush1.msra.mxu0 0.0
    %1450 = vmatprep.subr.mxu0 0.0
    %1451 = vmatpush1.msra.mxu0 0.0
    %1452 = vmatprep.subr.mxu0 0.0
    %1453 = vmatpush1.msra.mxu0 0.0
    %1454 = vmatprep.subr.mxu0 0.0
    %1455 = vmatpush1.msra.mxu0 0.0
    %1456 = vmatprep.subr.mxu0 0.0
    %1457 = vmatpush1.msra.mxu0 0.0
    %1458 = vmatprep.subr.mxu0 0.0
    %1459 = vmatpush1.msra.mxu0 0.0
    %1460 = vmatprep.subr.mxu0 0.0
    %1461 = vmatpush1.msra.mxu0 0.0
    %1462 = vmatprep.subr.mxu0 0.0
    %1463 = vmatpush1.msra.mxu0 0.0
    %1464 = vmatprep.subr.mxu0 0.0
    %1465 = vmatpush1.msra.mxu0 0.0
    %1466 = vmatprep.subr.mxu0 0.0
    %1467 = vmatpush1.msra.mxu0 0.0
    %1468 = vmatprep.subr.mxu0 0.0
    %1469 = vmatpush1.msra.mxu0 0.0
    %1470 = vmatprep.subr.mxu0 0.0
    %1471 = vmatpush1.msra.mxu0 0.0
    %1472 = vmatprep.mubr.f32.mxu0 0.0
    %1473 = vmatmul.mubr.f32.gmra.mrb[0].mxu0 %v1304
    %v1474 = vpop.f32.mrb[0].mxu0
    %v1475 = vadd.f32 %v531, %v1474
    %v1476 = vpop.f32.mrb[0].mxu0
    %v1477 = vadd.f32 %v535, %v1476
    %1478 = vdwg.mxu0
    %1479 = vmatprep.subr.mxu0 0.0
    %1480 = vmatpush1.msra.mxu0 %v430
    %1481 = vmatprep.subr.mxu0 0.0
    %1482 = vmatpush1.msra.mxu0 %v433
    %1483 = vmatprep.subr.mxu0 0.0
    %1484 = vmatpush1.msra.mxu0 %v436
    %1485 = vmatprep.subr.mxu0 0.0
    %1486 = vmatpush1.msra.mxu0 %v439
    %1487 = vmatprep.subr.mxu0 0.0
    %1488 = vmatpush1.msra.mxu0 %v442
    %1489 = vmatprep.subr.mxu0 0.0
    %1490 = vmatpush1.msra.mxu0 %v445
    %1491 = vmatprep.subr.mxu0 0.0
    %1492 = vmatpush1.msra.mxu0 %v448
    %1493 = vmatprep.subr.mxu0 0.0
    %1494 = vmatpush1.msra.mxu0 %v451
    %1495 = vmatprep.subr.mxu0 0.0
    %1496 = vmatpush1.msra.mxu0 %v454
    %1497 = vmatprep.subr.mxu0 0.0
    %1498 = vmatpush1.msra.mxu0 %v457
    %1499 = vmatprep.subr.mxu0 0.0
    %1500 = vmatpush1.msra.mxu0 %v460
    %1501 = vmatprep.subr.mxu0 0.0
    %1502 = vmatpush1.msra.mxu0 %v463
    %1503 = vmatprep.subr.mxu0 0.0
    %1504 = vmatpush1.msra.mxu0 %v466
    %1505 = vmatprep.subr.mxu0 0.0
    %1506 = vmatpush1.msra.mxu0 %v469
    %1507 = vmatprep.subr.mxu0 0.0
    %1508 = vmatpush1.msra.mxu0 %v472
    %1509 = vmatprep.subr.mxu0 0.0
    %1510 = vmatpush1.msra.mxu0 %v475
    %1511 = vmatprep.subr.mxu0 0.0
    %1512 = vmatpush1.msra.mxu0 0.0
    %1513 = vmatprep.subr.mxu0 0.0
    %1514 = vmatpush1.msra.mxu0 0.0
    %1515 = vmatprep.subr.mxu0 0.0
    %1516 = vmatpush1.msra.mxu0 0.0
    %1517 = vmatprep.subr.mxu0 0.0
    %1518 = vmatpush1.msra.mxu0 0.0
    %1519 = vmatprep.subr.mxu0 0.0
    %1520 = vmatpush1.msra.mxu0 0.0
    %1521 = vmatprep.subr.mxu0 0.0
    %1522 = vmatpush1.msra.mxu0 0.0
    %1523 = vmatprep.subr.mxu0 0.0
    %1524 = vmatpush1.msra.mxu0 0.0
    %1525 = vmatprep.subr.mxu0 0.0
    %1526 = vmatpush1.msra.mxu0 0.0
    %1527 = vmatprep.subr.mxu0 0.0
    %1528 = vmatpush1.msra.mxu0 0.0
    %1529 = vmatprep.subr.mxu0 0.0
    %1530 = vmatpush1.msra.mxu0 0.0
    %1531 = vmatprep.subr.mxu0 0.0
    %1532 = vmatpush1.msra.mxu0 0.0
    %1533 = vmatprep.subr.mxu0 0.0
    %1534 = vmatpush1.msra.mxu0 0.0
    %1535 = vmatprep.subr.mxu0 0.0
    %1536 = vmatpush1.msra.mxu0 0.0
    %1537 = vmatprep.subr.mxu0 0.0
    %1538 = vmatpush1.msra.mxu0 0.0
    %1539 = vmatprep.subr.mxu0 0.0
    %1540 = vmatpush1.msra.mxu0 0.0
    %1541 = vmatprep.subr.mxu0 0.0
    %1542 = vmatpush1.msra.mxu0 0.0
    %1543 = vmatprep.mubr.f32.mxu0 0.0
    %1544 = vmatmul.mubr.f32.gmra.mrb[0].mxu0 %v1304
    %v1545 = vpop.f32.mrb[0].mxu0
    %v1546 = vadd.f32 %v539, %v1545
    %v1547 = vpop.f32.mrb[0].mxu0
    %1548 = vdwg.mxu0
    %1549 = vmatprep.subr.mxu0 %v478
    %1550 = vmatpush1.msra.mxu0 %v477
    %1551 = vmatprep.subr.mxu0 %v481
    %1552 = vmatpush1.msra.mxu0 %v480
    %1553 = vmatprep.subr.mxu0 %v484
    %1554 = vmatpush1.msra.mxu0 %v483
    %1555 = vmatprep.subr.mxu0 %v487
    %1556 = vmatpush1.msra.mxu0 %v486
    %1557 = vmatprep.subr.mxu0 %v490
    %1558 = vmatpush1.msra.mxu0 %v489
    %1559 = vmatprep.subr.mxu0 %v493
    %1560 = vmatpush1.msra.mxu0 %v492
    %1561 = vmatprep.subr.mxu0 %v496
    %1562 = vmatpush1.msra.mxu0 %v495
    %1563 = vmatprep.subr.mxu0 %v499
    %1564 = vmatpush1.msra.mxu0 %v498
    %1565 = vmatprep.subr.mxu0 %v502
    %1566 = vmatpush1.msra.mxu0 %v501
    %1567 = vmatprep.subr.mxu0 %v505
    %1568 = vmatpush1.msra.mxu0 %v504
    %1569 = vmatprep.subr.mxu0 %v508
    %1570 = vmatpush1.msra.mxu0 %v507
    %1571 = vmatprep.subr.mxu0 %v511
    %1572 = vmatpush1.msra.mxu0 %v510
    %1573 = vmatprep.subr.mxu0 %v514
    %1574 = vmatpush1.msra.mxu0 %v513
    %1575 = vmatprep.subr.mxu0 %v517
    %1576 = vmatpush1.msra.mxu0 %v516
    %1577 = vmatprep.subr.mxu0 %v520
    %1578 = vmatpush1.msra.mxu0 %v519
    %1579 = vmatprep.subr.mxu0 %v523
    %1580 = vmatpush1.msra.mxu0 %v522
    %1581 = vmatprep.subr.mxu0 0.0
    %1582 = vmatpush1.msra.mxu0 0.0
    %1583 = vmatprep.subr.mxu0 0.0
    %1584 = vmatpush1.msra.mxu0 0.0
    %1585 = vmatprep.subr.mxu0 0.0
    %1586 = vmatpush1.msra.mxu0 0.0
    %1587 = vmatprep.subr.mxu0 0.0
    %1588 = vmatpush1.msra.mxu0 0.0
    %1589 = vmatprep.subr.mxu0 0.0
    %1590 = vmatpush1.msra.mxu0 0.0
    %1591 = vmatprep.subr.mxu0 0.0
    %1592 = vmatpush1.msra.mxu0 0.0
    %1593 = vmatprep.subr.mxu0 0.0
    %1594 = vmatpush1.msra.mxu0 0.0
    %1595 = vmatprep.subr.mxu0 0.0
    %1596 = vmatpush1.msra.mxu0 0.0
    %1597 = vmatprep.subr.mxu0 0.0
    %1598 = vmatpush1.msra.mxu0 0.0
    %1599 = vmatprep.subr.mxu0 0.0
    %1600 = vmatpush1.msra.mxu0 0.0
    %1601 = vmatprep.subr.mxu0 0.0
    %1602 = vmatpush1.msra.mxu0 0.0
    %1603 = vmatprep.subr.mxu0 0.0
    %1604 = vmatpush1.msra.mxu0 0.0
    %1605 = vmatprep.subr.mxu0 0.0
    %1606 = vmatpush1.msra.mxu0 0.0
    %1607 = vmatprep.subr.mxu0 0.0
    %1608 = vmatpush1.msra.mxu0 0.0
    %1609 = vmatprep.subr.mxu0 0.0
    %1610 = vmatpush1.msra.mxu0 0.0
    %1611 = vmatprep.subr.mxu0 0.0
    %1612 = vmatpush1.msra.mxu0 0.0
    %1613 = vmatprep.mubr.f32.mxu0 0.0
    %1614 = vmatmul.mubr.f32.gmra.mrb[0].mxu0 %v1351
    %v1615 = vpop.f32.mrb[0].mxu0
    %v1616 = vadd.f32 %v688, %v1615
    %v1617 = vpop.f32.mrb[0].mxu0
    %v1618 = vadd.f32 %v692, %v1617
    %1619 = vdwg.mxu0
    %1620 = vmatprep.subr.mxu0 0.0
    %1621 = vmatpush1.msra.mxu0 %v479
    %1622 = vmatprep.subr.mxu0 0.0
    %1623 = vmatpush1.msra.mxu0 %v482
    %1624 = vmatprep.subr.mxu0 0.0
    %1625 = vmatpush1.msra.mxu0 %v485
    %1626 = vmatprep.subr.mxu0 0.0
    %1627 = vmatpush1.msra.mxu0 %v488
    %1628 = vmatprep.subr.mxu0 0.0
    %1629 = vmatpush1.msra.mxu0 %v491
    %1630 = vmatprep.subr.mxu0 0.0
    %1631 = vmatpush1.msra.mxu0 %v494
    %1632 = vmatprep.subr.mxu0 0.0
    %1633 = vmatpush1.msra.mxu0 %v497
    %1634 = vmatprep.subr.mxu0 0.0
    %1635 = vmatpush1.msra.mxu0 %v500
    %1636 = vmatprep.subr.mxu0 0.0
    %1637 = vmatpush1.msra.mxu0 %v503
    %1638 = vmatprep.subr.mxu0 0.0
    %1639 = vmatpush1.msra.mxu0 %v506
    %1640 = vmatprep.subr.mxu0 0.0
    %1641 = vmatpush1.msra.mxu0 %v509
    %1642 = vmatprep.subr.mxu0 0.0
    %1643 = vmatpush1.msra.mxu0 %v512
    %1644 = vmatprep.subr.mxu0 0.0
    %1645 = vmatpush1.msra.mxu0 %v515
    %1646 = vmatprep.subr.mxu0 0.0
    %1647 = vmatpush1.msra.mxu0 %v518
    %1648 = vmatprep.subr.mxu0 0.0
    %1649 = vmatpush1.msra.mxu0 %v521
    %1650 = vmatprep.subr.mxu0 0.0
    %1651 = vmatpush1.msra.mxu0 %v524
    %1652 = vmatprep.subr.mxu0 0.0
    %1653 = vmatpush1.msra.mxu0 0.0
    %1654 = vmatprep.subr.mxu0 0.0
    %1655 = vmatpush1.msra.mxu0 0.0
    %1656 = vmatprep.subr.mxu0 0.0
    %1657 = vmatpush1.msra.mxu0 0.0
    %1658 = vmatprep.subr.mxu0 0.0
    %1659 = vmatpush1.msra.mxu0 0.0
    %1660 = vmatprep.subr.mxu0 0.0
    %1661 = vmatpush1.msra.mxu0 0.0
    %1662 = vmatprep.subr.mxu0 0.0
    %1663 = vmatpush1.msra.mxu0 0.0
    %1664 = vmatprep.subr.mxu0 0.0
    %1665 = vmatpush1.msra.mxu0 0.0
    %1666 = vmatprep.subr.mxu0 0.0
    %1667 = vmatpush1.msra.mxu0 0.0
    %1668 = vmatprep.subr.mxu0 0.0
    %1669 = vmatpush1.msra.mxu0 0.0
    %1670 = vmatprep.subr.mxu0 0.0
    %1671 = vmatpush1.msra.mxu0 0.0
    %1672 = vmatprep.subr.mxu0 0.0
    %1673 = vmatpush1.msra.mxu0 0.0
    %1674 = vmatprep.subr.mxu0 0.0
    %1675 = vmatpush1.msra.mxu0 0.0
    %1676 = vmatprep.subr.mxu0 0.0
    %1677 = vmatpush1.msra.mxu0 0.0
    %1678 = vmatprep.subr.mxu0 0.0
    %1679 = vmatpush1.msra.mxu0 0.0
    %1680 = vmatprep.subr.mxu0 0.0
    %1681 = vmatpush1.msra.mxu0 0.0
    %1682 = vmatprep.subr.mxu0 0.0
    %1683 = vmatpush1.msra.mxu0 0.0
    %1684 = vmatprep.mubr.f32.mxu0 0.0
    %1685 = vmatmul.mubr.f32.gmra.mrb[0].mxu0 %v1351
    %v1686 = vpop.f32.mrb[0].mxu0
    %v1687 = vadd.f32 %v696, %v1686
    %v1688 = vpop.f32.mrb[0].mxu0
    %1689 = vdwg.mxu0
    %v1691 = vrot.slane %v1475, 4
    %v1693 = vadd.f32 %v264, %v1691
    %v1694 = vxor.u32 %v1693, 2147483648
    %v1695 = vmul.f32 %v1694, 1.442695
    %v1696 = vpow.pop %v1695
    %v1697 = vadd.f32 %v1696, 1.0
    %v1698 = vrcp.pop %v1697
    %v1699 = vmul.f32 1.0, %v1698
    %v1701 = vrot.slane %v1477, 4
    %v1703 = vadd.f32 %v266, %v1701
    %v1704 = vxor.u32 %v1703, 2147483648
    %v1705 = vmul.f32 %v1704, 1.442695
    %v1706 = vpow.pop %v1705
    %v1707 = vadd.f32 %v1706, 1.0
    %v1708 = vrcp.pop %v1707
    %v1709 = vmul.f32 1.0, %v1708
    %v1711 = vrot.slane %v1546, 4
    %v1713 = vmul.f32 %v1699, %v1711
    %v1714 = vadd.f32 %v341, %v1713
    %v1715 = vtanh.pop %v1714
    %v1716 = vsub.f32 1.0, %v1709
    %v1717 = vmul.f32 %v1716, %v1715
    %v1719 = vrot.slane %v1304, 4
    %v1721 = vmul.f32 %v1709, %v1719
    %v1722 = vadd.f32 %v1717, %v1721
    %1723 = vset.pattern.permute.xlu0 2
    %1724 = vperm.xlu0 %1723, %v526
    %v1725 = vpop.permute.xlu0 %1724
    %v1728 = vrot.slane %v1722, 4
    %v1730 = vmul.f32 %v1725, %v1728
    %1731 = vset.pattern.permute.xlu0 2
    %1732 = vperm.xlu0 %1731, %v868
    %v1733 = vpop.permute.xlu0 %1732
    %v1735 = vmul.f32 %v1733, %v1304
    %v1736 = vadd.f32 %v1730, %v1735
    %v1738 = vrot.slane %v1616, 6
    %v1740 = vadd.f32 %v349, %v1738
    %v1741 = vxor.u32 %v1740, 2147483648
    %v1742 = vmul.f32 %v1741, 1.442695
    %v1743 = vpow.pop %v1742
    %v1744 = vadd.f32 %v1743, 1.0
    %v1745 = vrcp.pop %v1744
    %v1746 = vmul.f32 1.0, %v1745
    %v1748 = vrot.slane %v1618, 6
    %v1750 = vadd.f32 %v424, %v1748
    %v1751 = vxor.u32 %v1750, 2147483648
    %v1752 = vmul.f32 %v1751, 1.442695
    %v1753 = vpow.pop %v1752
    %v1754 = vadd.f32 %v1753, 1.0
    %v1755 = vrcp.pop %v1754
    %v1756 = vmul.f32 1.0, %v1755
    %v1758 = vrot.slane %v1687, 6
    %v1760 = vmul.f32 %v1746, %v1758
    %v1761 = vadd.f32 %v426, %v1760
    %v1762 = vtanh.pop %v1761
    %v1763 = vsub.f32 1.0, %v1756
    %v1764 = vmul.f32 %v1763, %v1762
    %v1766 = vrot.slane %v1351, 6
    %v1768 = vmul.f32 %v1756, %v1766
    %v1769 = vadd.f32 %v1764, %v1768
    %1770 = vset.pattern.permute.xlu0 5
    %1771 = vperm.xlu0 %1770, %v526
    %v1772 = vpop.permute.xlu0 %1771
    %v1775 = vrot.slane %v1769, 2
    %v1777 = vmul.f32 %v1772, %v1775
    %1778 = vset.pattern.permute.xlu0 5
    %1779 = vperm.xlu0 %1778, %v868
    %v1780 = vpop.permute.xlu0 %1779
    %v1782 = vmul.f32 %v1780, %v1351
    %v1783 = vadd.f32 %v1777, %v1782
    %v1784 = vmul.f32 %v1725, %v1736
    %v1787 = vunpack.c.l.s4 1966171168
    %v1788 = vunpack.c.0.s8 %v1787
    %v1789 = vlaneseq
    %v1790 = vshrl.u32 %v1789, 7
    %v1791 = vsub.s32 %v1788, %v1790
    %v1792 = vrot.slane %v1784, %v1791
    %v1793 = vcombine.high %v1792, %v1792
    %v1795 = vunpack.c.l.s4 1966171168
    %v1796 = vunpack.c.0.s8 %v1795
    %v1797 = vlaneseq
    %v1798 = vshrl.u32 %v1797, 7
    %v1799 = vsub.s32 %v1796, %v1798
    %v1800 = vrot.slane %v1792, %v1799
    %v1802 = vunpack.c.l.s4 1966171168
    %v1803 = vunpack.c.0.s8 %v1802
    %v1804 = vlaneseq
    %v1805 = vshrl.u32 %v1804, 7
    %v1806 = vsub.s32 %v1803, %v1805
    %v1807 = vrot.slane %v1793, %v1806
    %1810 = vst [vmem:[#allocation14 + $0x2] sm:$0x1] %v1800
    %1811 = vst [vmem:[#allocation14 + $0x12] sm:$0x1] %v1807
    %v1812 = vmul.f32 %v1772, %v1783
    %v1815 = vunpack.c.l.s4 1966171168
    %v1816 = vunpack.c.0.s8 %v1815
    %v1817 = vlaneseq
    %v1818 = vshrl.u32 %v1817, 7
    %v1819 = vsub.s32 %v1816, %v1818
    %v1820 = vrot.slane %v1812, %v1819
    %v1821 = vcombine.high %v1820, %v1820
    %v1823 = vunpack.c.l.s4 1966171168
    %v1824 = vunpack.c.0.s8 %v1823
    %v1825 = vlaneseq
    %v1826 = vshrl.u32 %v1825, 7
    %v1827 = vsub.s32 %v1824, %v1826
    %v1828 = vrot.slane %v1820, %v1827
    %v1830 = vunpack.c.l.s4 1966171168
    %v1831 = vunpack.c.0.s8 %v1830
    %v1832 = vlaneseq
    %v1833 = vshrl.u32 %v1832, 7
    %v1834 = vsub.s32 %v1831, %v1833
    %v1835 = vrot.slane %v1821, %v1834
    %1838 = vst [vmem:[#allocation14 + $0xd] sm:$0x1] %v1828
    %1839 = vst [vmem:[#allocation14 + $0x1d] sm:$0x1] %v1835
    %1840 = vmatprep.subr.mxu0 %v429
    %1841 = vmatpush1.msra.mxu0 %v428
    %1842 = vmatprep.subr.mxu0 %v432
    %1843 = vmatpush1.msra.mxu0 %v431
    %1844 = vmatprep.subr.mxu0 %v435
    %1845 = vmatpush1.msra.mxu0 %v434
    %1846 = vmatprep.subr.mxu0 %v438
    %1847 = vmatpush1.msra.mxu0 %v437
    %1848 = vmatprep.subr.mxu0 %v441
    %1849 = vmatpush1.msra.mxu0 %v440
    %1850 = vmatprep.subr.mxu0 %v444
    %1851 = vmatpush1.msra.mxu0 %v443
    %1852 = vmatprep.subr.mxu0 %v447
    %1853 = vmatpush1.msra.mxu0 %v446
    %1854 = vmatprep.subr.mxu0 %v450
    %1855 = vmatpush1.msra.mxu0 %v449
    %1856 = vmatprep.subr.mxu0 %v453
    %1857 = vmatpush1.msra.mxu0 %v452
    %1858 = vmatprep.subr.mxu0 %v456
    %1859 = vmatpush1.msra.mxu0 %v455
    %1860 = vmatprep.subr.mxu0 %v459
    %1861 = vmatpush1.msra.mxu0 %v458
    %1862 = vmatprep.subr.mxu0 %v462
    %1863 = vmatpush1.msra.mxu0 %v461
    %1864 = vmatprep.subr.mxu0 %v465
    %1865 = vmatpush1.msra.mxu0 %v464
    %1866 = vmatprep.subr.mxu0 %v468
    %1867 = vmatpush1.msra.mxu0 %v467
    %1868 = vmatprep.subr.mxu0 %v471
    %1869 = vmatpush1.msra.mxu0 %v470
    %1870 = vmatprep.subr.mxu0 %v474
    %1871 = vmatpush1.msra.mxu0 %v473
    %1872 = vmatprep.subr.mxu0 0.0
    %1873 = vmatpush1.msra.mxu0 0.0
    %1874 = vmatprep.subr.mxu0 0.0
    %1875 = vmatpush1.msra.mxu0 0.0
    %1876 = vmatprep.subr.mxu0 0.0
    %1877 = vmatpush1.msra.mxu0 0.0
    %1878 = vmatprep.subr.mxu0 0.0
    %1879 = vmatpush1.msra.mxu0 0.0
    %1880 = vmatprep.subr.mxu0 0.0
    %1881 = vmatpush1.msra.mxu0 0.0
    %1882 = vmatprep.subr.mxu0 0.0
    %1883 = vmatpush1.msra.mxu0 0.0
    %1884 = vmatprep.subr.mxu0 0.0
    %1885 = vmatpush1.msra.mxu0 0.0
    %1886 = vmatprep.subr.mxu0 0.0
    %1887 = vmatpush1.msra.mxu0 0.0
    %1888 = vmatprep.subr.mxu0 0.0
    %1889 = vmatpush1.msra.mxu0 0.0
    %1890 = vmatprep.subr.mxu0 0.0
    %1891 = vmatpush1.msra.mxu0 0.0
    %1892 = vmatprep.subr.mxu0 0.0
    %1893 = vmatpush1.msra.mxu0 0.0
    %1894 = vmatprep.subr.mxu0 0.0
    %1895 = vmatpush1.msra.mxu0 0.0
    %1896 = vmatprep.subr.mxu0 0.0
    %1897 = vmatpush1.msra.mxu0 0.0
    %1898 = vmatprep.subr.mxu0 0.0
    %1899 = vmatpush1.msra.mxu0 0.0
    %1900 = vmatprep.subr.mxu0 0.0
    %1901 = vmatpush1.msra.mxu0 0.0
    %1902 = vmatprep.subr.mxu0 0.0
    %1903 = vmatpush1.msra.mxu0 0.0
    %1904 = vmatprep.mubr.f32.mxu0 0.0
    %1905 = vmatmul.mubr.f32.gmra.mrb[0].mxu0 %v1736
    %v1906 = vpop.f32.mrb[0].mxu0
    %v1907 = vadd.f32 %v531, %v1906
    %v1908 = vpop.f32.mrb[0].mxu0
    %v1909 = vadd.f32 %v535, %v1908
    %1910 = vdwg.mxu0
    %1911 = vmatprep.subr.mxu0 0.0
    %1912 = vmatpush1.msra.mxu0 %v430
    %1913 = vmatprep.subr.mxu0 0.0
    %1914 = vmatpush1.msra.mxu0 %v433
    %1915 = vmatprep.subr.mxu0 0.0
    %1916 = vmatpush1.msra.mxu0 %v436
    %1917 = vmatprep.subr.mxu0 0.0
    %1918 = vmatpush1.msra.mxu0 %v439
    %1919 = vmatprep.subr.mxu0 0.0
    %1920 = vmatpush1.msra.mxu0 %v442
    %1921 = vmatprep.subr.mxu0 0.0
    %1922 = vmatpush1.msra.mxu0 %v445
    %1923 = vmatprep.subr.mxu0 0.0
    %1924 = vmatpush1.msra.mxu0 %v448
    %1925 = vmatprep.subr.mxu0 0.0
    %1926 = vmatpush1.msra.mxu0 %v451
    %1927 = vmatprep.subr.mxu0 0.0
    %1928 = vmatpush1.msra.mxu0 %v454
    %1929 = vmatprep.subr.mxu0 0.0
    %1930 = vmatpush1.msra.mxu0 %v457
    %1931 = vmatprep.subr.mxu0 0.0
    %1932 = vmatpush1.msra.mxu0 %v460
    %1933 = vmatprep.subr.mxu0 0.0
    %1934 = vmatpush1.msra.mxu0 %v463
    %1935 = vmatprep.subr.mxu0 0.0
    %1936 = vmatpush1.msra.mxu0 %v466
    %1937 = vmatprep.subr.mxu0 0.0
    %1938 = vmatpush1.msra.mxu0 %v469
    %1939 = vmatprep.subr.mxu0 0.0
    %1940 = vmatpush1.msra.mxu0 %v472
    %1941 = vmatprep.subr.mxu0 0.0
    %1942 = vmatpush1.msra.mxu0 %v475
    %1943 = vmatprep.subr.mxu0 0.0
    %1944 = vmatpush1.msra.mxu0 0.0
    %1945 = vmatprep.subr.mxu0 0.0
    %1946 = vmatpush1.msra.mxu0 0.0
    %1947 = vmatprep.subr.mxu0 0.0
    %1948 = vmatpush1.msra.mxu0 0.0
    %1949 = vmatprep.subr.mxu0 0.0
    %1950 = vmatpush1.msra.mxu0 0.0
    %1951 = vmatprep.subr.mxu0 0.0
    %1952 = vmatpush1.msra.mxu0 0.0
    %1953 = vmatprep.subr.mxu0 0.0
    %1954 = vmatpush1.msra.mxu0 0.0
    %1955 = vmatprep.subr.mxu0 0.0
    %1956 = vmatpush1.msra.mxu0 0.0
    %1957 = vmatprep.subr.mxu0 0.0
    %1958 = vmatpush1.msra.mxu0 0.0
    %1959 = vmatprep.subr.mxu0 0.0
    %1960 = vmatpush1.msra.mxu0 0.0
    %1961 = vmatprep.subr.mxu0 0.0
    %1962 = vmatpush1.msra.mxu0 0.0
    %1963 = vmatprep.subr.mxu0 0.0
    %1964 = vmatpush1.msra.mxu0 0.0
    %1965 = vmatprep.subr.mxu0 0.0
    %1966 = vmatpush1.msra.mxu0 0.0
    %1967 = vmatprep.subr.mxu0 0.0
    %1968 = vmatpush1.msra.mxu0 0.0
    %1969 = vmatprep.subr.mxu0 0.0
    %1970 = vmatpush1.msra.mxu0 0.0
    %1971 = vmatprep.subr.mxu0 0.0
    %1972 = vmatpush1.msra.mxu0 0.0
    %1973 = vmatprep.subr.mxu0 0.0
    %1974 = vmatpush1.msra.mxu0 0.0
    %1975 = vmatprep.mubr.f32.mxu0 0.0
    %1976 = vmatmul.mubr.f32.gmra.mrb[0].mxu0 %v1736
    %v1977 = vpop.f32.mrb[0].mxu0
    %v1978 = vadd.f32 %v539, %v1977
    %v1979 = vpop.f32.mrb[0].mxu0
    %1980 = vdwg.mxu0
    %1981 = vmatprep.subr.mxu0 %v478
    %1982 = vmatpush1.msra.mxu0 %v477
    %1983 = vmatprep.subr.mxu0 %v481
    %1984 = vmatpush1.msra.mxu0 %v480
    %1985 = vmatprep.subr.mxu0 %v484
    %1986 = vmatpush1.msra.mxu0 %v483
    %1987 = vmatprep.subr.mxu0 %v487
    %1988 = vmatpush1.msra.mxu0 %v486
    %1989 = vmatprep.subr.mxu0 %v490
    %1990 = vmatpush1.msra.mxu0 %v489
    %1991 = vmatprep.subr.mxu0 %v493
    %1992 = vmatpush1.msra.mxu0 %v492
    %1993 = vmatprep.subr.mxu0 %v496
    %1994 = vmatpush1.msra.mxu0 %v495
    %1995 = vmatprep.subr.mxu0 %v499
    %1996 = vmatpush1.msra.mxu0 %v498
    %1997 = vmatprep.subr.mxu0 %v502
    %1998 = vmatpush1.msra.mxu0 %v501
    %1999 = vmatprep.subr.mxu0 %v505
    %2000 = vmatpush1.msra.mxu0 %v504
    %2001 = vmatprep.subr.mxu0 %v508
    %2002 = vmatpush1.msra.mxu0 %v507
    %2003 = vmatprep.subr.mxu0 %v511
    %2004 = vmatpush1.msra.mxu0 %v510
    %2005 = vmatprep.subr.mxu0 %v514
    %2006 = vmatpush1.msra.mxu0 %v513
    %2007 = vmatprep.subr.mxu0 %v517
    %2008 = vmatpush1.msra.mxu0 %v516
    %2009 = vmatprep.subr.mxu0 %v520
    %2010 = vmatpush1.msra.mxu0 %v519
    %2011 = vmatprep.subr.mxu0 %v523
    %2012 = vmatpush1.msra.mxu0 %v522
    %2013 = vmatprep.subr.mxu0 0.0
    %2014 = vmatpush1.msra.mxu0 0.0
    %2015 = vmatprep.subr.mxu0 0.0
    %2016 = vmatpush1.msra.mxu0 0.0
    %2017 = vmatprep.subr.mxu0 0.0
    %2018 = vmatpush1.msra.mxu0 0.0
    %2019 = vmatprep.subr.mxu0 0.0
    %2020 = vmatpush1.msra.mxu0 0.0
    %2021 = vmatprep.subr.mxu0 0.0
    %2022 = vmatpush1.msra.mxu0 0.0
    %2023 = vmatprep.subr.mxu0 0.0
    %2024 = vmatpush1.msra.mxu0 0.0
    %2025 = vmatprep.subr.mxu0 0.0
    %2026 = vmatpush1.msra.mxu0 0.0
    %2027 = vmatprep.subr.mxu0 0.0
    %2028 = vmatpush1.msra.mxu0 0.0
    %2029 = vmatprep.subr.mxu0 0.0
    %2030 = vmatpush1.msra.mxu0 0.0
    %2031 = vmatprep.subr.mxu0 0.0
    %2032 = vmatpush1.msra.mxu0 0.0
    %2033 = vmatprep.subr.mxu0 0.0
    %2034 = vmatpush1.msra.mxu0 0.0
    %2035 = vmatprep.subr.mxu0 0.0
    %2036 = vmatpush1.msra.mxu0 0.0
    %2037 = vmatprep.subr.mxu0 0.0
    %2038 = vmatpush1.msra.mxu0 0.0
    %2039 = vmatprep.subr.mxu0 0.0
    %2040 = vmatpush1.msra.mxu0 0.0
    %2041 = vmatprep.subr.mxu0 0.0
    %2042 = vmatpush1.msra.mxu0 0.0
    %2043 = vmatprep.subr.mxu0 0.0
    %2044 = vmatpush1.msra.mxu0 0.0
    %2045 = vmatprep.mubr.f32.mxu0 0.0
    %2046 = vmatmul.mubr.f32.gmra.mrb[0].mxu0 %v1783
    %v2047 = vpop.f32.mrb[0].mxu0
    %v2048 = vadd.f32 %v688, %v2047
    %v2049 = vpop.f32.mrb[0].mxu0
    %v2050 = vadd.f32 %v692, %v2049
    %2051 = vdwg.mxu0
    %2052 = vmatprep.subr.mxu0 0.0
    %2053 = vmatpush1.msra.mxu0 %v479
    %2054 = vmatprep.subr.mxu0 0.0
    %2055 = vmatpush1.msra.mxu0 %v482
    %2056 = vmatprep.subr.mxu0 0.0
    %2057 = vmatpush1.msra.mxu0 %v485
    %2058 = vmatprep.subr.mxu0 0.0
    %2059 = vmatpush1.msra.mxu0 %v488
    %2060 = vmatprep.subr.mxu0 0.0
    %2061 = vmatpush1.msra.mxu0 %v491
    %2062 = vmatprep.subr.mxu0 0.0
    %2063 = vmatpush1.msra.mxu0 %v494
    %2064 = vmatprep.subr.mxu0 0.0
    %2065 = vmatpush1.msra.mxu0 %v497
    %2066 = vmatprep.subr.mxu0 0.0
    %2067 = vmatpush1.msra.mxu0 %v500
    %2068 = vmatprep.subr.mxu0 0.0
    %2069 = vmatpush1.msra.mxu0 %v503
    %2070 = vmatprep.subr.mxu0 0.0
    %2071 = vmatpush1.msra.mxu0 %v506
    %2072 = vmatprep.subr.mxu0 0.0
    %2073 = vmatpush1.msra.mxu0 %v509
    %2074 = vmatprep.subr.mxu0 0.0
    %2075 = vmatpush1.msra.mxu0 %v512
    %2076 = vmatprep.subr.mxu0 0.0
    %2077 = vmatpush1.msra.mxu0 %v515
    %2078 = vmatprep.subr.mxu0 0.0
    %2079 = vmatpush1.msra.mxu0 %v518
    %2080 = vmatprep.subr.mxu0 0.0
    %2081 = vmatpush1.msra.mxu0 %v521
    %2082 = vmatprep.subr.mxu0 0.0
    %2083 = vmatpush1.msra.mxu0 %v524
    %2084 = vmatprep.subr.mxu0 0.0
    %2085 = vmatpush1.msra.mxu0 0.0
    %2086 = vmatprep.subr.mxu0 0.0
    %2087 = vmatpush1.msra.mxu0 0.0
    %2088 = vmatprep.subr.mxu0 0.0
    %2089 = vmatpush1.msra.mxu0 0.0
    %2090 = vmatprep.subr.mxu0 0.0
    %2091 = vmatpush1.msra.mxu0 0.0
    %2092 = vmatprep.subr.mxu0 0.0
    %2093 = vmatpush1.msra.mxu0 0.0
    %2094 = vmatprep.subr.mxu0 0.0
    %2095 = vmatpush1.msra.mxu0 0.0
    %2096 = vmatprep.subr.mxu0 0.0
    %2097 = vmatpush1.msra.mxu0 0.0
    %2098 = vmatprep.subr.mxu0 0.0
    %2099 = vmatpush1.msra.mxu0 0.0
    %2100 = vmatprep.subr.mxu0 0.0
    %2101 = vmatpush1.msra.mxu0 0.0
    %2102 = vmatprep.subr.mxu0 0.0
    %2103 = vmatpush1.msra.mxu0 0.0
    %2104 = vmatprep.subr.mxu0 0.0
    %2105 = vmatpush1.msra.mxu0 0.0
    %2106 = vmatprep.subr.mxu0 0.0
    %2107 = vmatpush1.msra.mxu0 0.0
    %2108 = vmatprep.subr.mxu0 0.0
    %2109 = vmatpush1.msra.mxu0 0.0
    %2110 = vmatprep.subr.mxu0 0.0
    %2111 = vmatpush1.msra.mxu0 0.0
    %2112 = vmatprep.subr.mxu0 0.0
    %2113 = vmatpush1.msra.mxu0 0.0
    %2114 = vmatprep.subr.mxu0 0.0
    %2115 = vmatpush1.msra.mxu0 0.0
    %2116 = vmatprep.mubr.f32.mxu0 0.0
    %2117 = vmatmul.mubr.f32.gmra.mrb[0].mxu0 %v1783
    %v2118 = vpop.f32.mrb[0].mxu0
    %v2119 = vadd.f32 %v696, %v2118
    %v2120 = vpop.f32.mrb[0].mxu0
    %2121 = vdwg.mxu0
    %v2123 = vrot.slane %v1907, 2
    %v2125 = vadd.f32 %v264, %v2123
    %v2126 = vxor.u32 %v2125, 2147483648
    %v2127 = vmul.f32 %v2126, 1.442695
    %v2128 = vpow.pop %v2127
    %v2129 = vadd.f32 %v2128, 1.0
    %v2130 = vrcp.pop %v2129
    %v2131 = vmul.f32 1.0, %v2130
    %v2133 = vrot.slane %v1909, 2
    %v2135 = vadd.f32 %v266, %v2133
    %v2136 = vxor.u32 %v2135, 2147483648
    %v2137 = vmul.f32 %v2136, 1.442695
    %v2138 = vpow.pop %v2137
    %v2139 = vadd.f32 %v2138, 1.0
    %v2140 = vrcp.pop %v2139
    %v2141 = vmul.f32 1.0, %v2140
    %v2143 = vrot.slane %v1978, 2
    %v2145 = vmul.f32 %v2131, %v2143
    %v2146 = vadd.f32 %v341, %v2145
    %v2147 = vtanh.pop %v2146
    %v2148 = vsub.f32 1.0, %v2141
    %v2149 = vmul.f32 %v2148, %v2147
    %v2151 = vrot.slane %v1736, 2
    %v2153 = vmul.f32 %v2141, %v2151
    %v2154 = vadd.f32 %v2149, %v2153
    %2155 = vset.pattern.permute.xlu0 3
    %2156 = vperm.xlu0 %2155, %v526
    %v2157 = vpop.permute.xlu0 %2156
    %v2160 = vrot.slane %v2154, 6
    %v2162 = vmul.f32 %v2157, %v2160
    %2163 = vset.pattern.permute.xlu0 3
    %2164 = vperm.xlu0 %2163, %v868
    %v2165 = vpop.permute.xlu0 %2164
    %v2167 = vmul.f32 %v2165, %v1736
    %v2168 = vadd.f32 %v2162, %v2167
    %v2169 = vadd.f32 %v349, %v2048
    %v2170 = vxor.u32 %v2169, 2147483648
    %v2171 = vmul.f32 %v2170, 1.442695
    %v2172 = vpow.pop %v2171
    %v2173 = vadd.f32 %v2172, 1.0
    %v2174 = vrcp.pop %v2173
    %v2175 = vmul.f32 1.0, %v2174
    %v2176 = vadd.f32 %v424, %v2050
    %v2177 = vxor.u32 %v2176, 2147483648
    %v2178 = vmul.f32 %v2177, 1.442695
    %v2179 = vpow.pop %v2178
    %v2180 = vadd.f32 %v2179, 1.0
    %v2181 = vrcp.pop %v2180
    %v2182 = vmul.f32 1.0, %v2181
    %v2183 = vmul.f32 %v2175, %v2119
    %v2184 = vadd.f32 %v426, %v2183
    %v2185 = vtanh.pop %v2184
    %v2186 = vsub.f32 1.0, %v2182
    %v2187 = vmul.f32 %v2186, %v2185
    %v2188 = vmul.f32 %v2182, %v1783
    %v2189 = vadd.f32 %v2187, %v2188
    %2190 = vset.pattern.permute.xlu0 4
    %2191 = vperm.xlu0 %2190, %v526
    %v2192 = vpop.permute.xlu0 %2191
    %v2194 = vmul.f32 %v2192, %v2189
    %2195 = vset.pattern.permute.xlu0 4
    %2196 = vperm.xlu0 %2195, %v868
    %v2197 = vpop.permute.xlu0 %2196
    %v2199 = vmul.f32 %v2197, %v1783
    %v2200 = vadd.f32 %v2194, %v2199
    %v2201 = vmul.f32 %v2157, %v2168
    %v2204 = vunpack.c.l.s4 1966171168
    %v2205 = vunpack.c.0.s8 %v2204
    %v2206 = vlaneseq
    %v2207 = vshrl.u32 %v2206, 7
    %v2208 = vsub.s32 %v2205, %v2207
    %v2209 = vrot.slane %v2201, %v2208
    %v2210 = vcombine.high %v2209, %v2209
    %v2212 = vunpack.c.l.s4 1966171168
    %v2213 = vunpack.c.0.s8 %v2212
    %v2214 = vlaneseq
    %v2215 = vshrl.u32 %v2214, 7
    %v2216 = vsub.s32 %v2213, %v2215
    %v2217 = vrot.slane %v2209, %v2216
    %v2219 = vunpack.c.l.s4 1966171168
    %v2220 = vunpack.c.0.s8 %v2219
    %v2221 = vlaneseq
    %v2222 = vshrl.u32 %v2221, 7
    %v2223 = vsub.s32 %v2220, %v2222
    %v2224 = vrot.slane %v2210, %v2223
    %2227 = vst [vmem:[#allocation14 + $0x3] sm:$0x1] %v2217
    %2228 = vst [vmem:[#allocation14 + $0x13] sm:$0x1] %v2224
    %v2229 = vmul.f32 %v2192, %v2200
    %v2232 = vunpack.c.l.s4 1966171168
    %v2233 = vunpack.c.0.s8 %v2232
    %v2234 = vlaneseq
    %v2235 = vshrl.u32 %v2234, 7
    %v2236 = vsub.s32 %v2233, %v2235
    %v2237 = vrot.slane %v2229, %v2236
    %v2238 = vcombine.high %v2237, %v2237
    %v2240 = vunpack.c.l.s4 1966171168
    %v2241 = vunpack.c.0.s8 %v2240
    %v2242 = vlaneseq
    %v2243 = vshrl.u32 %v2242, 7
    %v2244 = vsub.s32 %v2241, %v2243
    %v2245 = vrot.slane %v2237, %v2244
    %v2247 = vunpack.c.l.s4 1966171168
    %v2248 = vunpack.c.0.s8 %v2247
    %v2249 = vlaneseq
    %v2250 = vshrl.u32 %v2249, 7
    %v2251 = vsub.s32 %v2248, %v2250
    %v2252 = vrot.slane %v2238, %v2251
    %2255 = vst [vmem:[#allocation14 + $0xc] sm:$0x1] %v2245
    %2256 = vst [vmem:[#allocation14 + $0x1c] sm:$0x1] %v2252
    %2257 = vmatprep.subr.mxu0 %v429
    %2258 = vmatpush1.msra.mxu0 %v428
    %2259 = vmatprep.subr.mxu0 %v432
    %2260 = vmatpush1.msra.mxu0 %v431
    %2261 = vmatprep.subr.mxu0 %v435
    %2262 = vmatpush1.msra.mxu0 %v434
    %2263 = vmatprep.subr.mxu0 %v438
    %2264 = vmatpush1.msra.mxu0 %v437
    %2265 = vmatprep.subr.mxu0 %v441
    %2266 = vmatpush1.msra.mxu0 %v440
    %2267 = vmatprep.subr.mxu0 %v444
    %2268 = vmatpush1.msra.mxu0 %v443
    %2269 = vmatprep.subr.mxu0 %v447
    %2270 = vmatpush1.msra.mxu0 %v446
    %2271 = vmatprep.subr.mxu0 %v450
    %2272 = vmatpush1.msra.mxu0 %v449
    %2273 = vmatprep.subr.mxu0 %v453
    %2274 = vmatpush1.msra.mxu0 %v452
    %2275 = vmatprep.subr.mxu0 %v456
    %2276 = vmatpush1.msra.mxu0 %v455
    %2277 = vmatprep.subr.mxu0 %v459
    %2278 = vmatpush1.msra.mxu0 %v458
    %2279 = vmatprep.subr.mxu0 %v462
    %2280 = vmatpush1.msra.mxu0 %v461
    %2281 = vmatprep.subr.mxu0 %v465
    %2282 = vmatpush1.msra.mxu0 %v464
    %2283 = vmatprep.subr.mxu0 %v468
    %2284 = vmatpush1.msra.mxu0 %v467
    %2285 = vmatprep.subr.mxu0 %v471
    %2286 = vmatpush1.msra.mxu0 %v470
    %2287 = vmatprep.subr.mxu0 %v474
    %2288 = vmatpush1.msra.mxu0 %v473
    %2289 = vmatprep.subr.mxu0 0.0
    %2290 = vmatpush1.msra.mxu0 0.0
    %2291 = vmatprep.subr.mxu0 0.0
    %2292 = vmatpush1.msra.mxu0 0.0
    %2293 = vmatprep.subr.mxu0 0.0
    %2294 = vmatpush1.msra.mxu0 0.0
    %2295 = vmatprep.subr.mxu0 0.0
    %2296 = vmatpush1.msra.mxu0 0.0
    %2297 = vmatprep.subr.mxu0 0.0
    %2298 = vmatpush1.msra.mxu0 0.0
    %2299 = vmatprep.subr.mxu0 0.0
    %2300 = vmatpush1.msra.mxu0 0.0
    %2301 = vmatprep.subr.mxu0 0.0
    %2302 = vmatpush1.msra.mxu0 0.0
    %2303 = vmatprep.subr.mxu0 0.0
    %2304 = vmatpush1.msra.mxu0 0.0
    %2305 = vmatprep.subr.mxu0 0.0
    %2306 = vmatpush1.msra.mxu0 0.0
    %2307 = vmatprep.subr.mxu0 0.0
    %2308 = vmatpush1.msra.mxu0 0.0
    %2309 = vmatprep.subr.mxu0 0.0
    %2310 = vmatpush1.msra.mxu0 0.0
    %2311 = vmatprep.subr.mxu0 0.0
    %2312 = vmatpush1.msra.mxu0 0.0
    %2313 = vmatprep.subr.mxu0 0.0
    %2314 = vmatpush1.msra.mxu0 0.0
    %2315 = vmatprep.subr.mxu0 0.0
    %2316 = vmatpush1.msra.mxu0 0.0
    %2317 = vmatprep.subr.mxu0 0.0
    %2318 = vmatpush1.msra.mxu0 0.0
    %2319 = vmatprep.subr.mxu0 0.0
    %2320 = vmatpush1.msra.mxu0 0.0
    %2321 = vmatprep.mubr.f32.mxu0 0.0
    %2322 = vmatmul.mubr.f32.gmra.mrb[0].mxu0 %v2168
    %v2323 = vpop.f32.mrb[0].mxu0
    %v2324 = vadd.f32 %v531, %v2323
    %v2325 = vpop.f32.mrb[0].mxu0
    %v2326 = vadd.f32 %v535, %v2325
    %2327 = vdwg.mxu0
    %2328 = vmatprep.subr.mxu0 0.0
    %2329 = vmatpush1.msra.mxu0 %v430
    %2330 = vmatprep.subr.mxu0 0.0
    %2331 = vmatpush1.msra.mxu0 %v433
    %2332 = vmatprep.subr.mxu0 0.0
    %2333 = vmatpush1.msra.mxu0 %v436
    %2334 = vmatprep.subr.mxu0 0.0
    %2335 = vmatpush1.msra.mxu0 %v439
    %2336 = vmatprep.subr.mxu0 0.0
    %2337 = vmatpush1.msra.mxu0 %v442
    %2338 = vmatprep.subr.mxu0 0.0
    %2339 = vmatpush1.msra.mxu0 %v445
    %2340 = vmatprep.subr.mxu0 0.0
    %2341 = vmatpush1.msra.mxu0 %v448
    %2342 = vmatprep.subr.mxu0 0.0
    %2343 = vmatpush1.msra.mxu0 %v451
    %2344 = vmatprep.subr.mxu0 0.0
    %2345 = vmatpush1.msra.mxu0 %v454
    %2346 = vmatprep.subr.mxu0 0.0
    %2347 = vmatpush1.msra.mxu0 %v457
    %2348 = vmatprep.subr.mxu0 0.0
    %2349 = vmatpush1.msra.mxu0 %v460
    %2350 = vmatprep.subr.mxu0 0.0
    %2351 = vmatpush1.msra.mxu0 %v463
    %2352 = vmatprep.subr.mxu0 0.0
    %2353 = vmatpush1.msra.mxu0 %v466
    %2354 = vmatprep.subr.mxu0 0.0
    %2355 = vmatpush1.msra.mxu0 %v469
    %2356 = vmatprep.subr.mxu0 0.0
    %2357 = vmatpush1.msra.mxu0 %v472
    %2358 = vmatprep.subr.mxu0 0.0
    %2359 = vmatpush1.msra.mxu0 %v475
    %2360 = vmatprep.subr.mxu0 0.0
    %2361 = vmatpush1.msra.mxu0 0.0
    %2362 = vmatprep.subr.mxu0 0.0
    %2363 = vmatpush1.msra.mxu0 0.0
    %2364 = vmatprep.subr.mxu0 0.0
    %2365 = vmatpush1.msra.mxu0 0.0
    %2366 = vmatprep.subr.mxu0 0.0
    %2367 = vmatpush1.msra.mxu0 0.0
    %2368 = vmatprep.subr.mxu0 0.0
    %2369 = vmatpush1.msra.mxu0 0.0
    %2370 = vmatprep.subr.mxu0 0.0
    %2371 = vmatpush1.msra.mxu0 0.0
    %2372 = vmatprep.subr.mxu0 0.0
    %2373 = vmatpush1.msra.mxu0 0.0
    %2374 = vmatprep.subr.mxu0 0.0
    %2375 = vmatpush1.msra.mxu0 0.0
    %2376 = vmatprep.subr.mxu0 0.0
    %2377 = vmatpush1.msra.mxu0 0.0
    %2378 = vmatprep.subr.mxu0 0.0
    %2379 = vmatpush1.msra.mxu0 0.0
    %2380 = vmatprep.subr.mxu0 0.0
    %2381 = vmatpush1.msra.mxu0 0.0
    %2382 = vmatprep.subr.mxu0 0.0
    %2383 = vmatpush1.msra.mxu0 0.0
    %2384 = vmatprep.subr.mxu0 0.0
    %2385 = vmatpush1.msra.mxu0 0.0
    %2386 = vmatprep.subr.mxu0 0.0
    %2387 = vmatpush1.msra.mxu0 0.0
    %2388 = vmatprep.subr.mxu0 0.0
    %2389 = vmatpush1.msra.mxu0 0.0
    %2390 = vmatprep.subr.mxu0 0.0
    %2391 = vmatpush1.msra.mxu0 0.0
    %2392 = vmatprep.mubr.f32.mxu0 0.0
    %2393 = vmatmul.mubr.f32.gmra.mrb[0].mxu0 %v2168
    %v2394 = vpop.f32.mrb[0].mxu0
    %v2395 = vadd.f32 %v539, %v2394
    %v2396 = vpop.f32.mrb[0].mxu0
    %2397 = vdwg.mxu0
    %2398 = vmatprep.subr.mxu0 %v478
    %2399 = vmatpush1.msra.mxu0 %v477
    %2400 = vmatprep.subr.mxu0 %v481
    %2401 = vmatpush1.msra.mxu0 %v480
    %2402 = vmatprep.subr.mxu0 %v484
    %2403 = vmatpush1.msra.mxu0 %v483
    %2404 = vmatprep.subr.mxu0 %v487
    %2405 = vmatpush1.msra.mxu0 %v486
    %2406 = vmatprep.subr.mxu0 %v490
    %2407 = vmatpush1.msra.mxu0 %v489
    %2408 = vmatprep.subr.mxu0 %v493
    %2409 = vmatpush1.msra.mxu0 %v492
    %2410 = vmatprep.subr.mxu0 %v496
    %2411 = vmatpush1.msra.mxu0 %v495
    %2412 = vmatprep.subr.mxu0 %v499
    %2413 = vmatpush1.msra.mxu0 %v498
    %2414 = vmatprep.subr.mxu0 %v502
    %2415 = vmatpush1.msra.mxu0 %v501
    %2416 = vmatprep.subr.mxu0 %v505
    %2417 = vmatpush1.msra.mxu0 %v504
    %2418 = vmatprep.subr.mxu0 %v508
    %2419 = vmatpush1.msra.mxu0 %v507
    %2420 = vmatprep.subr.mxu0 %v511
    %2421 = vmatpush1.msra.mxu0 %v510
    %2422 = vmatprep.subr.mxu0 %v514
    %2423 = vmatpush1.msra.mxu0 %v513
    %2424 = vmatprep.subr.mxu0 %v517
    %2425 = vmatpush1.msra.mxu0 %v516
    %2426 = vmatprep.subr.mxu0 %v520
    %2427 = vmatpush1.msra.mxu0 %v519
    %2428 = vmatprep.subr.mxu0 %v523
    %2429 = vmatpush1.msra.mxu0 %v522
    %2430 = vmatprep.subr.mxu0 0.0
    %2431 = vmatpush1.msra.mxu0 0.0
    %2432 = vmatprep.subr.mxu0 0.0
    %2433 = vmatpush1.msra.mxu0 0.0
    %2434 = vmatprep.subr.mxu0 0.0
    %2435 = vmatpush1.msra.mxu0 0.0
    %2436 = vmatprep.subr.mxu0 0.0
    %2437 = vmatpush1.msra.mxu0 0.0
    %2438 = vmatprep.subr.mxu0 0.0
    %2439 = vmatpush1.msra.mxu0 0.0
    %2440 = vmatprep.subr.mxu0 0.0
    %2441 = vmatpush1.msra.mxu0 0.0
    %2442 = vmatprep.subr.mxu0 0.0
    %2443 = vmatpush1.msra.mxu0 0.0
    %2444 = vmatprep.subr.mxu0 0.0
    %2445 = vmatpush1.msra.mxu0 0.0
    %2446 = vmatprep.subr.mxu0 0.0
    %2447 = vmatpush1.msra.mxu0 0.0
    %2448 = vmatprep.subr.mxu0 0.0
    %2449 = vmatpush1.msra.mxu0 0.0
    %2450 = vmatprep.subr.mxu0 0.0
    %2451 = vmatpush1.msra.mxu0 0.0
    %2452 = vmatprep.subr.mxu0 0.0
    %2453 = vmatpush1.msra.mxu0 0.0
    %2454 = vmatprep.subr.mxu0 0.0
    %2455 = vmatpush1.msra.mxu0 0.0
    %2456 = vmatprep.subr.mxu0 0.0
    %2457 = vmatpush1.msra.mxu0 0.0
    %2458 = vmatprep.subr.mxu0 0.0
    %2459 = vmatpush1.msra.mxu0 0.0
    %2460 = vmatprep.subr.mxu0 0.0
    %2461 = vmatpush1.msra.mxu0 0.0
    %2462 = vmatprep.mubr.f32.mxu0 0.0
    %2463 = vmatmul.mubr.f32.gmra.mrb[0].mxu0 %v2200
    %v2464 = vpop.f32.mrb[0].mxu0
    %v2465 = vadd.f32 %v688, %v2464
    %v2466 = vpop.f32.mrb[0].mxu0
    %v2467 = vadd.f32 %v692, %v2466
    %2468 = vdwg.mxu0
    %2469 = vmatprep.subr.mxu0 0.0
    %2470 = vmatpush1.msra.mxu0 %v479
    %2471 = vmatprep.subr.mxu0 0.0
    %2472 = vmatpush1.msra.mxu0 %v482
    %2473 = vmatprep.subr.mxu0 0.0
    %2474 = vmatpush1.msra.mxu0 %v485
    %2475 = vmatprep.subr.mxu0 0.0
    %2476 = vmatpush1.msra.mxu0 %v488
    %2477 = vmatprep.subr.mxu0 0.0
    %2478 = vmatpush1.msra.mxu0 %v491
    %2479 = vmatprep.subr.mxu0 0.0
    %2480 = vmatpush1.msra.mxu0 %v494
    %2481 = vmatprep.subr.mxu0 0.0
    %2482 = vmatpush1.msra.mxu0 %v497
    %2483 = vmatprep.subr.mxu0 0.0
    %2484 = vmatpush1.msra.mxu0 %v500
    %2485 = vmatprep.subr.mxu0 0.0
    %2486 = vmatpush1.msra.mxu0 %v503
    %2487 = vmatprep.subr.mxu0 0.0
    %2488 = vmatpush1.msra.mxu0 %v506
    %2489 = vmatprep.subr.mxu0 0.0
    %2490 = vmatpush1.msra.mxu0 %v509
    %2491 = vmatprep.subr.mxu0 0.0
    %2492 = vmatpush1.msra.mxu0 %v512
    %2493 = vmatprep.subr.mxu0 0.0
    %2494 = vmatpush1.msra.mxu0 %v515
    %2495 = vmatprep.subr.mxu0 0.0
    %2496 = vmatpush1.msra.mxu0 %v518
    %2497 = vmatprep.subr.mxu0 0.0
    %2498 = vmatpush1.msra.mxu0 %v521
    %2499 = vmatprep.subr.mxu0 0.0
    %2500 = vmatpush1.msra.mxu0 %v524
    %2501 = vmatprep.subr.mxu0 0.0
    %2502 = vmatpush1.msra.mxu0 0.0
    %2503 = vmatprep.subr.mxu0 0.0
    %2504 = vmatpush1.msra.mxu0 0.0
    %2505 = vmatprep.subr.mxu0 0.0
    %2506 = vmatpush1.msra.mxu0 0.0
    %2507 = vmatprep.subr.mxu0 0.0
    %2508 = vmatpush1.msra.mxu0 0.0
    %2509 = vmatprep.subr.mxu0 0.0
    %2510 = vmatpush1.msra.mxu0 0.0
    %2511 = vmatprep.subr.mxu0 0.0
    %2512 = vmatpush1.msra.mxu0 0.0
    %2513 = vmatprep.subr.mxu0 0.0
    %2514 = vmatpush1.msra.mxu0 0.0
    %2515 = vmatprep.subr.mxu0 0.0
    %2516 = vmatpush1.msra.mxu0 0.0
    %2517 = vmatprep.subr.mxu0 0.0
    %2518 = vmatpush1.msra.mxu0 0.0
    %2519 = vmatprep.subr.mxu0 0.0
    %2520 = vmatpush1.msra.mxu0 0.0
    %2521 = vmatprep.subr.mxu0 0.0
    %2522 = vmatpush1.msra.mxu0 0.0
    %2523 = vmatprep.subr.mxu0 0.0
    %2524 = vmatpush1.msra.mxu0 0.0
    %2525 = vmatprep.subr.mxu0 0.0
    %2526 = vmatpush1.msra.mxu0 0.0
    %2527 = vmatprep.subr.mxu0 0.0
    %2528 = vmatpush1.msra.mxu0 0.0
    %2529 = vmatprep.subr.mxu0 0.0
    %2530 = vmatpush1.msra.mxu0 0.0
    %2531 = vmatprep.subr.mxu0 0.0
    %2532 = vmatpush1.msra.mxu0 0.0
    %2533 = vmatprep.mubr.f32.mxu0 0.0
    %2534 = vmatmul.mubr.f32.gmra.mrb[0].mxu0 %v2200
    %v2535 = vpop.f32.mrb[0].mxu0
    %v2536 = vadd.f32 %v696, %v2535
    %v2537 = vpop.f32.mrb[0].mxu0
    %2538 = vdwg.mxu0
    %v2539 = vadd.f32 %v270, %v2324
    %v2540 = vxor.u32 %v2539, 2147483648
    %v2541 = vmul.f32 %v2540, 1.442695
    %v2542 = vpow.pop %v2541
    %v2543 = vadd.f32 %v2542, 1.0
    %v2544 = vrcp.pop %v2543
    %v2545 = vmul.f32 1.0, %v2544
    %v2546 = vadd.f32 %v272, %v2326
    %v2547 = vxor.u32 %v2546, 2147483648
    %v2548 = vmul.f32 %v2547, 1.442695
    %v2549 = vpow.pop %v2548
    %v2550 = vadd.f32 %v2549, 1.0
    %v2551 = vrcp.pop %v2550
    %v2552 = vmul.f32 1.0, %v2551
    %v2553 = vmul.f32 %v2545, %v2395
    %v2554 = vadd.f32 %v347, %v2553
    %v2555 = vtanh.pop %v2554
    %v2556 = vsub.f32 1.0, %v2552
    %v2557 = vmul.f32 %v2556, %v2555
    %v2558 = vmul.f32 %v2552, %v2168
    %v2559 = vadd.f32 %v2557, %v2558
    %v2560 = vmul.f32 %v2192, %v2559
    %v2561 = vmul.f32 %v2197, %v2168
    %v2562 = vadd.f32 %v2560, %v2561
    %v2564 = vrot.slane %v2465, 2
    %v2566 = vadd.f32 %v343, %v2564
    %v2567 = vxor.u32 %v2566, 2147483648
    %v2568 = vmul.f32 %v2567, 1.442695
    %v2569 = vpow.pop %v2568
    %v2570 = vadd.f32 %v2569, 1.0
    %v2571 = vrcp.pop %v2570
    %v2572 = vmul.f32 1.0, %v2571
    %v2574 = vrot.slane %v2467, 2
    %v2576 = vadd.f32 %v418, %v2574
    %v2577 = vxor.u32 %v2576, 2147483648
    %v2578 = vmul.f32 %v2577, 1.442695
    %v2579 = vpow.pop %v2578
    %v2580 = vadd.f32 %v2579, 1.0
    %v2581 = vrcp.pop %v2580
    %v2582 = vmul.f32 1.0, %v2581
    %v2584 = vrot.slane %v2536, 2
    %v2586 = vmul.f32 %v2572, %v2584
    %v2587 = vadd.f32 %v420, %v2586
    %v2588 = vtanh.pop %v2587
    %v2589 = vsub.f32 1.0, %v2582
    %v2590 = vmul.f32 %v2589, %v2588
    %v2592 = vrot.slane %v2200, 2
    %v2594 = vmul.f32 %v2582, %v2592
    %v2595 = vadd.f32 %v2590, %v2594
    %v2597 = vrot.slane %v2595, 6
    %v2599 = vmul.f32 %v2157, %v2597
    %v2600 = vmul.f32 %v2165, %v2200
    %v2601 = vadd.f32 %v2599, %v2600
    %v2602 = vmul.f32 %v2192, %v2562
    %v2605 = vunpack.c.l.s4 1966171168
    %v2606 = vunpack.c.0.s8 %v2605
    %v2607 = vlaneseq
    %v2608 = vshrl.u32 %v2607, 7
    %v2609 = vsub.s32 %v2606, %v2608
    %v2610 = vrot.slane %v2602, %v2609
    %v2611 = vcombine.high %v2610, %v2610
    %v2613 = vunpack.c.l.s4 1966171168
    %v2614 = vunpack.c.0.s8 %v2613
    %v2615 = vlaneseq
    %v2616 = vshrl.u32 %v2615, 7
    %v2617 = vsub.s32 %v2614, %v2616
    %v2618 = vrot.slane %v2610, %v2617
    %v2620 = vunpack.c.l.s4 1966171168
    %v2621 = vunpack.c.0.s8 %v2620
    %v2622 = vlaneseq
    %v2623 = vshrl.u32 %v2622, 7
    %v2624 = vsub.s32 %v2621, %v2623
    %v2625 = vrot.slane %v2611, %v2624
    %2628 = vst [vmem:[#allocation14 + $0x4] sm:$0x1] %v2618
    %2629 = vst [vmem:[#allocation14 + $0x14] sm:$0x1] %v2625
    %v2630 = vmul.f32 %v2157, %v2601
    %v2633 = vunpack.c.l.s4 1966171168
    %v2634 = vunpack.c.0.s8 %v2633
    %v2635 = vlaneseq
    %v2636 = vshrl.u32 %v2635, 7
    %v2637 = vsub.s32 %v2634, %v2636
    %v2638 = vrot.slane %v2630, %v2637
    %v2639 = vcombine.high %v2638, %v2638
    %v2641 = vunpack.c.l.s4 1966171168
    %v2642 = vunpack.c.0.s8 %v2641
    %v2643 = vlaneseq
    %v2644 = vshrl.u32 %v2643, 7
    %v2645 = vsub.s32 %v2642, %v2644
    %v2646 = vrot.slane %v2638, %v2645
    %v2648 = vunpack.c.l.s4 1966171168
    %v2649 = vunpack.c.0.s8 %v2648
    %v2650 = vlaneseq
    %v2651 = vshrl.u32 %v2650, 7
    %v2652 = vsub.s32 %v2649, %v2651
    %v2653 = vrot.slane %v2639, %v2652
    %2656 = vst [vmem:[#allocation14 + $0xb] sm:$0x1] %v2646
    %2657 = vst [vmem:[#allocation14 + $0x1b] sm:$0x1] %v2653
    %2658 = vmatprep.subr.mxu0 %v429
    %2659 = vmatpush1.msra.mxu0 %v428
    %2660 = vmatprep.subr.mxu0 %v432
    %2661 = vmatpush1.msra.mxu0 %v431
    %2662 = vmatprep.subr.mxu0 %v435
    %2663 = vmatpush1.msra.mxu0 %v434
    %2664 = vmatprep.subr.mxu0 %v438
    %2665 = vmatpush1.msra.mxu0 %v437
    %2666 = vmatprep.subr.mxu0 %v441
    %2667 = vmatpush1.msra.mxu0 %v440
    %2668 = vmatprep.subr.mxu0 %v444
    %2669 = vmatpush1.msra.mxu0 %v443
    %2670 = vmatprep.subr.mxu0 %v447
    %2671 = vmatpush1.msra.mxu0 %v446
    %2672 = vmatprep.subr.mxu0 %v450
    %2673 = vmatpush1.msra.mxu0 %v449
    %2674 = vmatprep.subr.mxu0 %v453
    %2675 = vmatpush1.msra.mxu0 %v452
    %2676 = vmatprep.subr.mxu0 %v456
    %2677 = vmatpush1.msra.mxu0 %v455
    %2678 = vmatprep.subr.mxu0 %v459
    %2679 = vmatpush1.msra.mxu0 %v458
    %2680 = vmatprep.subr.mxu0 %v462
    %2681 = vmatpush1.msra.mxu0 %v461
    %2682 = vmatprep.subr.mxu0 %v465
    %2683 = vmatpush1.msra.mxu0 %v464
    %2684 = vmatprep.subr.mxu0 %v468
    %2685 = vmatpush1.msra.mxu0 %v467
    %2686 = vmatprep.subr.mxu0 %v471
    %2687 = vmatpush1.msra.mxu0 %v470
    %2688 = vmatprep.subr.mxu0 %v474
    %2689 = vmatpush1.msra.mxu0 %v473
    %2690 = vmatprep.subr.mxu0 0.0
    %2691 = vmatpush1.msra.mxu0 0.0
    %2692 = vmatprep.subr.mxu0 0.0
    %2693 = vmatpush1.msra.mxu0 0.0
    %2694 = vmatprep.subr.mxu0 0.0
    %2695 = vmatpush1.msra.mxu0 0.0
    %2696 = vmatprep.subr.mxu0 0.0
    %2697 = vmatpush1.msra.mxu0 0.0
    %2698 = vmatprep.subr.mxu0 0.0
    %2699 = vmatpush1.msra.mxu0 0.0
    %2700 = vmatprep.subr.mxu0 0.0
    %2701 = vmatpush1.msra.mxu0 0.0
    %2702 = vmatprep.subr.mxu0 0.0
    %2703 = vmatpush1.msra.mxu0 0.0
    %2704 = vmatprep.subr.mxu0 0.0
    %2705 = vmatpush1.msra.mxu0 0.0
    %2706 = vmatprep.subr.mxu0 0.0
    %2707 = vmatpush1.msra.mxu0 0.0
    %2708 = vmatprep.subr.mxu0 0.0
    %2709 = vmatpush1.msra.mxu0 0.0
    %2710 = vmatprep.subr.mxu0 0.0
    %2711 = vmatpush1.msra.mxu0 0.0
    %2712 = vmatprep.subr.mxu0 0.0
    %2713 = vmatpush1.msra.mxu0 0.0
    %2714 = vmatprep.subr.mxu0 0.0
    %2715 = vmatpush1.msra.mxu0 0.0
    %2716 = vmatprep.subr.mxu0 0.0
    %2717 = vmatpush1.msra.mxu0 0.0
    %2718 = vmatprep.subr.mxu0 0.0
    %2719 = vmatpush1.msra.mxu0 0.0
    %2720 = vmatprep.subr.mxu0 0.0
    %2721 = vmatpush1.msra.mxu0 0.0
    %2722 = vmatprep.mubr.f32.mxu0 0.0
    %2723 = vmatmul.mubr.f32.gmra.mrb[0].mxu0 %v2562
    %v2724 = vpop.f32.mrb[0].mxu0
    %v2725 = vadd.f32 %v531, %v2724
    %v2726 = vpop.f32.mrb[0].mxu0
    %v2727 = vadd.f32 %v535, %v2726
    %2728 = vdwg.mxu0
    %2729 = vmatprep.subr.mxu0 0.0
    %2730 = vmatpush1.msra.mxu0 %v430
    %2731 = vmatprep.subr.mxu0 0.0
    %2732 = vmatpush1.msra.mxu0 %v433
    %2733 = vmatprep.subr.mxu0 0.0
    %2734 = vmatpush1.msra.mxu0 %v436
    %2735 = vmatprep.subr.mxu0 0.0
    %2736 = vmatpush1.msra.mxu0 %v439
    %2737 = vmatprep.subr.mxu0 0.0
    %2738 = vmatpush1.msra.mxu0 %v442
    %2739 = vmatprep.subr.mxu0 0.0
    %2740 = vmatpush1.msra.mxu0 %v445
    %2741 = vmatprep.subr.mxu0 0.0
    %2742 = vmatpush1.msra.mxu0 %v448
    %2743 = vmatprep.subr.mxu0 0.0
    %2744 = vmatpush1.msra.mxu0 %v451
    %2745 = vmatprep.subr.mxu0 0.0
    %2746 = vmatpush1.msra.mxu0 %v454
    %2747 = vmatprep.subr.mxu0 0.0
    %2748 = vmatpush1.msra.mxu0 %v457
    %2749 = vmatprep.subr.mxu0 0.0
    %2750 = vmatpush1.msra.mxu0 %v460
    %2751 = vmatprep.subr.mxu0 0.0
    %2752 = vmatpush1.msra.mxu0 %v463
    %2753 = vmatprep.subr.mxu0 0.0
    %2754 = vmatpush1.msra.mxu0 %v466
    %2755 = vmatprep.subr.mxu0 0.0
    %2756 = vmatpush1.msra.mxu0 %v469
    %2757 = vmatprep.subr.mxu0 0.0
    %2758 = vmatpush1.msra.mxu0 %v472
    %2759 = vmatprep.subr.mxu0 0.0
    %2760 = vmatpush1.msra.mxu0 %v475
    %2761 = vmatprep.subr.mxu0 0.0
    %2762 = vmatpush1.msra.mxu0 0.0
    %2763 = vmatprep.subr.mxu0 0.0
    %2764 = vmatpush1.msra.mxu0 0.0
    %2765 = vmatprep.subr.mxu0 0.0
    %2766 = vmatpush1.msra.mxu0 0.0
    %2767 = vmatprep.subr.mxu0 0.0
    %2768 = vmatpush1.msra.mxu0 0.0
    %2769 = vmatprep.subr.mxu0 0.0
    %2770 = vmatpush1.msra.mxu0 0.0
    %2771 = vmatprep.subr.mxu0 0.0
    %2772 = vmatpush1.msra.mxu0 0.0
    %2773 = vmatprep.subr.mxu0 0.0
    %2774 = vmatpush1.msra.mxu0 0.0
    %2775 = vmatprep.subr.mxu0 0.0
    %2776 = vmatpush1.msra.mxu0 0.0
    %2777 = vmatprep.subr.mxu0 0.0
    %2778 = vmatpush1.msra.mxu0 0.0
    %2779 = vmatprep.subr.mxu0 0.0
    %2780 = vmatpush1.msra.mxu0 0.0
    %2781 = vmatprep.subr.mxu0 0.0
    %2782 = vmatpush1.msra.mxu0 0.0
    %2783 = vmatprep.subr.mxu0 0.0
    %2784 = vmatpush1.msra.mxu0 0.0
    %2785 = vmatprep.subr.mxu0 0.0
    %2786 = vmatpush1.msra.mxu0 0.0
    %2787 = vmatprep.subr.mxu0 0.0
    %2788 = vmatpush1.msra.mxu0 0.0
    %2789 = vmatprep.subr.mxu0 0.0
    %2790 = vmatpush1.msra.mxu0 0.0
    %2791 = vmatprep.subr.mxu0 0.0
    %2792 = vmatpush1.msra.mxu0 0.0
    %2793 = vmatprep.mubr.f32.mxu0 0.0
    %2794 = vmatmul.mubr.f32.gmra.mrb[0].mxu0 %v2562
    %v2795 = vpop.f32.mrb[0].mxu0
    %v2796 = vadd.f32 %v539, %v2795
    %v2797 = vpop.f32.mrb[0].mxu0
    %2798 = vdwg.mxu0
    %2799 = vmatprep.subr.mxu0 %v478
    %2800 = vmatpush1.msra.mxu0 %v477
    %2801 = vmatprep.subr.mxu0 %v481
    %2802 = vmatpush1.msra.mxu0 %v480
    %2803 = vmatprep.subr.mxu0 %v484
    %2804 = vmatpush1.msra.mxu0 %v483
    %2805 = vmatprep.subr.mxu0 %v487
    %2806 = vmatpush1.msra.mxu0 %v486
    %2807 = vmatprep.subr.mxu0 %v490
    %2808 = vmatpush1.msra.mxu0 %v489
    %2809 = vmatprep.subr.mxu0 %v493
    %2810 = vmatpush1.msra.mxu0 %v492
    %2811 = vmatprep.subr.mxu0 %v496
    %2812 = vmatpush1.msra.mxu0 %v495
    %2813 = vmatprep.subr.mxu0 %v499
    %2814 = vmatpush1.msra.mxu0 %v498
    %2815 = vmatprep.subr.mxu0 %v502
    %2816 = vmatpush1.msra.mxu0 %v501
    %2817 = vmatprep.subr.mxu0 %v505
    %2818 = vmatpush1.msra.mxu0 %v504
    %2819 = vmatprep.subr.mxu0 %v508
    %2820 = vmatpush1.msra.mxu0 %v507
    %2821 = vmatprep.subr.mxu0 %v511
    %2822 = vmatpush1.msra.mxu0 %v510
    %2823 = vmatprep.subr.mxu0 %v514
    %2824 = vmatpush1.msra.mxu0 %v513
    %2825 = vmatprep.subr.mxu0 %v517
    %2826 = vmatpush1.msra.mxu0 %v516
    %2827 = vmatprep.subr.mxu0 %v520
    %2828 = vmatpush1.msra.mxu0 %v519
    %2829 = vmatprep.subr.mxu0 %v523
    %2830 = vmatpush1.msra.mxu0 %v522
    %2831 = vmatprep.subr.mxu0 0.0
    %2832 = vmatpush1.msra.mxu0 0.0
    %2833 = vmatprep.subr.mxu0 0.0
    %2834 = vmatpush1.msra.mxu0 0.0
    %2835 = vmatprep.subr.mxu0 0.0
    %2836 = vmatpush1.msra.mxu0 0.0
    %2837 = vmatprep.subr.mxu0 0.0
    %2838 = vmatpush1.msra.mxu0 0.0
    %2839 = vmatprep.subr.mxu0 0.0
    %2840 = vmatpush1.msra.mxu0 0.0
    %2841 = vmatprep.subr.mxu0 0.0
    %2842 = vmatpush1.msra.mxu0 0.0
    %2843 = vmatprep.subr.mxu0 0.0
    %2844 = vmatpush1.msra.mxu0 0.0
    %2845 = vmatprep.subr.mxu0 0.0
    %2846 = vmatpush1.msra.mxu0 0.0
    %2847 = vmatprep.subr.mxu0 0.0
    %2848 = vmatpush1.msra.mxu0 0.0
    %2849 = vmatprep.subr.mxu0 0.0
    %2850 = vmatpush1.msra.mxu0 0.0
    %2851 = vmatprep.subr.mxu0 0.0
    %2852 = vmatpush1.msra.mxu0 0.0
    %2853 = vmatprep.subr.mxu0 0.0
    %2854 = vmatpush1.msra.mxu0 0.0
    %2855 = vmatprep.subr.mxu0 0.0
    %2856 = vmatpush1.msra.mxu0 0.0
    %2857 = vmatprep.subr.mxu0 0.0
    %2858 = vmatpush1.msra.mxu0 0.0
    %2859 = vmatprep.subr.mxu0 0.0
    %2860 = vmatpush1.msra.mxu0 0.0
    %2861 = vmatprep.subr.mxu0 0.0
    %2862 = vmatpush1.msra.mxu0 0.0
    %2863 = vmatprep.mubr.f32.mxu0 0.0
    %2864 = vmatmul.mubr.f32.gmra.mrb[0].mxu0 %v2601
    %v2865 = vpop.f32.mrb[0].mxu0
    %v2866 = vadd.f32 %v688, %v2865
    %v2867 = vpop.f32.mrb[0].mxu0
    %v2868 = vadd.f32 %v692, %v2867
    %2869 = vdwg.mxu0
    %2870 = vmatprep.subr.mxu0 0.0
    %2871 = vmatpush1.msra.mxu0 %v479
    %2872 = vmatprep.subr.mxu0 0.0
    %2873 = vmatpush1.msra.mxu0 %v482
    %2874 = vmatprep.subr.mxu0 0.0
    %2875 = vmatpush1.msra.mxu0 %v485
    %2876 = vmatprep.subr.mxu0 0.0
    %2877 = vmatpush1.msra.mxu0 %v488
    %2878 = vmatprep.subr.mxu0 0.0
    %2879 = vmatpush1.msra.mxu0 %v491
    %2880 = vmatprep.subr.mxu0 0.0
    %2881 = vmatpush1.msra.mxu0 %v494
    %2882 = vmatprep.subr.mxu0 0.0
    %2883 = vmatpush1.msra.mxu0 %v497
    %2884 = vmatprep.subr.mxu0 0.0
    %2885 = vmatpush1.msra.mxu0 %v500
    %2886 = vmatprep.subr.mxu0 0.0
    %2887 = vmatpush1.msra.mxu0 %v503
    %2888 = vmatprep.subr.mxu0 0.0
    %2889 = vmatpush1.msra.mxu0 %v506
    %2890 = vmatprep.subr.mxu0 0.0
    %2891 = vmatpush1.msra.mxu0 %v509
    %2892 = vmatprep.subr.mxu0 0.0
    %2893 = vmatpush1.msra.mxu0 %v512
    %2894 = vmatprep.subr.mxu0 0.0
    %2895 = vmatpush1.msra.mxu0 %v515
    %2896 = vmatprep.subr.mxu0 0.0
    %2897 = vmatpush1.msra.mxu0 %v518
    %2898 = vmatprep.subr.mxu0 0.0
    %2899 = vmatpush1.msra.mxu0 %v521
    %2900 = vmatprep.subr.mxu0 0.0
    %2901 = vmatpush1.msra.mxu0 %v524
    %2902 = vmatprep.subr.mxu0 0.0
    %2903 = vmatpush1.msra.mxu0 0.0
    %2904 = vmatprep.subr.mxu0 0.0
    %2905 = vmatpush1.msra.mxu0 0.0
    %2906 = vmatprep.subr.mxu0 0.0
    %2907 = vmatpush1.msra.mxu0 0.0
    %2908 = vmatprep.subr.mxu0 0.0
    %2909 = vmatpush1.msra.mxu0 0.0
    %2910 = vmatprep.subr.mxu0 0.0
    %2911 = vmatpush1.msra.mxu0 0.0
    %2912 = vmatprep.subr.mxu0 0.0
    %2913 = vmatpush1.msra.mxu0 0.0
    %2914 = vmatprep.subr.mxu0 0.0
    %2915 = vmatpush1.msra.mxu0 0.0
    %2916 = vmatprep.subr.mxu0 0.0
    %2917 = vmatpush1.msra.mxu0 0.0
    %2918 = vmatprep.subr.mxu0 0.0
    %2919 = vmatpush1.msra.mxu0 0.0
    %2920 = vmatprep.subr.mxu0 0.0
    %2921 = vmatpush1.msra.mxu0 0.0
    %2922 = vmatprep.subr.mxu0 0.0
    %2923 = vmatpush1.msra.mxu0 0.0
    %2924 = vmatprep.subr.mxu0 0.0
    %2925 = vmatpush1.msra.mxu0 0.0
    %2926 = vmatprep.subr.mxu0 0.0
    %2927 = vmatpush1.msra.mxu0 0.0
    %2928 = vmatprep.subr.mxu0 0.0
    %2929 = vmatpush1.msra.mxu0 0.0
    %2930 = vmatprep.subr.mxu0 0.0
    %2931 = vmatpush1.msra.mxu0 0.0
    %2932 = vmatprep.subr.mxu0 0.0
    %2933 = vmatpush1.msra.mxu0 0.0
    %2934 = vmatprep.mubr.f32.mxu0 0.0
    %2935 = vmatmul.mubr.f32.gmra.mrb[0].mxu0 %v2601
    %v2936 = vpop.f32.mrb[0].mxu0
    %v2937 = vadd.f32 %v696, %v2936
    %v2938 = vpop.f32.mrb[0].mxu0
    %2939 = vdwg.mxu0
    %v2941 = vrot.slane %v2725, 6
    %v2943 = vadd.f32 %v270, %v2941
    %v2944 = vxor.u32 %v2943, 2147483648
    %v2945 = vmul.f32 %v2944, 1.442695
    %v2946 = vpow.pop %v2945
    %v2947 = vadd.f32 %v2946, 1.0
    %v2948 = vrcp.pop %v2947
    %v2949 = vmul.f32 1.0, %v2948
    %v2951 = vrot.slane %v2727, 6
    %v2953 = vadd.f32 %v272, %v2951
    %v2954 = vxor.u32 %v2953, 2147483648
    %v2955 = vmul.f32 %v2954, 1.442695
    %v2956 = vpow.pop %v2955
    %v2957 = vadd.f32 %v2956, 1.0
    %v2958 = vrcp.pop %v2957
    %v2959 = vmul.f32 1.0, %v2958
    %v2961 = vrot.slane %v2796, 6
    %v2963 = vmul.f32 %v2949, %v2961
    %v2964 = vadd.f32 %v347, %v2963
    %v2965 = vtanh.pop %v2964
    %v2966 = vsub.f32 1.0, %v2959
    %v2967 = vmul.f32 %v2966, %v2965
    %v2969 = vrot.slane %v2562, 6
    %v2971 = vmul.f32 %v2959, %v2969
    %v2972 = vadd.f32 %v2967, %v2971
    %v2974 = vrot.slane %v2972, 2
    %v2976 = vmul.f32 %v1772, %v2974
    %v2977 = vmul.f32 %v1780, %v2562
    %v2978 = vadd.f32 %v2976, %v2977
    %v2980 = vrot.slane %v2866, 4
    %v2982 = vadd.f32 %v343, %v2980
    %v2983 = vxor.u32 %v2982, 2147483648
    %v2984 = vmul.f32 %v2983, 1.442695
    %v2985 = vpow.pop %v2984
    %v2986 = vadd.f32 %v2985, 1.0
    %v2987 = vrcp.pop %v2986
    %v2988 = vmul.f32 1.0, %v2987
    %v2990 = vrot.slane %v2868, 4
    %v2992 = vadd.f32 %v418, %v2990
    %v2993 = vxor.u32 %v2992, 2147483648
    %v2994 = vmul.f32 %v2993, 1.442695
    %v2995 = vpow.pop %v2994
    %v2996 = vadd.f32 %v2995, 1.0
    %v2997 = vrcp.pop %v2996
    %v2998 = vmul.f32 1.0, %v2997
    %v3000 = vrot.slane %v2937, 4
    %v3002 = vmul.f32 %v2988, %v3000
    %v3003 = vadd.f32 %v420, %v3002
    %v3004 = vtanh.pop %v3003
    %v3005 = vsub.f32 1.0, %v2998
    %v3006 = vmul.f32 %v3005, %v3004
    %v3008 = vrot.slane %v2601, 4
    %v3010 = vmul.f32 %v2998, %v3008
    %v3011 = vadd.f32 %v3006, %v3010
    %v3013 = vrot.slane %v3011, 4
    %v3015 = vmul.f32 %v1725, %v3013
    %v3016 = vmul.f32 %v1733, %v2601
    %v3017 = vadd.f32 %v3015, %v3016
    %v3018 = vmul.f32 %v1772, %v2978
    %v3021 = vunpack.c.l.s4 1966171168
    %v3022 = vunpack.c.0.s8 %v3021
    %v3023 = vlaneseq
    %v3024 = vshrl.u32 %v3023, 7
    %v3025 = vsub.s32 %v3022, %v3024
    %v3026 = vrot.slane %v3018, %v3025
    %v3027 = vcombine.high %v3026, %v3026
    %v3029 = vunpack.c.l.s4 1966171168
    %v3030 = vunpack.c.0.s8 %v3029
    %v3031 = vlaneseq
    %v3032 = vshrl.u32 %v3031, 7
    %v3033 = vsub.s32 %v3030, %v3032
    %v3034 = vrot.slane %v3026, %v3033
    %v3036 = vunpack.c.l.s4 1966171168
    %v3037 = vunpack.c.0.s8 %v3036
    %v3038 = vlaneseq
    %v3039 = vshrl.u32 %v3038, 7
    %v3040 = vsub.s32 %v3037, %v3039
    %v3041 = vrot.slane %v3027, %v3040
    %3044 = vst [vmem:[#allocation14 + $0x5] sm:$0x1] %v3034
    %3045 = vst [vmem:[#allocation14 + $0x15] sm:$0x1] %v3041
    %v3046 = vmul.f32 %v1725, %v3017
    %v3049 = vunpack.c.l.s4 1966171168
    %v3050 = vunpack.c.0.s8 %v3049
    %v3051 = vlaneseq
    %v3052 = vshrl.u32 %v3051, 7
    %v3053 = vsub.s32 %v3050, %v3052
    %v3054 = vrot.slane %v3046, %v3053
    %v3055 = vcombine.high %v3054, %v3054
    %v3057 = vunpack.c.l.s4 1966171168
    %v3058 = vunpack.c.0.s8 %v3057
    %v3059 = vlaneseq
    %v3060 = vshrl.u32 %v3059, 7
    %v3061 = vsub.s32 %v3058, %v3060
    %v3062 = vrot.slane %v3054, %v3061
    %v3064 = vunpack.c.l.s4 1966171168
    %v3065 = vunpack.c.0.s8 %v3064
    %v3066 = vlaneseq
    %v3067 = vshrl.u32 %v3066, 7
    %v3068 = vsub.s32 %v3065, %v3067
    %v3069 = vrot.slane %v3055, %v3068
    %3072 = vst [vmem:[#allocation14 + $0xa] sm:$0x1] %v3062
    %3073 = vst [vmem:[#allocation14 + $0x1a] sm:$0x1] %v3069
    %3074 = vmatprep.subr.mxu0 %v429
    %3075 = vmatpush1.msra.mxu0 %v428
    %3076 = vmatprep.subr.mxu0 %v432
    %3077 = vmatpush1.msra.mxu0 %v431
    %3078 = vmatprep.subr.mxu0 %v435
    %3079 = vmatpush1.msra.mxu0 %v434
    %3080 = vmatprep.subr.mxu0 %v438
    %3081 = vmatpush1.msra.mxu0 %v437
    %3082 = vmatprep.subr.mxu0 %v441
    %3083 = vmatpush1.msra.mxu0 %v440
    %3084 = vmatprep.subr.mxu0 %v444
    %3085 = vmatpush1.msra.mxu0 %v443
    %3086 = vmatprep.subr.mxu0 %v447
    %3087 = vmatpush1.msra.mxu0 %v446
    %3088 = vmatprep.subr.mxu0 %v450
    %3089 = vmatpush1.msra.mxu0 %v449
    %3090 = vmatprep.subr.mxu0 %v453
    %3091 = vmatpush1.msra.mxu0 %v452
    %3092 = vmatprep.subr.mxu0 %v456
    %3093 = vmatpush1.msra.mxu0 %v455
    %3094 = vmatprep.subr.mxu0 %v459
    %3095 = vmatpush1.msra.mxu0 %v458
    %3096 = vmatprep.subr.mxu0 %v462
    %3097 = vmatpush1.msra.mxu0 %v461
    %3098 = vmatprep.subr.mxu0 %v465
    %3099 = vmatpush1.msra.mxu0 %v464
    %3100 = vmatprep.subr.mxu0 %v468
    %3101 = vmatpush1.msra.mxu0 %v467
    %3102 = vmatprep.subr.mxu0 %v471
    %3103 = vmatpush1.msra.mxu0 %v470
    %3104 = vmatprep.subr.mxu0 %v474
    %3105 = vmatpush1.msra.mxu0 %v473
    %3106 = vmatprep.subr.mxu0 0.0
    %3107 = vmatpush1.msra.mxu0 0.0
    %3108 = vmatprep.subr.mxu0 0.0
    %3109 = vmatpush1.msra.mxu0 0.0
    %3110 = vmatprep.subr.mxu0 0.0
    %3111 = vmatpush1.msra.mxu0 0.0
    %3112 = vmatprep.subr.mxu0 0.0
    %3113 = vmatpush1.msra.mxu0 0.0
    %3114 = vmatprep.subr.mxu0 0.0
    %3115 = vmatpush1.msra.mxu0 0.0
    %3116 = vmatprep.subr.mxu0 0.0
    %3117 = vmatpush1.msra.mxu0 0.0
    %3118 = vmatprep.subr.mxu0 0.0
    %3119 = vmatpush1.msra.mxu0 0.0
    %3120 = vmatprep.subr.mxu0 0.0
    %3121 = vmatpush1.msra.mxu0 0.0
    %3122 = vmatprep.subr.mxu0 0.0
    %3123 = vmatpush1.msra.mxu0 0.0
    %3124 = vmatprep.subr.mxu0 0.0
    %3125 = vmatpush1.msra.mxu0 0.0
    %3126 = vmatprep.subr.mxu0 0.0
    %3127 = vmatpush1.msra.mxu0 0.0
    %3128 = vmatprep.subr.mxu0 0.0
    %3129 = vmatpush1.msra.mxu0 0.0
    %3130 = vmatprep.subr.mxu0 0.0
    %3131 = vmatpush1.msra.mxu0 0.0
    %3132 = vmatprep.subr.mxu0 0.0
    %3133 = vmatpush1.msra.mxu0 0.0
    %3134 = vmatprep.subr.mxu0 0.0
    %3135 = vmatpush1.msra.mxu0 0.0
    %3136 = vmatprep.subr.mxu0 0.0
    %3137 = vmatpush1.msra.mxu0 0.0
    %3138 = vmatprep.mubr.f32.mxu0 0.0
    %3139 = vmatmul.mubr.f32.gmra.mrb[0].mxu0 %v2978
    %v3140 = vpop.f32.mrb[0].mxu0
    %v3141 = vadd.f32 %v531, %v3140
    %v3142 = vpop.f32.mrb[0].mxu0
    %v3143 = vadd.f32 %v535, %v3142
    %3144 = vdwg.mxu0
    %3145 = vmatprep.subr.mxu0 0.0
    %3146 = vmatpush1.msra.mxu0 %v430
    %3147 = vmatprep.subr.mxu0 0.0
    %3148 = vmatpush1.msra.mxu0 %v433
    %3149 = vmatprep.subr.mxu0 0.0
    %3150 = vmatpush1.msra.mxu0 %v436
    %3151 = vmatprep.subr.mxu0 0.0
    %3152 = vmatpush1.msra.mxu0 %v439
    %3153 = vmatprep.subr.mxu0 0.0
    %3154 = vmatpush1.msra.mxu0 %v442
    %3155 = vmatprep.subr.mxu0 0.0
    %3156 = vmatpush1.msra.mxu0 %v445
    %3157 = vmatprep.subr.mxu0 0.0
    %3158 = vmatpush1.msra.mxu0 %v448
    %3159 = vmatprep.subr.mxu0 0.0
    %3160 = vmatpush1.msra.mxu0 %v451
    %3161 = vmatprep.subr.mxu0 0.0
    %3162 = vmatpush1.msra.mxu0 %v454
    %3163 = vmatprep.subr.mxu0 0.0
    %3164 = vmatpush1.msra.mxu0 %v457
    %3165 = vmatprep.subr.mxu0 0.0
    %3166 = vmatpush1.msra.mxu0 %v460
    %3167 = vmatprep.subr.mxu0 0.0
    %3168 = vmatpush1.msra.mxu0 %v463
    %3169 = vmatprep.subr.mxu0 0.0
    %3170 = vmatpush1.msra.mxu0 %v466
    %3171 = vmatprep.subr.mxu0 0.0
    %3172 = vmatpush1.msra.mxu0 %v469
    %3173 = vmatprep.subr.mxu0 0.0
    %3174 = vmatpush1.msra.mxu0 %v472
    %3175 = vmatprep.subr.mxu0 0.0
    %3176 = vmatpush1.msra.mxu0 %v475
    %3177 = vmatprep.subr.mxu0 0.0
    %3178 = vmatpush1.msra.mxu0 0.0
    %3179 = vmatprep.subr.mxu0 0.0
    %3180 = vmatpush1.msra.mxu0 0.0
    %3181 = vmatprep.subr.mxu0 0.0
    %3182 = vmatpush1.msra.mxu0 0.0
    %3183 = vmatprep.subr.mxu0 0.0
    %3184 = vmatpush1.msra.mxu0 0.0
    %3185 = vmatprep.subr.mxu0 0.0
    %3186 = vmatpush1.msra.mxu0 0.0
    %3187 = vmatprep.subr.mxu0 0.0
    %3188 = vmatpush1.msra.mxu0 0.0
    %3189 = vmatprep.subr.mxu0 0.0
    %3190 = vmatpush1.msra.mxu0 0.0
    %3191 = vmatprep.subr.mxu0 0.0
    %3192 = vmatpush1.msra.mxu0 0.0
    %3193 = vmatprep.subr.mxu0 0.0
    %3194 = vmatpush1.msra.mxu0 0.0
    %3195 = vmatprep.subr.mxu0 0.0
    %3196 = vmatpush1.msra.mxu0 0.0
    %3197 = vmatprep.subr.mxu0 0.0
    %3198 = vmatpush1.msra.mxu0 0.0
    %3199 = vmatprep.subr.mxu0 0.0
    %3200 = vmatpush1.msra.mxu0 0.0
    %3201 = vmatprep.subr.mxu0 0.0
    %3202 = vmatpush1.msra.mxu0 0.0
    %3203 = vmatprep.subr.mxu0 0.0
    %3204 = vmatpush1.msra.mxu0 0.0
    %3205 = vmatprep.subr.mxu0 0.0
    %3206 = vmatpush1.msra.mxu0 0.0
    %3207 = vmatprep.subr.mxu0 0.0
    %3208 = vmatpush1.msra.mxu0 0.0
    %3209 = vmatprep.mubr.f32.mxu0 0.0
    %3210 = vmatmul.mubr.f32.gmra.mrb[0].mxu0 %v2978
    %v3211 = vpop.f32.mrb[0].mxu0
    %v3212 = vadd.f32 %v539, %v3211
    %v3213 = vpop.f32.mrb[0].mxu0
    %3214 = vdwg.mxu0
    %3215 = vmatprep.subr.mxu0 %v478
    %3216 = vmatpush1.msra.mxu0 %v477
    %3217 = vmatprep.subr.mxu0 %v481
    %3218 = vmatpush1.msra.mxu0 %v480
    %3219 = vmatprep.subr.mxu0 %v484
    %3220 = vmatpush1.msra.mxu0 %v483
    %3221 = vmatprep.subr.mxu0 %v487
    %3222 = vmatpush1.msra.mxu0 %v486
    %3223 = vmatprep.subr.mxu0 %v490
    %3224 = vmatpush1.msra.mxu0 %v489
    %3225 = vmatprep.subr.mxu0 %v493
    %3226 = vmatpush1.msra.mxu0 %v492
    %3227 = vmatprep.subr.mxu0 %v496
    %3228 = vmatpush1.msra.mxu0 %v495
    %3229 = vmatprep.subr.mxu0 %v499
    %3230 = vmatpush1.msra.mxu0 %v498
    %3231 = vmatprep.subr.mxu0 %v502
    %3232 = vmatpush1.msra.mxu0 %v501
    %3233 = vmatprep.subr.mxu0 %v505
    %3234 = vmatpush1.msra.mxu0 %v504
    %3235 = vmatprep.subr.mxu0 %v508
    %3236 = vmatpush1.msra.mxu0 %v507
    %3237 = vmatprep.subr.mxu0 %v511
    %3238 = vmatpush1.msra.mxu0 %v510
    %3239 = vmatprep.subr.mxu0 %v514
    %3240 = vmatpush1.msra.mxu0 %v513
    %3241 = vmatprep.subr.mxu0 %v517
    %3242 = vmatpush1.msra.mxu0 %v516
    %3243 = vmatprep.subr.mxu0 %v520
    %3244 = vmatpush1.msra.mxu0 %v519
    %3245 = vmatprep.subr.mxu0 %v523
    %3246 = vmatpush1.msra.mxu0 %v522
    %3247 = vmatprep.subr.mxu0 0.0
    %3248 = vmatpush1.msra.mxu0 0.0
    %3249 = vmatprep.subr.mxu0 0.0
    %3250 = vmatpush1.msra.mxu0 0.0
    %3251 = vmatprep.subr.mxu0 0.0
    %3252 = vmatpush1.msra.mxu0 0.0
    %3253 = vmatprep.subr.mxu0 0.0
    %3254 = vmatpush1.msra.mxu0 0.0
    %3255 = vmatprep.subr.mxu0 0.0
    %3256 = vmatpush1.msra.mxu0 0.0
    %3257 = vmatprep.subr.mxu0 0.0
    %3258 = vmatpush1.msra.mxu0 0.0
    %3259 = vmatprep.subr.mxu0 0.0
    %3260 = vmatpush1.msra.mxu0 0.0
    %3261 = vmatprep.subr.mxu0 0.0
    %3262 = vmatpush1.msra.mxu0 0.0
    %3263 = vmatprep.subr.mxu0 0.0
    %3264 = vmatpush1.msra.mxu0 0.0
    %3265 = vmatprep.subr.mxu0 0.0
    %3266 = vmatpush1.msra.mxu0 0.0
    %3267 = vmatprep.subr.mxu0 0.0
    %3268 = vmatpush1.msra.mxu0 0.0
    %3269 = vmatprep.subr.mxu0 0.0
    %3270 = vmatpush1.msra.mxu0 0.0
    %3271 = vmatprep.subr.mxu0 0.0
    %3272 = vmatpush1.msra.mxu0 0.0
    %3273 = vmatprep.subr.mxu0 0.0
    %3274 = vmatpush1.msra.mxu0 0.0
    %3275 = vmatprep.subr.mxu0 0.0
    %3276 = vmatpush1.msra.mxu0 0.0
    %3277 = vmatprep.subr.mxu0 0.0
    %3278 = vmatpush1.msra.mxu0 0.0
    %3279 = vmatprep.mubr.f32.mxu0 0.0
    %3280 = vmatmul.mubr.f32.gmra.mrb[0].mxu0 %v3017
    %v3281 = vpop.f32.mrb[0].mxu0
    %v3282 = vadd.f32 %v688, %v3281
    %v3283 = vpop.f32.mrb[0].mxu0
    %v3284 = vadd.f32 %v692, %v3283
    %3285 = vdwg.mxu0
    %3286 = vmatprep.subr.mxu0 0.0
    %3287 = vmatpush1.msra.mxu0 %v479
    %3288 = vmatprep.subr.mxu0 0.0
    %3289 = vmatpush1.msra.mxu0 %v482
    %3290 = vmatprep.subr.mxu0 0.0
    %3291 = vmatpush1.msra.mxu0 %v485
    %3292 = vmatprep.subr.mxu0 0.0
    %3293 = vmatpush1.msra.mxu0 %v488
    %3294 = vmatprep.subr.mxu0 0.0
    %3295 = vmatpush1.msra.mxu0 %v491
    %3296 = vmatprep.subr.mxu0 0.0
    %3297 = vmatpush1.msra.mxu0 %v494
    %3298 = vmatprep.subr.mxu0 0.0
    %3299 = vmatpush1.msra.mxu0 %v497
    %3300 = vmatprep.subr.mxu0 0.0
    %3301 = vmatpush1.msra.mxu0 %v500
    %3302 = vmatprep.subr.mxu0 0.0
    %3303 = vmatpush1.msra.mxu0 %v503
    %3304 = vmatprep.subr.mxu0 0.0
    %3305 = vmatpush1.msra.mxu0 %v506
    %3306 = vmatprep.subr.mxu0 0.0
    %3307 = vmatpush1.msra.mxu0 %v509
    %3308 = vmatprep.subr.mxu0 0.0
    %3309 = vmatpush1.msra.mxu0 %v512
    %3310 = vmatprep.subr.mxu0 0.0
    %3311 = vmatpush1.msra.mxu0 %v515
    %3312 = vmatprep.subr.mxu0 0.0
    %3313 = vmatpush1.msra.mxu0 %v518
    %3314 = vmatprep.subr.mxu0 0.0
    %3315 = vmatpush1.msra.mxu0 %v521
    %3316 = vmatprep.subr.mxu0 0.0
    %3317 = vmatpush1.msra.mxu0 %v524
    %3318 = vmatprep.subr.mxu0 0.0
    %3319 = vmatpush1.msra.mxu0 0.0
    %3320 = vmatprep.subr.mxu0 0.0
    %3321 = vmatpush1.msra.mxu0 0.0
    %3322 = vmatprep.subr.mxu0 0.0
    %3323 = vmatpush1.msra.mxu0 0.0
    %3324 = vmatprep.subr.mxu0 0.0
    %3325 = vmatpush1.msra.mxu0 0.0
    %3326 = vmatprep.subr.mxu0 0.0
    %3327 = vmatpush1.msra.mxu0 0.0
    %3328 = vmatprep.subr.mxu0 0.0
    %3329 = vmatpush1.msra.mxu0 0.0
    %3330 = vmatprep.subr.mxu0 0.0
    %3331 = vmatpush1.msra.mxu0 0.0
    %3332 = vmatprep.subr.mxu0 0.0
    %3333 = vmatpush1.msra.mxu0 0.0
    %3334 = vmatprep.subr.mxu0 0.0
    %3335 = vmatpush1.msra.mxu0 0.0
    %3336 = vmatprep.subr.mxu0 0.0
    %3337 = vmatpush1.msra.mxu0 0.0
    %3338 = vmatprep.subr.mxu0 0.0
    %3339 = vmatpush1.msra.mxu0 0.0
    %3340 = vmatprep.subr.mxu0 0.0
    %3341 = vmatpush1.msra.mxu0 0.0
    %3342 = vmatprep.subr.mxu0 0.0
    %3343 = vmatpush1.msra.mxu0 0.0
    %3344 = vmatprep.subr.mxu0 0.0
    %3345 = vmatpush1.msra.mxu0 0.0
    %3346 = vmatprep.subr.mxu0 0.0
    %3347 = vmatpush1.msra.mxu0 0.0
    %3348 = vmatprep.subr.mxu0 0.0
    %3349 = vmatpush1.msra.mxu0 0.0
    %3350 = vmatprep.mubr.f32.mxu0 0.0
    %3351 = vmatmul.mubr.f32.gmra.mrb[0].mxu0 %v3017
    %v3352 = vpop.f32.mrb[0].mxu0
    %v3353 = vadd.f32 %v696, %v3352
    %v3354 = vpop.f32.mrb[0].mxu0
    %3355 = vdwg.mxu0
    %v3357 = vrot.slane %v3141, 4
    %v3359 = vadd.f32 %v270, %v3357
    %v3360 = vxor.u32 %v3359, 2147483648
    %v3361 = vmul.f32 %v3360, 1.442695
    %v3362 = vpow.pop %v3361
    %v3363 = vadd.f32 %v3362, 1.0
    %v3364 = vrcp.pop %v3363
    %v3365 = vmul.f32 1.0, %v3364
    %v3367 = vrot.slane %v3143, 4
    %v3369 = vadd.f32 %v272, %v3367
    %v3370 = vxor.u32 %v3369, 2147483648
    %v3371 = vmul.f32 %v3370, 1.442695
    %v3372 = vpow.pop %v3371
    %v3373 = vadd.f32 %v3372, 1.0
    %v3374 = vrcp.pop %v3373
    %v3375 = vmul.f32 1.0, %v3374
    %v3377 = vrot.slane %v3212, 4
    %v3379 = vmul.f32 %v3365, %v3377
    %v3380 = vadd.f32 %v347, %v3379
    %v3381 = vtanh.pop %v3380
    %v3382 = vsub.f32 1.0, %v3375
    %v3383 = vmul.f32 %v3382, %v3381
    %v3385 = vrot.slane %v2978, 4
    %v3387 = vmul.f32 %v3375, %v3385
    %v3388 = vadd.f32 %v3383, %v3387
    %v3390 = vrot.slane %v3388, 4
    %v3392 = vmul.f32 %v1340, %v3390
    %v3393 = vmul.f32 %v1348, %v2978
    %v3394 = vadd.f32 %v3392, %v3393
    %v3396 = vrot.slane %v3282, 6
    %v3398 = vadd.f32 %v343, %v3396
    %v3399 = vxor.u32 %v3398, 2147483648
    %v3400 = vmul.f32 %v3399, 1.442695
    %v3401 = vpow.pop %v3400
    %v3402 = vadd.f32 %v3401, 1.0
    %v3403 = vrcp.pop %v3402
    %v3404 = vmul.f32 1.0, %v3403
    %v3406 = vrot.slane %v3284, 6
    %v3408 = vadd.f32 %v418, %v3406
    %v3409 = vxor.u32 %v3408, 2147483648
    %v3410 = vmul.f32 %v3409, 1.442695
    %v3411 = vpow.pop %v3410
    %v3412 = vadd.f32 %v3411, 1.0
    %v3413 = vrcp.pop %v3412
    %v3414 = vmul.f32 1.0, %v3413
    %v3416 = vrot.slane %v3353, 6
    %v3418 = vmul.f32 %v3404, %v3416
    %v3419 = vadd.f32 %v420, %v3418
    %v3420 = vtanh.pop %v3419
    %v3421 = vsub.f32 1.0, %v3414
    %v3422 = vmul.f32 %v3421, %v3420
    %v3424 = vrot.slane %v3017, 6
    %v3426 = vmul.f32 %v3414, %v3424
    %v3427 = vadd.f32 %v3422, %v3426
    %v3429 = vrot.slane %v3427, 2
    %v3431 = vmul.f32 %v1293, %v3429
    %v3432 = vmul.f32 %v1301, %v3017
    %v3433 = vadd.f32 %v3431, %v3432
    %v3434 = vmul.f32 %v1340, %v3394
    %v3437 = vunpack.c.l.s4 1966171168
    %v3438 = vunpack.c.0.s8 %v3437
    %v3439 = vlaneseq
    %v3440 = vshrl.u32 %v3439, 7
    %v3441 = vsub.s32 %v3438, %v3440
    %v3442 = vrot.slane %v3434, %v3441
    %v3443 = vcombine.high %v3442, %v3442
    %v3445 = vunpack.c.l.s4 1966171168
    %v3446 = vunpack.c.0.s8 %v3445
    %v3447 = vlaneseq
    %v3448 = vshrl.u32 %v3447, 7
    %v3449 = vsub.s32 %v3446, %v3448
    %v3450 = vrot.slane %v3442, %v3449
    %v3452 = vunpack.c.l.s4 1966171168
    %v3453 = vunpack.c.0.s8 %v3452
    %v3454 = vlaneseq
    %v3455 = vshrl.u32 %v3454, 7
    %v3456 = vsub.s32 %v3453, %v3455
    %v3457 = vrot.slane %v3443, %v3456
    %3460 = vst [vmem:[#allocation14 + $0x6] sm:$0x1] %v3450
    %3461 = vst [vmem:[#allocation14 + $0x16] sm:$0x1] %v3457
    %v3462 = vmul.f32 %v1293, %v3433
    %v3465 = vunpack.c.l.s4 1966171168
    %v3466 = vunpack.c.0.s8 %v3465
    %v3467 = vlaneseq
    %v3468 = vshrl.u32 %v3467, 7
    %v3469 = vsub.s32 %v3466, %v3468
    %v3470 = vrot.slane %v3462, %v3469
    %v3471 = vcombine.high %v3470, %v3470
    %v3473 = vunpack.c.l.s4 1966171168
    %v3474 = vunpack.c.0.s8 %v3473
    %v3475 = vlaneseq
    %v3476 = vshrl.u32 %v3475, 7
    %v3477 = vsub.s32 %v3474, %v3476
    %v3478 = vrot.slane %v3470, %v3477
    %v3480 = vunpack.c.l.s4 1966171168
    %v3481 = vunpack.c.0.s8 %v3480
    %v3482 = vlaneseq
    %v3483 = vshrl.u32 %v3482, 7
    %v3484 = vsub.s32 %v3481, %v3483
    %v3485 = vrot.slane %v3471, %v3484
    %3488 = vst [vmem:[#allocation14 + $0x9] sm:$0x1] %v3478
    %3489 = vst [vmem:[#allocation14 + $0x19] sm:$0x1] %v3485
    %3490 = vmatprep.subr.mxu0 %v429
    %3491 = vmatpush1.msra.mxu0 %v428
    %3492 = vmatprep.subr.mxu0 %v432
    %3493 = vmatpush1.msra.mxu0 %v431
    %3494 = vmatprep.subr.mxu0 %v435
    %3495 = vmatpush1.msra.mxu0 %v434
    %3496 = vmatprep.subr.mxu0 %v438
    %3497 = vmatpush1.msra.mxu0 %v437
    %3498 = vmatprep.subr.mxu0 %v441
    %3499 = vmatpush1.msra.mxu0 %v440
    %3500 = vmatprep.subr.mxu0 %v444
    %3501 = vmatpush1.msra.mxu0 %v443
    %3502 = vmatprep.subr.mxu0 %v447
    %3503 = vmatpush1.msra.mxu0 %v446
    %3504 = vmatprep.subr.mxu0 %v450
    %3505 = vmatpush1.msra.mxu0 %v449
    %3506 = vmatprep.subr.mxu0 %v453
    %3507 = vmatpush1.msra.mxu0 %v452
    %3508 = vmatprep.subr.mxu0 %v456
    %3509 = vmatpush1.msra.mxu0 %v455
    %3510 = vmatprep.subr.mxu0 %v459
    %3511 = vmatpush1.msra.mxu0 %v458
    %3512 = vmatprep.subr.mxu0 %v462
    %3513 = vmatpush1.msra.mxu0 %v461
    %3514 = vmatprep.subr.mxu0 %v465
    %3515 = vmatpush1.msra.mxu0 %v464
    %3516 = vmatprep.subr.mxu0 %v468
    %3517 = vmatpush1.msra.mxu0 %v467
    %3518 = vmatprep.subr.mxu0 %v471
    %3519 = vmatpush1.msra.mxu0 %v470
    %3520 = vmatprep.subr.mxu0 %v474
    %3521 = vmatpush1.msra.mxu0 %v473
    %3522 = vmatprep.subr.mxu0 0.0
    %3523 = vmatpush1.msra.mxu0 0.0
    %3524 = vmatprep.subr.mxu0 0.0
    %3525 = vmatpush1.msra.mxu0 0.0
    %3526 = vmatprep.subr.mxu0 0.0
    %3527 = vmatpush1.msra.mxu0 0.0
    %3528 = vmatprep.subr.mxu0 0.0
    %3529 = vmatpush1.msra.mxu0 0.0
    %3530 = vmatprep.subr.mxu0 0.0
    %3531 = vmatpush1.msra.mxu0 0.0
    %3532 = vmatprep.subr.mxu0 0.0
    %3533 = vmatpush1.msra.mxu0 0.0
    %3534 = vmatprep.subr.mxu0 0.0
    %3535 = vmatpush1.msra.mxu0 0.0
    %3536 = vmatprep.subr.mxu0 0.0
    %3537 = vmatpush1.msra.mxu0 0.0
    %3538 = vmatprep.subr.mxu0 0.0
    %3539 = vmatpush1.msra.mxu0 0.0
    %3540 = vmatprep.subr.mxu0 0.0
    %3541 = vmatpush1.msra.mxu0 0.0
    %3542 = vmatprep.subr.mxu0 0.0
    %3543 = vmatpush1.msra.mxu0 0.0
    %3544 = vmatprep.subr.mxu0 0.0
    %3545 = vmatpush1.msra.mxu0 0.0
    %3546 = vmatprep.subr.mxu0 0.0
    %3547 = vmatpush1.msra.mxu0 0.0
    %3548 = vmatprep.subr.mxu0 0.0
    %3549 = vmatpush1.msra.mxu0 0.0
    %3550 = vmatprep.subr.mxu0 0.0
    %3551 = vmatpush1.msra.mxu0 0.0
    %3552 = vmatprep.subr.mxu0 0.0
    %3553 = vmatpush1.msra.mxu0 0.0
    %3554 = vmatprep.mubr.f32.mxu0 0.0
    %3555 = vmatmul.mubr.f32.gmra.mrb[0].mxu0 %v3394
    %v3556 = vpop.f32.mrb[0].mxu0
    %v3557 = vadd.f32 %v531, %v3556
    %v3558 = vpop.f32.mrb[0].mxu0
    %v3559 = vadd.f32 %v535, %v3558
    %3560 = vdwg.mxu0
    %3561 = vmatprep.subr.mxu0 0.0
    %3562 = vmatpush1.msra.mxu0 %v430
    %3563 = vmatprep.subr.mxu0 0.0
    %3564 = vmatpush1.msra.mxu0 %v433
    %3565 = vmatprep.subr.mxu0 0.0
    %3566 = vmatpush1.msra.mxu0 %v436
    %3567 = vmatprep.subr.mxu0 0.0
    %3568 = vmatpush1.msra.mxu0 %v439
    %3569 = vmatprep.subr.mxu0 0.0
    %3570 = vmatpush1.msra.mxu0 %v442
    %3571 = vmatprep.subr.mxu0 0.0
    %3572 = vmatpush1.msra.mxu0 %v445
    %3573 = vmatprep.subr.mxu0 0.0
    %3574 = vmatpush1.msra.mxu0 %v448
    %3575 = vmatprep.subr.mxu0 0.0
    %3576 = vmatpush1.msra.mxu0 %v451
    %3577 = vmatprep.subr.mxu0 0.0
    %3578 = vmatpush1.msra.mxu0 %v454
    %3579 = vmatprep.subr.mxu0 0.0
    %3580 = vmatpush1.msra.mxu0 %v457
    %3581 = vmatprep.subr.mxu0 0.0
    %3582 = vmatpush1.msra.mxu0 %v460
    %3583 = vmatprep.subr.mxu0 0.0
    %3584 = vmatpush1.msra.mxu0 %v463
    %3585 = vmatprep.subr.mxu0 0.0
    %3586 = vmatpush1.msra.mxu0 %v466
    %3587 = vmatprep.subr.mxu0 0.0
    %3588 = vmatpush1.msra.mxu0 %v469
    %3589 = vmatprep.subr.mxu0 0.0
    %3590 = vmatpush1.msra.mxu0 %v472
    %3591 = vmatprep.subr.mxu0 0.0
    %3592 = vmatpush1.msra.mxu0 %v475
    %3593 = vmatprep.subr.mxu0 0.0
    %3594 = vmatpush1.msra.mxu0 0.0
    %3595 = vmatprep.subr.mxu0 0.0
    %3596 = vmatpush1.msra.mxu0 0.0
    %3597 = vmatprep.subr.mxu0 0.0
    %3598 = vmatpush1.msra.mxu0 0.0
    %3599 = vmatprep.subr.mxu0 0.0
    %3600 = vmatpush1.msra.mxu0 0.0
    %3601 = vmatprep.subr.mxu0 0.0
    %3602 = vmatpush1.msra.mxu0 0.0
    %3603 = vmatprep.subr.mxu0 0.0
    %3604 = vmatpush1.msra.mxu0 0.0
    %3605 = vmatprep.subr.mxu0 0.0
    %3606 = vmatpush1.msra.mxu0 0.0
    %3607 = vmatprep.subr.mxu0 0.0
    %3608 = vmatpush1.msra.mxu0 0.0
    %3609 = vmatprep.subr.mxu0 0.0
    %3610 = vmatpush1.msra.mxu0 0.0
    %3611 = vmatprep.subr.mxu0 0.0
    %3612 = vmatpush1.msra.mxu0 0.0
    %3613 = vmatprep.subr.mxu0 0.0
    %3614 = vmatpush1.msra.mxu0 0.0
    %3615 = vmatprep.subr.mxu0 0.0
    %3616 = vmatpush1.msra.mxu0 0.0
    %3617 = vmatprep.subr.mxu0 0.0
    %3618 = vmatpush1.msra.mxu0 0.0
    %3619 = vmatprep.subr.mxu0 0.0
    %3620 = vmatpush1.msra.mxu0 0.0
    %3621 = vmatprep.subr.mxu0 0.0
    %3622 = vmatpush1.msra.mxu0 0.0
    %3623 = vmatprep.subr.mxu0 0.0
    %3624 = vmatpush1.msra.mxu0 0.0
    %3625 = vmatprep.mubr.f32.mxu0 0.0
    %3626 = vmatmul.mubr.f32.gmra.mrb[0].mxu0 %v3394
    %v3627 = vpop.f32.mrb[0].mxu0
    %v3628 = vadd.f32 %v539, %v3627
    %v3629 = vpop.f32.mrb[0].mxu0
    %3630 = vdwg.mxu0
    %3631 = vmatprep.subr.mxu0 %v478
    %3632 = vmatpush1.msra.mxu0 %v477
    %3633 = vmatprep.subr.mxu0 %v481
    %3634 = vmatpush1.msra.mxu0 %v480
    %3635 = vmatprep.subr.mxu0 %v484
    %3636 = vmatpush1.msra.mxu0 %v483
    %3637 = vmatprep.subr.mxu0 %v487
    %3638 = vmatpush1.msra.mxu0 %v486
    %3639 = vmatprep.subr.mxu0 %v490
    %3640 = vmatpush1.msra.mxu0 %v489
    %3641 = vmatprep.subr.mxu0 %v493
    %3642 = vmatpush1.msra.mxu0 %v492
    %3643 = vmatprep.subr.mxu0 %v496
    %3644 = vmatpush1.msra.mxu0 %v495
    %3645 = vmatprep.subr.mxu0 %v499
    %3646 = vmatpush1.msra.mxu0 %v498
    %3647 = vmatprep.subr.mxu0 %v502
    %3648 = vmatpush1.msra.mxu0 %v501
    %3649 = vmatprep.subr.mxu0 %v505
    %3650 = vmatpush1.msra.mxu0 %v504
    %3651 = vmatprep.subr.mxu0 %v508
    %3652 = vmatpush1.msra.mxu0 %v507
    %3653 = vmatprep.subr.mxu0 %v511
    %3654 = vmatpush1.msra.mxu0 %v510
    %3655 = vmatprep.subr.mxu0 %v514
    %3656 = vmatpush1.msra.mxu0 %v513
    %3657 = vmatprep.subr.mxu0 %v517
    %3658 = vmatpush1.msra.mxu0 %v516
    %3659 = vmatprep.subr.mxu0 %v520
    %3660 = vmatpush1.msra.mxu0 %v519
    %3661 = vmatprep.subr.mxu0 %v523
    %3662 = vmatpush1.msra.mxu0 %v522
    %3663 = vmatprep.subr.mxu0 0.0
    %3664 = vmatpush1.msra.mxu0 0.0
    %3665 = vmatprep.subr.mxu0 0.0
    %3666 = vmatpush1.msra.mxu0 0.0
    %3667 = vmatprep.subr.mxu0 0.0
    %3668 = vmatpush1.msra.mxu0 0.0
    %3669 = vmatprep.subr.mxu0 0.0
    %3670 = vmatpush1.msra.mxu0 0.0
    %3671 = vmatprep.subr.mxu0 0.0
    %3672 = vmatpush1.msra.mxu0 0.0
    %3673 = vmatprep.subr.mxu0 0.0
    %3674 = vmatpush1.msra.mxu0 0.0
    %3675 = vmatprep.subr.mxu0 0.0
    %3676 = vmatpush1.msra.mxu0 0.0
    %3677 = vmatprep.subr.mxu0 0.0
    %3678 = vmatpush1.msra.mxu0 0.0
    %3679 = vmatprep.subr.mxu0 0.0
    %3680 = vmatpush1.msra.mxu0 0.0
    %3681 = vmatprep.subr.mxu0 0.0
    %3682 = vmatpush1.msra.mxu0 0.0
    %3683 = vmatprep.subr.mxu0 0.0
    %3684 = vmatpush1.msra.mxu0 0.0
    %3685 = vmatprep.subr.mxu0 0.0
    %3686 = vmatpush1.msra.mxu0 0.0
    %3687 = vmatprep.subr.mxu0 0.0
    %3688 = vmatpush1.msra.mxu0 0.0
    %3689 = vmatprep.subr.mxu0 0.0
    %3690 = vmatpush1.msra.mxu0 0.0
    %3691 = vmatprep.subr.mxu0 0.0
    %3692 = vmatpush1.msra.mxu0 0.0
    %3693 = vmatprep.subr.mxu0 0.0
    %3694 = vmatpush1.msra.mxu0 0.0
    %3695 = vmatprep.mubr.f32.mxu0 0.0
    %3696 = vmatmul.mubr.f32.gmra.mrb[0].mxu0 %v3433
    %v3697 = vpop.f32.mrb[0].mxu0
    %v3698 = vadd.f32 %v688, %v3697
    %v3699 = vpop.f32.mrb[0].mxu0
    %v3700 = vadd.f32 %v692, %v3699
    %3701 = vdwg.mxu0
    %3702 = vmatprep.subr.mxu0 0.0
    %3703 = vmatpush1.msra.mxu0 %v479
    %3704 = vmatprep.subr.mxu0 0.0
    %3705 = vmatpush1.msra.mxu0 %v482
    %3706 = vmatprep.subr.mxu0 0.0
    %3707 = vmatpush1.msra.mxu0 %v485
    %3708 = vmatprep.subr.mxu0 0.0
    %3709 = vmatpush1.msra.mxu0 %v488
    %3710 = vmatprep.subr.mxu0 0.0
    %3711 = vmatpush1.msra.mxu0 %v491
    %3712 = vmatprep.subr.mxu0 0.0
    %3713 = vmatpush1.msra.mxu0 %v494
    %3714 = vmatprep.subr.mxu0 0.0
    %3715 = vmatpush1.msra.mxu0 %v497
    %3716 = vmatprep.subr.mxu0 0.0
    %3717 = vmatpush1.msra.mxu0 %v500
    %3718 = vmatprep.subr.mxu0 0.0
    %3719 = vmatpush1.msra.mxu0 %v503
    %3720 = vmatprep.subr.mxu0 0.0
    %3721 = vmatpush1.msra.mxu0 %v506
    %3722 = vmatprep.subr.mxu0 0.0
    %3723 = vmatpush1.msra.mxu0 %v509
    %3724 = vmatprep.subr.mxu0 0.0
    %3725 = vmatpush1.msra.mxu0 %v512
    %3726 = vmatprep.subr.mxu0 0.0
    %3727 = vmatpush1.msra.mxu0 %v515
    %3728 = vmatprep.subr.mxu0 0.0
    %3729 = vmatpush1.msra.mxu0 %v518
    %3730 = vmatprep.subr.mxu0 0.0
    %3731 = vmatpush1.msra.mxu0 %v521
    %3732 = vmatprep.subr.mxu0 0.0
    %3733 = vmatpush1.msra.mxu0 %v524
    %3734 = vmatprep.subr.mxu0 0.0
    %3735 = vmatpush1.msra.mxu0 0.0
    %3736 = vmatprep.subr.mxu0 0.0
    %3737 = vmatpush1.msra.mxu0 0.0
    %3738 = vmatprep.subr.mxu0 0.0
    %3739 = vmatpush1.msra.mxu0 0.0
    %3740 = vmatprep.subr.mxu0 0.0
    %3741 = vmatpush1.msra.mxu0 0.0
    %3742 = vmatprep.subr.mxu0 0.0
    %3743 = vmatpush1.msra.mxu0 0.0
    %3744 = vmatprep.subr.mxu0 0.0
    %3745 = vmatpush1.msra.mxu0 0.0
    %3746 = vmatprep.subr.mxu0 0.0
    %3747 = vmatpush1.msra.mxu0 0.0
    %3748 = vmatprep.subr.mxu0 0.0
    %3749 = vmatpush1.msra.mxu0 0.0
    %3750 = vmatprep.subr.mxu0 0.0
    %3751 = vmatpush1.msra.mxu0 0.0
    %3752 = vmatprep.subr.mxu0 0.0
    %3753 = vmatpush1.msra.mxu0 0.0
    %3754 = vmatprep.subr.mxu0 0.0
    %3755 = vmatpush1.msra.mxu0 0.0
    %3756 = vmatprep.subr.mxu0 0.0
    %3757 = vmatpush1.msra.mxu0 0.0
    %3758 = vmatprep.subr.mxu0 0.0
    %3759 = vmatpush1.msra.mxu0 0.0
    %3760 = vmatprep.subr.mxu0 0.0
    %3761 = vmatpush1.msra.mxu0 0.0
    %3762 = vmatprep.subr.mxu0 0.0
    %3763 = vmatpush1.msra.mxu0 0.0
    %3764 = vmatprep.subr.mxu0 0.0
    %3765 = vmatpush1.msra.mxu0 0.0
    %3766 = vmatprep.mubr.f32.mxu0 0.0
    %3767 = vmatmul.mubr.f32.gmra.mrb[0].mxu0 %v3433
    %v3768 = vpop.f32.mrb[0].mxu0
    %v3769 = vadd.f32 %v696, %v3768
    %v3770 = vpop.f32.mrb[0].mxu0
    %3771 = vdwg.mxu0
    %v3773 = vrot.slane %v3557, 2
    %v3775 = vadd.f32 %v270, %v3773
    %v3776 = vxor.u32 %v3775, 2147483648
    %v3777 = vmul.f32 %v3776, 1.442695
    %v3778 = vpow.pop %v3777
    %v3779 = vadd.f32 %v3778, 1.0
    %v3780 = vrcp.pop %v3779
    %v3781 = vmul.f32 1.0, %v3780
    %v3783 = vrot.slane %v3559, 2
    %v3785 = vadd.f32 %v272, %v3783
    %v3786 = vxor.u32 %v3785, 2147483648
    %v3787 = vmul.f32 %v3786, 1.442695
    %v3788 = vpow.pop %v3787
    %v3789 = vadd.f32 %v3788, 1.0
    %v3790 = vrcp.pop %v3789
    %v3791 = vmul.f32 1.0, %v3790
    %v3793 = vrot.slane %v3628, 2
    %v3795 = vmul.f32 %v3781, %v3793
    %v3796 = vadd.f32 %v347, %v3795
    %v3797 = vtanh.pop %v3796
    %v3798 = vsub.f32 1.0, %v3791
    %v3799 = vmul.f32 %v3798, %v3797
    %v3801 = vrot.slane %v3394, 2
    %v3803 = vmul.f32 %v3791, %v3801
    %v3804 = vadd.f32 %v3799, %v3803
    %v3806 = vrot.slane %v3804, 6
    %v3808 = vmul.f32 %v908, %v3806
    %v3809 = vmul.f32 %v916, %v3394
    %v3810 = vadd.f32 %v3808, %v3809
    %v3811 = vadd.f32 %v343, %v3698
    %v3812 = vxor.u32 %v3811, 2147483648
    %v3813 = vmul.f32 %v3812, 1.442695
    %v3814 = vpow.pop %v3813
    %v3815 = vadd.f32 %v3814, 1.0
    %v3816 = vrcp.pop %v3815
    %v3817 = vmul.f32 1.0, %v3816
    %v3818 = vadd.f32 %v418, %v3700
    %v3819 = vxor.u32 %v3818, 2147483648
    %v3820 = vmul.f32 %v3819, 1.442695
    %v3821 = vpow.pop %v3820
    %v3822 = vadd.f32 %v3821, 1.0
    %v3823 = vrcp.pop %v3822
    %v3824 = vmul.f32 1.0, %v3823
    %v3825 = vmul.f32 %v3817, %v3769
    %v3826 = vadd.f32 %v420, %v3825
    %v3827 = vtanh.pop %v3826
    %v3828 = vsub.f32 1.0, %v3824
    %v3829 = vmul.f32 %v3828, %v3827
    %v3830 = vmul.f32 %v3824, %v3433
    %v3831 = vadd.f32 %v3829, %v3830
    %v3832 = vmul.f32 %v865, %v3831
    %v3833 = vmul.f32 %v872, %v3433
    %v3834 = vadd.f32 %v3832, %v3833
    %v3835 = vmul.f32 %v908, %v3810
    %v3838 = vunpack.c.l.s4 1966171168
    %v3839 = vunpack.c.0.s8 %v3838
    %v3840 = vlaneseq
    %v3841 = vshrl.u32 %v3840, 7
    %v3842 = vsub.s32 %v3839, %v3841
    %v3843 = vrot.slane %v3835, %v3842
    %v3844 = vcombine.high %v3843, %v3843
    %v3846 = vunpack.c.l.s4 1966171168
    %v3847 = vunpack.c.0.s8 %v3846
    %v3848 = vlaneseq
    %v3849 = vshrl.u32 %v3848, 7
    %v3850 = vsub.s32 %v3847, %v3849
    %v3851 = vrot.slane %v3843, %v3850
    %v3853 = vunpack.c.l.s4 1966171168
    %v3854 = vunpack.c.0.s8 %v3853
    %v3855 = vlaneseq
    %v3856 = vshrl.u32 %v3855, 7
    %v3857 = vsub.s32 %v3854, %v3856
    %v3858 = vrot.slane %v3844, %v3857
    %3861 = vst [vmem:[#allocation14 + $0x7] sm:$0x1] %v3851
    %3862 = vst [vmem:[#allocation14 + $0x17] sm:$0x1] %v3858
    %v3863 = vmul.f32 %v865, %v3834
    %v3866 = vunpack.c.l.s4 1966171168
    %v3867 = vunpack.c.0.s8 %v3866
    %v3868 = vlaneseq
    %v3869 = vshrl.u32 %v3868, 7
    %v3870 = vsub.s32 %v3867, %v3869
    %v3871 = vrot.slane %v3863, %v3870
    %v3872 = vcombine.high %v3871, %v3871
    %v3874 = vunpack.c.l.s4 1966171168
    %v3875 = vunpack.c.0.s8 %v3874
    %v3876 = vlaneseq
    %v3877 = vshrl.u32 %v3876, 7
    %v3878 = vsub.s32 %v3875, %v3877
    %v3879 = vrot.slane %v3871, %v3878
    %v3881 = vunpack.c.l.s4 1966171168
    %v3882 = vunpack.c.0.s8 %v3881
    %v3883 = vlaneseq
    %v3884 = vshrl.u32 %v3883, 7
    %v3885 = vsub.s32 %v3882, %v3884
    %v3886 = vrot.slane %v3872, %v3885
    %3889 = vst [vmem:[#allocation14 + $0x8] sm:$0x1] %v3879
    %3890 = vst [vmem:[#allocation14 + $0x18] sm:$0x1] %v3886
    %v3891 = vld [vmem:[#allocation11] sm:$0xff]
    %v3892 = vld [vmem:[#allocation11 + $0x8] sm:$0xff]
    %v3893 = vld [vmem:[#allocation11 + $0x10] sm:$0xff]
    %v3894 = vld [vmem:[#allocation11 + $0x18] sm:$0xff]
    %v3895 = vld [vmem:[#allocation11 + $0x20] sm:$0xff]
    %v3896 = vld [vmem:[#allocation11 + $0x28] sm:$0xff]
    %v3897 = vld [vmem:[#allocation11 + $0x30] sm:$0xff]
    %v3898 = vld [vmem:[#allocation11 + $0x38] sm:$0xff]
    %v3899 = vld [vmem:[#allocation11 + $0x40] sm:$0xff]
    %v3900 = vld [vmem:[#allocation11 + $0x48] sm:$0xff]
    %v3901 = vld [vmem:[#allocation11 + $0x50] sm:$0xff]
    %v3902 = vld [vmem:[#allocation11 + $0x58] sm:$0xff]
    %v3903 = vld [vmem:[#allocation11 + $0x60] sm:$0xff]
    %v3904 = vld [vmem:[#allocation11 + $0x68] sm:$0xff]
    %v3905 = vld [vmem:[#allocation11 + $0x70] sm:$0xff]
    %v3906 = vld [vmem:[#allocation11 + $0x78] sm:$0xff]
    %v3907 = vld [vmem:[#allocation13] sm:$0xff]
    %v3908 = vld [vmem:[#allocation13 + $0x8] sm:$0xff]
    %v3909 = vld [vmem:[#allocation13 + $0x10] sm:$0xff]
    %v3910 = vld [vmem:[#allocation13 + $0x18] sm:$0xff]
    %v3911 = vld [vmem:[#allocation13 + $0x20] sm:$0xff]
    %v3912 = vld [vmem:[#allocation13 + $0x28] sm:$0xff]
    %v3913 = vld [vmem:[#allocation13 + $0x30] sm:$0xff]
    %v3914 = vld [vmem:[#allocation13 + $0x38] sm:$0xff]
    %v3915 = vld [vmem:[#allocation13 + $0x40] sm:$0xff]
    %v3916 = vld [vmem:[#allocation13 + $0x48] sm:$0xff]
    %v3917 = vld [vmem:[#allocation13 + $0x50] sm:$0xff]
    %v3918 = vld [vmem:[#allocation13 + $0x58] sm:$0xff]
    %v3919 = vld [vmem:[#allocation13 + $0x60] sm:$0xff]
    %v3920 = vld [vmem:[#allocation13 + $0x68] sm:$0xff]
    %v3921 = vld [vmem:[#allocation13 + $0x70] sm:$0xff]
    %v3922 = vld [vmem:[#allocation13 + $0x78] sm:$0xff]
    %3923 = vmatprep.subr.mxu0 0.0
    %3924 = vmatpush1.msra.mxu0 %v3907
    %3925 = vmatprep.subr.mxu0 0.0
    %3926 = vmatpush1.msra.mxu0 %v3908
    %3927 = vmatprep.subr.mxu0 0.0
    %3928 = vmatpush1.msra.mxu0 %v3909
    %3929 = vmatprep.subr.mxu0 0.0
    %3930 = vmatpush1.msra.mxu0 %v3910
    %3931 = vmatprep.subr.mxu0 0.0
    %3932 = vmatpush1.msra.mxu0 %v3911
    %3933 = vmatprep.subr.mxu0 0.0
    %3934 = vmatpush1.msra.mxu0 %v3912
    %3935 = vmatprep.subr.mxu0 0.0
    %3936 = vmatpush1.msra.mxu0 %v3913
    %3937 = vmatprep.subr.mxu0 0.0
    %3938 = vmatpush1.msra.mxu0 %v3914
    %3939 = vmatprep.subr.mxu0 0.0
    %3940 = vmatpush1.msra.mxu0 %v3915
    %3941 = vmatprep.subr.mxu0 0.0
    %3942 = vmatpush1.msra.mxu0 %v3916
    %3943 = vmatprep.subr.mxu0 0.0
    %3944 = vmatpush1.msra.mxu0 %v3917
    %3945 = vmatprep.subr.mxu0 0.0
    %3946 = vmatpush1.msra.mxu0 %v3918
    %3947 = vmatprep.subr.mxu0 0.0
    %3948 = vmatpush1.msra.mxu0 %v3919
    %3949 = vmatprep.subr.mxu0 0.0
    %3950 = vmatpush1.msra.mxu0 %v3920
    %3951 = vmatprep.subr.mxu0 0.0
    %3952 = vmatpush1.msra.mxu0 %v3921
    %3953 = vmatprep.subr.mxu0 0.0
    %3954 = vmatpush1.msra.mxu0 %v3922
    %3955 = vmatprep.subr.mxu0 0.0
    %3956 = vmatpush1.msra.mxu0 0.0
    %3957 = vmatprep.subr.mxu0 0.0
    %3958 = vmatpush1.msra.mxu0 0.0
    %3959 = vmatprep.subr.mxu0 0.0
    %3960 = vmatpush1.msra.mxu0 0.0
    %3961 = vmatprep.subr.mxu0 0.0
    %3962 = vmatpush1.msra.mxu0 0.0
    %3963 = vmatprep.subr.mxu0 0.0
    %3964 = vmatpush1.msra.mxu0 0.0
    %3965 = vmatprep.subr.mxu0 0.0
    %3966 = vmatpush1.msra.mxu0 0.0
    %3967 = vmatprep.subr.mxu0 0.0
    %3968 = vmatpush1.msra.mxu0 0.0
    %3969 = vmatprep.subr.mxu0 0.0
    %3970 = vmatpush1.msra.mxu0 0.0
    %3971 = vmatprep.subr.mxu0 0.0
    %3972 = vmatpush1.msra.mxu0 0.0
    %3973 = vmatprep.subr.mxu0 0.0
    %3974 = vmatpush1.msra.mxu0 0.0
    %3975 = vmatprep.subr.mxu0 0.0
    %3976 = vmatpush1.msra.mxu0 0.0
    %3977 = vmatprep.subr.mxu0 0.0
    %3978 = vmatpush1.msra.mxu0 0.0
    %3979 = vmatprep.subr.mxu0 0.0
    %3980 = vmatpush1.msra.mxu0 0.0
    %3981 = vmatprep.subr.mxu0 0.0
    %3982 = vmatpush1.msra.mxu0 0.0
    %3983 = vmatprep.subr.mxu0 0.0
    %3984 = vmatpush1.msra.mxu0 0.0
    %3985 = vmatprep.subr.mxu0 0.0
    %3986 = vmatpush1.msra.mxu0 0.0
    %3987 = vmatprep.mubr.f32.mxu0 0.0
    %3988 = vmatmul.mubr.f32.gmra.mrb[0].mxu0 %v3834
    %v3989 = vpop.f32.mrb[0].mxu0
    %v3990 = vadd.f32 0.0, %v3989
    %v3991 = vpop.f32.mrb[0].mxu0
    %3992 = vdwg.mxu0
    %3993 = vmatprep.subr.mxu0 0.0
    %3994 = vmatpush1.msra.mxu0 %v3891
    %3995 = vmatprep.subr.mxu0 0.0
    %3996 = vmatpush1.msra.mxu0 %v3892
    %3997 = vmatprep.subr.mxu0 0.0
    %3998 = vmatpush1.msra.mxu0 %v3893
    %3999 = vmatprep.subr.mxu0 0.0
    %4000 = vmatpush1.msra.mxu0 %v3894
    %4001 = vmatprep.subr.mxu0 0.0
    %4002 = vmatpush1.msra.mxu0 %v3895
    %4003 = vmatprep.subr.mxu0 0.0
    %4004 = vmatpush1.msra.mxu0 %v3896
    %4005 = vmatprep.subr.mxu0 0.0
    %4006 = vmatpush1.msra.mxu0 %v3897
    %4007 = vmatprep.subr.mxu0 0.0
    %4008 = vmatpush1.msra.mxu0 %v3898
    %4009 = vmatprep.subr.mxu0 0.0
    %4010 = vmatpush1.msra.mxu0 %v3899
    %4011 = vmatprep.subr.mxu0 0.0
    %4012 = vmatpush1.msra.mxu0 %v3900
    %4013 = vmatprep.subr.mxu0 0.0
    %4014 = vmatpush1.msra.mxu0 %v3901
    %4015 = vmatprep.subr.mxu0 0.0
    %4016 = vmatpush1.msra.mxu0 %v3902
    %4017 = vmatprep.subr.mxu0 0.0
    %4018 = vmatpush1.msra.mxu0 %v3903
    %4019 = vmatprep.subr.mxu0 0.0
    %4020 = vmatpush1.msra.mxu0 %v3904
    %4021 = vmatprep.subr.mxu0 0.0
    %4022 = vmatpush1.msra.mxu0 %v3905
    %4023 = vmatprep.subr.mxu0 0.0
    %4024 = vmatpush1.msra.mxu0 %v3906
    %4025 = vmatprep.subr.mxu0 0.0
    %4026 = vmatpush1.msra.mxu0 0.0
    %4027 = vmatprep.subr.mxu0 0.0
    %4028 = vmatpush1.msra.mxu0 0.0
    %4029 = vmatprep.subr.mxu0 0.0
    %4030 = vmatpush1.msra.mxu0 0.0
    %4031 = vmatprep.subr.mxu0 0.0
    %4032 = vmatpush1.msra.mxu0 0.0
    %4033 = vmatprep.subr.mxu0 0.0
    %4034 = vmatpush1.msra.mxu0 0.0
    %4035 = vmatprep.subr.mxu0 0.0
    %4036 = vmatpush1.msra.mxu0 0.0
    %4037 = vmatprep.subr.mxu0 0.0
    %4038 = vmatpush1.msra.mxu0 0.0
    %4039 = vmatprep.subr.mxu0 0.0
    %4040 = vmatpush1.msra.mxu0 0.0
    %4041 = vmatprep.subr.mxu0 0.0
    %4042 = vmatpush1.msra.mxu0 0.0
    %4043 = vmatprep.subr.mxu0 0.0
    %4044 = vmatpush1.msra.mxu0 0.0
    %4045 = vmatprep.subr.mxu0 0.0
    %4046 = vmatpush1.msra.mxu0 0.0
    %4047 = vmatprep.subr.mxu0 0.0
    %4048 = vmatpush1.msra.mxu0 0.0
    %4049 = vmatprep.subr.mxu0 0.0
    %4050 = vmatpush1.msra.mxu0 0.0
    %4051 = vmatprep.subr.mxu0 0.0
    %4052 = vmatpush1.msra.mxu0 0.0
    %4053 = vmatprep.subr.mxu0 0.0
    %4054 = vmatpush1.msra.mxu0 0.0
    %4055 = vmatprep.subr.mxu0 0.0
    %4056 = vmatpush1.msra.mxu0 0.0
    %4057 = vmatprep.mubr.f32.mxu0 0.0
    %4058 = vmatmul.mubr.f32.gmra.mrb[0].mxu0 %v3810
    %v4059 = vpop.f32.mrb[0].mxu0
    %v4060 = vadd.f32 %v3990, %v4059
    %v4061 = vpop.f32.mrb[0].mxu0
    %4062 = vdwg.mxu0
    %v4063 = vld [vmem:[%s12] sm:$0x1]
    %v4065 = vlaneseq
    %v4066 = vshrl.u32 %v4065, 7
    %v4067 = vsub.s32 0, %v4066
    %v4068 = vrot.slane %v4063, %v4067
    %v4070 = vadd.f32 %v4060, %v4068
    %v4071 = vtanh.pop %v4070
    %4072 = vst [vmem:[#allocation17] sm:$0x3] %v4071
    %v4073 = vld [vmem:[#allocation14] sm:$0xff]
    %v4074 = vld [vmem:[#allocation14 + $0x8] sm:$0xff]
    %v4075 = vld [vmem:[#allocation14 + $0x10] sm:$0xff]
    %v4076 = vld [vmem:[#allocation14 + $0x18] sm:$0xff]
    %v4077 = vld [vmem:[#allocation10] sm:$0xff]
    %v4078 = vld [vmem:[#allocation10 + $0x8] sm:$0xff]
    %v4079 = vld [vmem:[#allocation10 + $0x10] sm:$0xff]
    %v4080 = vld [vmem:[#allocation10 + $0x18] sm:$0xff]
    %v4081 = vld [vmem:[#allocation10 + $0x20] sm:$0xff]
    %v4082 = vld [vmem:[#allocation10 + $0x28] sm:$0xff]
    %v4083 = vld [vmem:[#allocation10 + $0x30] sm:$0xff]
    %v4084 = vld [vmem:[#allocation10 + $0x38] sm:$0xff]
    %v4085 = vld [vmem:[#allocation10 + $0x40] sm:$0xff]
    %v4086 = vld [vmem:[#allocation10 + $0x48] sm:$0xff]
    %v4087 = vld [vmem:[#allocation10 + $0x50] sm:$0xff]
    %v4088 = vld [vmem:[#allocation10 + $0x58] sm:$0xff]
    %v4089 = vld [vmem:[#allocation10 + $0x60] sm:$0xff]
    %v4090 = vld [vmem:[#allocation10 + $0x68] sm:$0xff]
    %v4091 = vld [vmem:[#allocation10 + $0x70] sm:$0xff]
    %v4092 = vld [vmem:[#allocation10 + $0x78] sm:$0xff]
    %v4093 = vld [vmem:[#allocation10 + $0x80] sm:$0xff]
    %v4094 = vld [vmem:[#allocation10 + $0x88] sm:$0xff]
    %v4095 = vld [vmem:[#allocation10 + $0x90] sm:$0xff]
    %v4096 = vld [vmem:[#allocation10 + $0x98] sm:$0xff]
    %v4097 = vld [vmem:[#allocation10 + $0xa0] sm:$0xff]
    %v4098 = vld [vmem:[#allocation10 + $0xa8] sm:$0xff]
    %v4099 = vld [vmem:[#allocation10 + $0xb0] sm:$0xff]
    %v4100 = vld [vmem:[#allocation10 + $0xb8] sm:$0xff]
    %v4101 = vld [vmem:[#allocation10 + $0xc0] sm:$0xff]
    %v4102 = vld [vmem:[#allocation10 + $0xc8] sm:$0xff]
    %v4103 = vld [vmem:[#allocation10 + $0xd0] sm:$0xff]
    %v4104 = vld [vmem:[#allocation10 + $0xd8] sm:$0xff]
    %v4105 = vld [vmem:[#allocation10 + $0xe0] sm:$0xff]
    %v4106 = vld [vmem:[#allocation10 + $0xe8] sm:$0xff]
    %v4107 = vld [vmem:[#allocation10 + $0xf0] sm:$0xff]
    %v4108 = vld [vmem:[#allocation10 + $0xf8] sm:$0xff]
    %v4109 = vld [vmem:[%s9] sm:$0x1]
    %v4111 = vlaneseq
    %v4112 = vshrl.u32 %v4111, 7
    %v4113 = vsub.s32 0, %v4112
    %v4114 = vrot.slane %v4109, %v4113
    %4116 = vmatprep.subr.mxu0 0.0
    %4117 = vmatpush1.msra.mxu0 %v4077
    %4118 = vmatprep.subr.mxu0 0.0
    %4119 = vmatpush1.msra.mxu0 %v4078
    %4120 = vmatprep.subr.mxu0 0.0
    %4121 = vmatpush1.msra.mxu0 %v4079
    %4122 = vmatprep.subr.mxu0 0.0
    %4123 = vmatpush1.msra.mxu0 %v4080
    %4124 = vmatprep.subr.mxu0 0.0
    %4125 = vmatpush1.msra.mxu0 %v4081
    %4126 = vmatprep.subr.mxu0 0.0
    %4127 = vmatpush1.msra.mxu0 %v4082
    %4128 = vmatprep.subr.mxu0 0.0
    %4129 = vmatpush1.msra.mxu0 %v4083
    %4130 = vmatprep.subr.mxu0 0.0
    %4131 = vmatpush1.msra.mxu0 %v4084
    %4132 = vmatprep.subr.mxu0 0.0
    %4133 = vmatpush1.msra.mxu0 %v4085
    %4134 = vmatprep.subr.mxu0 0.0
    %4135 = vmatpush1.msra.mxu0 %v4086
    %4136 = vmatprep.subr.mxu0 0.0
    %4137 = vmatpush1.msra.mxu0 %v4087
    %4138 = vmatprep.subr.mxu0 0.0
    %4139 = vmatpush1.msra.mxu0 %v4088
    %4140 = vmatprep.subr.mxu0 0.0
    %4141 = vmatpush1.msra.mxu0 %v4089
    %4142 = vmatprep.subr.mxu0 0.0
    %4143 = vmatpush1.msra.mxu0 %v4090
    %4144 = vmatprep.subr.mxu0 0.0
    %4145 = vmatpush1.msra.mxu0 %v4091
    %4146 = vmatprep.subr.mxu0 0.0
    %4147 = vmatpush1.msra.mxu0 %v4092
    %4148 = vmatprep.subr.mxu0 0.0
    %4149 = vmatpush1.msra.mxu0 %v4093
    %4150 = vmatprep.subr.mxu0 0.0
    %4151 = vmatpush1.msra.mxu0 %v4094
    %4152 = vmatprep.subr.mxu0 0.0
    %4153 = vmatpush1.msra.mxu0 %v4095
    %4154 = vmatprep.subr.mxu0 0.0
    %4155 = vmatpush1.msra.mxu0 %v4096
    %4156 = vmatprep.subr.mxu0 0.0
    %4157 = vmatpush1.msra.mxu0 %v4097
    %4158 = vmatprep.subr.mxu0 0.0
    %4159 = vmatpush1.msra.mxu0 %v4098
    %4160 = vmatprep.subr.mxu0 0.0
    %4161 = vmatpush1.msra.mxu0 %v4099
    %4162 = vmatprep.subr.mxu0 0.0
    %4163 = vmatpush1.msra.mxu0 %v4100
    %4164 = vmatprep.subr.mxu0 0.0
    %4165 = vmatpush1.msra.mxu0 %v4101
    %4166 = vmatprep.subr.mxu0 0.0
    %4167 = vmatpush1.msra.mxu0 %v4102
    %4168 = vmatprep.subr.mxu0 0.0
    %4169 = vmatpush1.msra.mxu0 %v4103
    %4170 = vmatprep.subr.mxu0 0.0
    %4171 = vmatpush1.msra.mxu0 %v4104
    %4172 = vmatprep.subr.mxu0 0.0
    %4173 = vmatpush1.msra.mxu0 %v4105
    %4174 = vmatprep.subr.mxu0 0.0
    %4175 = vmatpush1.msra.mxu0 %v4106
    %4176 = vmatprep.subr.mxu0 0.0
    %4177 = vmatpush1.msra.mxu0 %v4107
    %4178 = vmatprep.subr.mxu0 0.0
    %4179 = vmatpush1.msra.mxu0 %v4108
    %4180 = vmatprep.mubr.f32.mxu0 %v4074
    %4181 = vmatmul.mubr.f32.gmra.mrb[0].mxu0 %v4073
    %v4182 = vpop.f32.mrb[0].mxu0
    %v4183 = vadd.f32 %v4114, %v4182
    %v4184 = vpop.f32.mrb[0].mxu0
    %4185 = vmatprep.mubr.f32.mxu0 %v4076
    %4186 = vmatmul.mubr.f32.gmra.mrb[0].mxu0 %v4075
    %v4187 = vpop.f32.mrb[0].mxu0
    %v4188 = vadd.f32 %v4114, %v4187
    %v4189 = vpop.f32.mrb[0].mxu0
    %4190 = vdwg.mxu0
    %4191 = vst [vmem:[#allocation15] sm:$0xff] %v4183
    %4192 = vst [vmem:[#allocation15 + $0x8] sm:$0xff] %v4188
    // Predicated region
    $region82: #{tpu_custom_call.1} parent=1 // pred_check
      _
    $region83: #{tpu_custom_call.1} parent=1 // pred_check_branch
      %4194 = sbr.rel (0) target = $region85
    $region84: #{tpu_custom_call.1} parent=1 // pred_region
      %s4196 = ssub.s32 512, 512
      %4197 = vsyncadd [#allocation4], %s4196
      %s4198 = sshll.u32 [#allocation14], 4
      %s4199 = int_to_ptr.vmem [resolvable:$true] %s4198
      %4204 = dma.vmem_to_hbm [thread:$0]  %s4199, 512, %s13, [#allocation4], 256, 256, 16
    $region85: #{tpu_custom_call.1} parent=1 // pred_fallthru
      _
    // Predicated region
    $region86: #{tpu_custom_call.1} parent=1 // pred_check
      _
    $region87: #{tpu_custom_call.1} parent=1 // pred_check_branch
      %4206 = sbr.rel (0) target = $region89
    $region88: #{tpu_custom_call.1} parent=1 // pred_region
      %s4208 = ssub.s32 256, 256
      %4209 = vsyncadd [#allocation16], %s4208
      %s4210 = sshll.u32 [#allocation15], 4
      %s4211 = int_to_ptr.vmem [resolvable:$true] %s4210
      %4216 = dma.vmem_to_hbm [thread:$0]  %s4211, 256, %s14, [#allocation16], 128, 128, 8
    $region89: #{tpu_custom_call.1} parent=1 // pred_fallthru
      _
    // Predicated region
    $region90: #{tpu_custom_call.1} parent=1 // pred_check
      _
    $region91: #{tpu_custom_call.1} parent=1 // pred_check_branch
      %4218 = sbr.rel (0) target = $region93
    $region92: #{tpu_custom_call.1} parent=1 // pred_region
      %s4220 = ssub.s32 32, 32
      %4221 = vsyncadd [#allocation16], %s4220
      %s4223 = sshll.u32 [#allocation17], 4
      %s4224 = int_to_ptr.vmem [resolvable:$true] %s4223
      %4226 = dma.vmem_to_hbm [thread:$0]  %s4224, 32, %s15, [#allocation16]
    $region93: #{tpu_custom_call.1} parent=1 // pred_fallthru
      _
    // Predicated region
    $region94: #{tpu_custom_call.1} parent=1 // pred_check
      _
    $region95: #{tpu_custom_call.1} parent=1 // pred_check_branch
      %4228 = sbr.rel (0) target = $region97
    $region96: #{tpu_custom_call.1} parent=1 // pred_region
      %4229 = dma.done [#allocation4], 512
    $region97: #{tpu_custom_call.1} parent=1 // pred_fallthru
      _
    // Predicated region
    $region98: #{tpu_custom_call.1} parent=1 // pred_check
      _
    $region99: #{tpu_custom_call.1} parent=1 // pred_check_branch
      %4231 = sbr.rel (0) target = $region101
    $region100: #{tpu_custom_call.1} parent=1 // pred_region
      %4232 = dma.done [#allocation16], 256
    $region101: #{tpu_custom_call.1} parent=1 // pred_fallthru
      _
    // Predicated region
    $region102: #{tpu_custom_call.1} parent=1 // pred_check
      _
    $region103: #{tpu_custom_call.1} parent=1 // pred_check_branch
      %4234 = sbr.rel (0) target = $region105
    $region104: #{tpu_custom_call.1} parent=1 // pred_region
      %4235 = dma.done [#allocation16], 32
    $region105: #{tpu_custom_call.1} parent=1 // pred_fallthru
      _
    %4236 = vsyncpa [#allocation3], 1
    %4237 = vsyncpa [#allocation6], 1
    %4238 = vsyncpa [#allocation9], 1
    %4239 = vsyncpa [#allocation12], 1
    %4240 = vsyncpa [#allocation4], 1
    %4241 = vsyncpa [#allocation16], 1

</llo_original>
